<compile_context>
chip_gen: v5e
topology: v5e:2x2
jax: 0.10.0
libtpu: 0.0.40
codegen_flags: <defaults>
</compile_context>

<pallas_src>
import jax
import jax.numpy as jnp
from jax.experimental import pallas as pl
from jax.experimental.pallas import tpu as pltpu


_VMEM_LIMIT = 32 * 1024 * 1024  # safe on v5e/v6e (128 MiB) and v7x (64 MiB)


def _round_up(x, m):
    return (x + m - 1) // m * m


# ---------------------------------------------------------------------------
# Shared gate math (PyTorch GRU, gate order r, z, n).
#   xp_t already contains  x @ W_ih + b_ih + [b_hr, b_hz, 0]
#   hp   is               h @ W_hh            (no bias)
#   b_hn is pre-broadcast to (rows, H) by the caller (hoisted out of the loop)
# All elementwise math in f32.
# ---------------------------------------------------------------------------
def _gru_gates(xp_t, hp, h, b_hn, H):
    r = jax.nn.sigmoid(xp_t[:, 0:H] + hp[:, 0:H])
    z = jax.nn.sigmoid(xp_t[:, H:2 * H] + hp[:, H:2 * H])
    n = jnp.tanh(xp_t[:, 2 * H:3 * H] + r * (hp[:, 2 * H:3 * H] + b_hn))
    return (1.0 - z) * n + z * h


# ---------------------------------------------------------------------------
# Kernel 1: sentence encoder (unidirectional masked GRU -> last valid hidden)
# Gridded over N = B*S (one tile of sentences per grid step).
# ---------------------------------------------------------------------------
def sentence_gru_kernel(x_ref, m_ref, wih_ref, whh_ref, bx_ref, bhn_ref,
                        o_ref, xp_ref):
    tn, T, E = x_ref.shape
    H = whh_ref.shape[0]

    # Hoisted input projection: ONE (tn*T, E) x (E, 3H) bf16 MXU matmul,
    # biases folded in, result parked in a VMEM scratch.
    x_flat = x_ref[...].reshape(tn * T, E)                        # bf16
    xp = jnp.dot(x_flat, wih_ref[...],
                 preferred_element_type=jnp.float32) + bx_ref[...]
    xp_ref[...] = xp.reshape(tn, T, 3 * H)

    w_hh = whh_ref[...]                                            # (H, 3H) bf16
    b_hn = jnp.broadcast_to(bhn_ref[...], (tn, H))                 # hoisted

    # Serial recurrence: only h @ W_hh (one fused (tn,H)x(H,3H) matmul) inside.
    h = jnp.zeros((tn, H), jnp.float32)
    for t in range(T):                                             # T small & static
        hp = jnp.dot(h.astype(jnp.bfloat16), w_hh,
                     preferred_element_type=jnp.float32)           # (tn, 3H)
        h_new = _gru_gates(xp_ref[:, t, :], hp, h, b_hn, H)
        m_t = m_ref[:, t:t + 1]                                    # (tn, 1)
        # masked update == "hidden at the last valid token" for end-padding
        h = m_t * h_new + (1.0 - m_t) * h
    o_ref[...] = h


# ---------------------------------------------------------------------------
# Kernel 2: document encoder (bidirectional GRU over sentences), fused with
# the final  out[:, :, :mid] + out[:, :, mid:]  (fwd + bwd sum).
# ---------------------------------------------------------------------------
def document_bigru_kernel(x_ref, wih_ref, whhf_ref, whhb_ref, bx_ref, bhn_ref,
                          o_ref, xp_ref):
    B, S, Hin = x_ref.shape
    H = whhf_ref.shape[0]

    # Hoisted input projection for BOTH directions in one (B*S, Hin) x (Hin, 6H)
    # bf16 MXU matmul, biases folded in.
    x_flat = x_ref[...].reshape(B * S, Hin)
    xp = jnp.dot(x_flat, wih_ref[...],
                 preferred_element_type=jnp.float32) + bx_ref[...]  # (B*S, 6H)
    xp_ref[0] = xp[:, 0:3 * H].reshape(B, S, 3 * H)                 # forward dir
    xp_ref[1] = xp[:, 3 * H:6 * H].reshape(B, S, 3 * H)             # backward dir

    w_hh_f = whhf_ref[...]
    w_hh_b = whhb_ref[...]
    b_hn_f = jnp.broadcast_to(bhn_ref[:, 0:H], (B, H))              # hoisted
    b_hn_b = jnp.broadcast_to(bhn_ref[:, H:2 * H], (B, H))          # hoisted

    # Forward direction: write hidden straight into o_ref (O(1) live state).
    h = jnp.zeros((B, H), jnp.float32)
    for t in range(S):
        hp = jnp.dot(h.astype(jnp.bfloat16), w_hh_f,
                     preferred_element_type=jnp.float32)
        h = _gru_gates(xp_ref[0, :, t, :], hp, h, b_hn_f, H)
        o_ref[:, t, :] = h

    # Backward direction: accumulate in place.
    # concat([fwd, bwd], -1) followed by split-sum  ==  fwd + bwd.
    h = jnp.zeros((B, H), jnp.float32)
    for t in range(S - 1, -1, -1):
        hp = jnp.dot(h.astype(jnp.bfloat16), w_hh_b,
                     preferred_element_type=jnp.float32)
        h = _gru_gates(xp_ref[1, :, t, :], hp, h, b_hn_b, H)
        o_ref[:, t, :] = o_ref[:, t, :] + h


# ---------------------------------------------------------------------------
# Bias folding:  bx = b_ih + [b_hr, b_hz, 0]  goes into the hoisted input
# projection; b_hn stays separate because it sits inside r * (W_hn h + b_hn).
# ---------------------------------------------------------------------------
def _fold_biases(b_ih, b_hh, H):
    bx = b_ih + jnp.concatenate(
        [b_hh[:, 0:2 * H], jnp.zeros((1, H), jnp.float32)], axis=1)
    return bx, b_hh[:, 2 * H:3 * H]


# ---------------------------------------------------------------------------
# pallas_call wrappers
# ---------------------------------------------------------------------------
def sentence_encode(x, mask, w_ih, w_hh, b_ih, b_hh, *, tile_n=128):
    """x: (N, T, E) f32, mask: (N, T) f32 -> (N, H) f32 (last valid hidden)."""
    N, T, E = x.shape
    H = w_hh.shape[0]
    bx, b_hn = _fold_biases(b_ih, b_hh, H)

    # bf16 MXU inputs; biases / hidden carry / gating stay f32.
    x_bf = x.astype(jnp.bfloat16)
    w_ih_bf = w_ih.astype(jnp.bfloat16)
    w_hh_bf = w_hh.astype(jnp.bfloat16)

    # Tile the N = B*S axis: parallel across TensorCores, double-buffered DMA.
    tn = min(tile_n, _round_up(N, 8))
    Np = _round_up(N, tn)
    if Np != N:  # padded rows have mask 0 -> hidden stays 0, sliced off below
        x_bf = jnp.pad(x_bf, ((0, Np - N), (0, 0), (0, 0)))
        mask = jnp.pad(mask, ((0, Np - N), (0, 0)))

    out = pl.pallas_call(
        sentence_gru_kernel,
        out_shape=jax.ShapeDtypeStruct((Np, H), jnp.float32),
        grid=(Np // tn,),
        in_specs=[
            pl.BlockSpec((tn, T, E), lambda i: (i, 0, 0)),
            pl.BlockSpec((tn, T), lambda i: (i, 0)),
            pl.BlockSpec((E, 3 * H), lambda i: (0, 0)),
            pl.BlockSpec((H, 3 * H), lambda i: (0, 0)),
            pl.BlockSpec((1, 3 * H), lambda i: (0, 0)),
            pl.BlockSpec((1, H), lambda i: (0, 0)),
        ],
        out_specs=pl.BlockSpec((tn, H), lambda i: (i, 0)),
        scratch_shapes=[pltpu.VMEM((tn, T, 3 * H), jnp.float32)],
        compiler_params=pltpu.CompilerParams(
            dimension_semantics=("parallel",),
            vmem_limit_bytes=_VMEM_LIMIT),
    )(x_bf, mask, w_ih_bf, w_hh_bf, bx, b_hn)
    return out[:N]


def document_encode(x, w_ih_f, w_hh_f, b_ih_f, b_hh_f,
                    w_ih_b, w_hh_b, b_ih_b, b_hh_b):
    """x: (B, S, Hin) f32 -> (B, S, H) f32 (fwd + bwd GRU hidden sum)."""
    B, S, Hin = x.shape
    H = w_hh_f.shape[0]

    # Stack both directions' input projections into one (Hin, 6H) matmul.
    w_ih = jnp.concatenate([w_ih_f, w_ih_b], axis=1)               # (Hin, 6H)
    bx_f, b_hn_f = _fold_biases(b_ih_f, b_hh_f, H)
    bx_b, b_hn_b = _fold_biases(b_ih_b, b_hh_b, H)
    bx = jnp.concatenate([bx_f, bx_b], axis=1)                     # (1, 6H)
    b_hn = jnp.concatenate([b_hn_f, b_hn_b], axis=1)               # (1, 2H)

    vmem = pl.BlockSpec(memory_space=pltpu.MemorySpace.VMEM)
    return pl.pallas_call(
        document_bigru_kernel,
        out_shape=jax.ShapeDtypeStruct((B, S, H), jnp.float32),
        in_specs=[vmem] * 6,
        out_specs=vmem,
        scratch_shapes=[pltpu.VMEM((2, B, S, 3 * H), jnp.float32)],
        compiler_params=pltpu.CompilerParams(vmem_limit_bytes=_VMEM_LIMIT),
    )(x.astype(jnp.bfloat16), w_ih.astype(jnp.bfloat16),
      w_hh_f.astype(jnp.bfloat16), w_hh_b.astype(jnp.bfloat16), bx, b_hn)


# ---------------------------------------------------------------------------
# Parameter init (deterministic, xavier_normal_ on weight matrices)
# ---------------------------------------------------------------------------
def xavier_normal(key, shape):
    fan_in, fan_out = shape
    std = (2.0 / (fan_in + fan_out)) ** 0.5
    return std * jax.random.normal(key, shape, jnp.float32)


def init_params(key, vocab, emb_dim, h_sent, h_doc):
    ks = jax.random.split(key, 7)
    return {
        # word embedding table (row 0 = padding)
        "embedding": jax.random.normal(ks[0], (vocab, emb_dim), jnp.float32) * 0.1,
        # sentence encoder GRU
        "sent_w_ih": xavier_normal(ks[1], (emb_dim, 3 * h_sent)),
        "sent_w_hh": xavier_normal(ks[2], (h_sent, 3 * h_sent)),
        "sent_b_ih": jnp.zeros((1, 3 * h_sent), jnp.float32),
        "sent_b_hh": jnp.zeros((1, 3 * h_sent), jnp.float32),
        # document encoder bidirectional GRU (forward / backward)
        "doc_w_ih_f": xavier_normal(ks[3], (h_sent, 3 * h_doc)),
        "doc_w_hh_f": xavier_normal(ks[4], (h_doc, 3 * h_doc)),
        "doc_b_ih_f": jnp.zeros((1, 3 * h_doc), jnp.float32),
        "doc_b_hh_f": jnp.zeros((1, 3 * h_doc), jnp.float32),
        "doc_w_ih_b": xavier_normal(ks[5], (h_sent, 3 * h_doc)),
        "doc_w_hh_b": xavier_normal(ks[6], (h_doc, 3 * h_doc)),
        "doc_b_ih_b": jnp.zeros((1, 3 * h_doc), jnp.float32),
        "doc_b_hh_b": jnp.zeros((1, 3 * h_doc), jnp.float32),
    }


# ---------------------------------------------------------------------------
# InputModule.forward
# ---------------------------------------------------------------------------
def input_module_forward(tokens, params):
    # tokens: (B, S, T) int32 token ids, 0 == padding
    B, S, T = tokens.shape
    mask = (tokens != 0).astype(jnp.float32)                       # (B, S, T)
    embs = jnp.take(params["embedding"], tokens, axis=0)           # (B, S, T, E)
    # embedding_dropout / encoder_dropout are identity at inference.
    E = embs.shape[-1]
    H_sent = params["sent_w_hh"].shape[0]

    # seq_over_seq: encode every sentence independently
    sent_encs = sentence_encode(
        embs.reshape(B * S, T, E), mask.reshape(B * S, T),
        params["sent_w_ih"], params["sent_w_hh"],
        params["sent_b_ih"], params["sent_b_hh"])                  # (B*S, H_sent)
    sent_encs = sent_encs.reshape(B, S, H_sent)

    # document encoder (bidirectional GRU, mask=None) + fwd/bwd half sum
    return document_encode(
        sent_encs,
        params["doc_w_ih_f"], params["doc_w_hh_f"],
        params["doc_b_ih_f"], params["doc_b_hh_f"],
        params["doc_w_ih_b"], params["doc_w_hh_b"],
        params["doc_b_ih_b"], params["doc_b_hh_b"])                # (B, S, H_doc)


# ---------------------------------------------------------------------------
# Pure-JAX f32 reference (plain PyTorch GRU formulation, no bias folding)
# ---------------------------------------------------------------------------
def _gru_cell_ref(x_t, h, w_ih, w_hh, b_ih, b_hh, H):
    gi = x_t @ w_ih + b_ih
    gh = h @ w_hh + b_hh
    r = jax.nn.sigmoid(gi[:, 0:H] + gh[:, 0:H])
    z = jax.nn.sigmoid(gi[:, H:2 * H] + gh[:, H:2 * H])
    n = jnp.tanh(gi[:, 2 * H:] + r * gh[:, 2 * H:])
    return (1.0 - z) * n + z * h


def reference_forward(tokens, params):
    B, S, T = tokens.shape
    mask = (tokens != 0).astype(jnp.float32)
    embs = jnp.take(params["embedding"], tokens, axis=0)
    E = embs.shape[-1]
    Hs = params["sent_w_hh"].shape[0]
    Hd = params["doc_w_hh_f"].shape[0]

    x = embs.reshape(B * S, T, E)
    m = mask.reshape(B * S, T)
    h = jnp.zeros((B * S, Hs), jnp.float32)
    for t in range(T):
        hn = _gru_cell_ref(x[:, t], h, params["sent_w_ih"], params["sent_w_hh"],
                           params["sent_b_ih"], params["sent_b_hh"], Hs)
        mt = m[:, t:t + 1]
        h = mt * hn + (1.0 - mt) * h
    sent = h.reshape(B, S, Hs)

    hf = jnp.zeros((B, Hd), jnp.float32)
    fwd = []
    for t in range(S):
        hf = _gru_cell_ref(sent[:, t], hf, params["doc_w_ih_f"], params["doc_w_hh_f"],
                           params["doc_b_ih_f"], params["doc_b_hh_f"], Hd)
        fwd.append(hf)
    hb = jnp.zeros((B, Hd), jnp.float32)
    bwd = [None] * S
    for t in range(S - 1, -1, -1):
        hb = _gru_cell_ref(sent[:, t], hb, params["doc_w_ih_b"], params["doc_w_hh_b"],
                           params["doc_b_ih_b"], params["doc_b_hh_b"], Hd)
        bwd[t] = hb
    return jnp.stack(fwd, axis=1) + jnp.stack(bwd, axis=1)


if __name__ == "__main__":
    B, S, T = 2, 4, 8          # batch, sentences per doc, tokens per sentence
    V, E = 50, 32              # vocab size, embedding dim
    H_SENT, H_DOC = 32, 32     # sentence enc hidden, document enc hidden (per dir)

    root = jax.random.PRNGKey(0)
    k_params, k_tok, k_len = jax.random.split(root, 3)

    params = init_params(k_params, V, E, H_SENT, H_DOC)

    # deterministic token ids with end-padding (id 0)
    tokens = jax.random.randint(k_tok, (B, S, T), 1, V, dtype=jnp.int32)
    lengths = jax.random.randint(k_len, (B, S), 3, T + 1, dtype=jnp.int32)
    pos = jnp.arange(T, dtype=jnp.int32)[None, None, :]
    tokens = jnp.where(pos < lengths[..., None], tokens, 0)

    out = jax.block_until_ready(input_module_forward(tokens, params))
    ref = jax.block_until_ready(reference_forward(tokens, params))

    assert out.shape == (B, S, H_DOC), out.shape
    assert out.dtype == jnp.float32
    assert bool(jnp.all(jnp.isfinite(out)))
    # bf16 MXU inputs vs f32 reference: loose tolerance
    assert float(jnp.max(jnp.abs(out - ref))) < 0.1
    print("KERNEL_OK")
</pallas_src>

<mosaic_0001>
module attributes {stable_mosaic.version = 11 : i64} {
  func.func @sentence_gru_kernel(%arg0: i32, %arg1: memref<8x8x32xbf16, #tpu.memory_space<vmem>>, %arg2: memref<8x8xf32, #tpu.memory_space<vmem>>, %arg3: memref<32x96xbf16, #tpu.memory_space<vmem>>, %arg4: memref<32x96xbf16, #tpu.memory_space<vmem>>, %arg5: memref<1x96xf32, #tpu.memory_space<vmem>>, %arg6: memref<1x32xf32, #tpu.memory_space<vmem>>, %arg7: memref<8x32xf32, #tpu.memory_space<vmem>>, %arg8: memref<8x8x96xf32, #tpu.memory_space<vmem>>) attributes {dimension_semantics = [#tpu.dimension_semantics<parallel>], iteration_bounds = array<i64: 1>, scalar_prefetch = 0 : i64, scratch_operands = 1 : i64, tpu.core_type = #tpu.core_type<tc>, window_params = [{transform_indices = @transform_0, window_bounds = array<i64: 8, 8, 32>}, {transform_indices = @transform_1, window_bounds = array<i64: 8, 8>}, {pipeline_mode = #tpu.pipeline_mode<synchronous>, transform_indices = @transform_2, window_bounds = array<i64: 32, 96>}, {pipeline_mode = #tpu.pipeline_mode<synchronous>, transform_indices = @transform_3, window_bounds = array<i64: 32, 96>}, {pipeline_mode = #tpu.pipeline_mode<synchronous>, transform_indices = @transform_4, window_bounds = array<i64: 1, 96>}, {pipeline_mode = #tpu.pipeline_mode<synchronous>, transform_indices = @transform_5, window_bounds = array<i64: 1, 32>}, {transform_indices = @transform_6, window_bounds = array<i64: 8, 32>}]} {
    %c0 = arith.constant 0 : index
    %c0_0 = arith.constant 0 : index
    %c0_1 = arith.constant 0 : index
    %0 = vector.load %arg1[%c0, %c0_0, %c0_1] : memref<8x8x32xbf16, #tpu.memory_space<vmem>>, vector<8x8x32xbf16>
    %1 = vector.shape_cast %0 : vector<8x8x32xbf16> to vector<64x32xbf16>
    %c0_2 = arith.constant 0 : index
    %c0_3 = arith.constant 0 : index
    %2 = vector.load %arg3[%c0_2, %c0_3] : memref<32x96xbf16, #tpu.memory_space<vmem>>, vector<32x96xbf16>
    %cst = arith.constant dense<0.000000e+00> : vector<64x96xf32>
    %3 = tpu.matmul %1, %2, %cst {dimension_numbers = #tpu.dot_dimension_numbers<[1], [0], [0], [1], [0, 0, 1, 1], [], []>} : vector<64x32xbf16>, vector<32x96xbf16>, vector<64x96xf32> -> vector<64x96xf32>
    %c0_4 = arith.constant 0 : index
    %c0_5 = arith.constant 0 : index
    %4 = vector.load %arg5[%c0_4, %c0_5] : memref<1x96xf32, #tpu.memory_space<vmem>>, vector<1x96xf32>
    %5 = vector.broadcast %4 : vector<1x96xf32> to vector<64x96xf32>
    %6 = arith.addf %3, %5 : vector<64x96xf32>
    %7 = vector.shape_cast %6 : vector<64x96xf32> to vector<8x8x96xf32>
    %c0_6 = arith.constant 0 : index
    %c0_7 = arith.constant 0 : index
    %c0_8 = arith.constant 0 : index
    %8 = vector.load %arg8[%c0_6, %c0_7, %c0_8] : memref<8x8x96xf32, #tpu.memory_space<vmem>>, vector<8x8x96xf32>
    tpu.vector_store %arg8[%c0_6, %c0_7, %c0_8], %7 {strides = array<i32>} : memref<8x8x96xf32, #tpu.memory_space<vmem>>, vector<8x8x96xf32>,
    %c0_9 = arith.constant 0 : index
    %c0_10 = arith.constant 0 : index
    %9 = vector.load %arg4[%c0_9, %c0_10] : memref<32x96xbf16, #tpu.memory_space<vmem>>, vector<32x96xbf16>
    %c0_11 = arith.constant 0 : index
    %c0_12 = arith.constant 0 : index
    %10 = vector.load %arg6[%c0_11, %c0_12] : memref<1x32xf32, #tpu.memory_space<vmem>>, vector<1x32xf32>
    %11 = vector.shape_cast %10 : vector<1x32xf32> to vector<1x32xf32>
    %12 = vector.broadcast %11 : vector<1x32xf32> to vector<8x32xf32>
    %cst_13 = arith.constant 0.000000e+00 : f32
    %13 = vector.broadcast %cst_13 : f32 to vector<8x32xf32>
    %14 = arith.truncf %13 : vector<8x32xf32> to vector<8x32xbf16>
    %cst_14 = arith.constant dense<0.000000e+00> : vector<8x96xf32>
    %15 = tpu.matmul %14, %9, %cst_14 {dimension_numbers = #tpu.dot_dimension_numbers<[1], [0], [0], [1], [0, 0, 1, 1], [], []>} : vector<8x32xbf16>, vector<32x96xbf16>, vector<8x96xf32> -> vector<8x96xf32>
    %c0_15 = arith.constant 0 : index
    %c0_16 = arith.constant 0 : index
    %c0_17 = arith.constant 0 : index
    %16 = vector.load %arg8[%c0_15, %c0_16, %c0_17] : memref<8x8x96xf32, #tpu.memory_space<vmem>>, vector<8x1x96xf32>
    %17 = vector.shape_cast %16 : vector<8x1x96xf32> to vector<8x96xf32>
    %18 = vector.extract_strided_slice %17 {offsets = [0, 0], sizes = [8, 32], strides = [1, 1]} : vector<8x96xf32> to vector<8x32xf32>
    %19 = vector.extract_strided_slice %15 {offsets = [0, 0], sizes = [8, 32], strides = [1, 1]} : vector<8x96xf32> to vector<8x32xf32>
    %20 = arith.addf %18, %19 : vector<8x32xf32>
    %21 = arith.negf %20 : vector<8x32xf32>
    %22 = math.exp %21 : vector<8x32xf32>
    %cst_18 = arith.constant 1.000000e+00 : f32
    %23 = vector.broadcast %cst_18 : f32 to vector<8x32xf32>
    %24 = arith.addf %23, %22 : vector<8x32xf32>
    %25 = arith.divf %23, %24 : vector<8x32xf32>
    %26 = vector.extract_strided_slice %17 {offsets = [0, 32], sizes = [8, 32], strides = [1, 1]} : vector<8x96xf32> to vector<8x32xf32>
    %27 = vector.extract_strided_slice %15 {offsets = [0, 32], sizes = [8, 32], strides = [1, 1]} : vector<8x96xf32> to vector<8x32xf32>
    %28 = arith.addf %26, %27 : vector<8x32xf32>
    %29 = arith.negf %28 : vector<8x32xf32>
    %30 = math.exp %29 : vector<8x32xf32>
    %cst_19 = arith.constant 1.000000e+00 : f32
    %31 = vector.broadcast %cst_19 : f32 to vector<8x32xf32>
    %32 = arith.addf %31, %30 : vector<8x32xf32>
    %33 = arith.divf %31, %32 : vector<8x32xf32>
    %34 = vector.extract_strided_slice %17 {offsets = [0, 64], sizes = [8, 32], strides = [1, 1]} : vector<8x96xf32> to vector<8x32xf32>
    %35 = vector.extract_strided_slice %15 {offsets = [0, 64], sizes = [8, 32], strides = [1, 1]} : vector<8x96xf32> to vector<8x32xf32>
    %36 = arith.addf %35, %12 : vector<8x32xf32>
    %37 = arith.mulf %25, %36 : vector<8x32xf32>
    %38 = arith.addf %34, %37 : vector<8x32xf32>
    %39 = math.tanh %38 : vector<8x32xf32>
    %cst_20 = arith.constant 1.000000e+00 : f32
    %40 = vector.broadcast %cst_20 : f32 to vector<8x32xf32>
    %41 = arith.subf %40, %33 : vector<8x32xf32>
    %42 = arith.mulf %41, %39 : vector<8x32xf32>
    %43 = arith.mulf %33, %13 : vector<8x32xf32>
    %44 = arith.addf %42, %43 : vector<8x32xf32>
    %c0_21 = arith.constant 0 : index
    %c0_22 = arith.constant 0 : index
    %45 = vector.load %arg2[%c0_21, %c0_22] : memref<8x8xf32, #tpu.memory_space<vmem>>, vector<8x1xf32>
    %46 = vector.broadcast %45 : vector<8x1xf32> to vector<8x32xf32>
    %47 = arith.mulf %46, %44 : vector<8x32xf32>
    %cst_23 = arith.constant 1.000000e+00 : f32
    %48 = vector.broadcast %cst_23 : f32 to vector<8x1xf32>
    %49 = arith.subf %48, %45 : vector<8x1xf32>
    %50 = vector.broadcast %49 : vector<8x1xf32> to vector<8x32xf32>
    %51 = arith.mulf %50, %13 : vector<8x32xf32>
    %52 = arith.addf %47, %51 : vector<8x32xf32>
    %53 = arith.truncf %52 : vector<8x32xf32> to vector<8x32xbf16>
    %cst_24 = arith.constant dense<0.000000e+00> : vector<8x96xf32>
    %54 = tpu.matmul %53, %9, %cst_24 {dimension_numbers = #tpu.dot_dimension_numbers<[1], [0], [0], [1], [0, 0, 1, 1], [], []>} : vector<8x32xbf16>, vector<32x96xbf16>, vector<8x96xf32> -> vector<8x96xf32>
    %c0_25 = arith.constant 0 : index
    %c1 = arith.constant 1 : index
    %c0_26 = arith.constant 0 : index
    %55 = vector.load %arg8[%c0_25, %c1, %c0_26] : memref<8x8x96xf32, #tpu.memory_space<vmem>>, vector<8x1x96xf32>
    %56 = vector.shape_cast %55 : vector<8x1x96xf32> to vector<8x96xf32>
    %57 = vector.extract_strided_slice %56 {offsets = [0, 0], sizes = [8, 32], strides = [1, 1]} : vector<8x96xf32> to vector<8x32xf32>
    %58 = vector.extract_strided_slice %54 {offsets = [0, 0], sizes = [8, 32], strides = [1, 1]} : vector<8x96xf32> to vector<8x32xf32>
    %59 = arith.addf %57, %58 : vector<8x32xf32>
    %60 = arith.negf %59 : vector<8x32xf32>
    %61 = math.exp %60 : vector<8x32xf32>
    %cst_27 = arith.constant 1.000000e+00 : f32
    %62 = vector.broadcast %cst_27 : f32 to vector<8x32xf32>
    %63 = arith.addf %62, %61 : vector<8x32xf32>
    %64 = arith.divf %62, %63 : vector<8x32xf32>
    %65 = vector.extract_strided_slice %56 {offsets = [0, 32], sizes = [8, 32], strides = [1, 1]} : vector<8x96xf32> to vector<8x32xf32>
    %66 = vector.extract_strided_slice %54 {offsets = [0, 32], sizes = [8, 32], strides = [1, 1]} : vector<8x96xf32> to vector<8x32xf32>
    %67 = arith.addf %65, %66 : vector<8x32xf32>
    %68 = arith.negf %67 : vector<8x32xf32>
    %69 = math.exp %68 : vector<8x32xf32>
    %cst_28 = arith.constant 1.000000e+00 : f32
    %70 = vector.broadcast %cst_28 : f32 to vector<8x32xf32>
    %71 = arith.addf %70, %69 : vector<8x32xf32>
    %72 = arith.divf %70, %71 : vector<8x32xf32>
    %73 = vector.extract_strided_slice %56 {offsets = [0, 64], sizes = [8, 32], strides = [1, 1]} : vector<8x96xf32> to vector<8x32xf32>
    %74 = vector.extract_strided_slice %54 {offsets = [0, 64], sizes = [8, 32], strides = [1, 1]} : vector<8x96xf32> to vector<8x32xf32>
    %75 = arith.addf %74, %12 : vector<8x32xf32>
    %76 = arith.mulf %64, %75 : vector<8x32xf32>
    %77 = arith.addf %73, %76 : vector<8x32xf32>
    %78 = math.tanh %77 : vector<8x32xf32>
    %cst_29 = arith.constant 1.000000e+00 : f32
    %79 = vector.broadcast %cst_29 : f32 to vector<8x32xf32>
    %80 = arith.subf %79, %72 : vector<8x32xf32>
    %81 = arith.mulf %80, %78 : vector<8x32xf32>
    %82 = arith.mulf %72, %52 : vector<8x32xf32>
    %83 = arith.addf %81, %82 : vector<8x32xf32>
    %c0_30 = arith.constant 0 : index
    %c1_31 = arith.constant 1 : index
    %84 = vector.load %arg2[%c0_30, %c1_31] : memref<8x8xf32, #tpu.memory_space<vmem>>, vector<8x1xf32>
    %85 = vector.broadcast %84 : vector<8x1xf32> to vector<8x32xf32>
    %86 = arith.mulf %85, %83 : vector<8x32xf32>
    %cst_32 = arith.constant 1.000000e+00 : f32
    %87 = vector.broadcast %cst_32 : f32 to vector<8x1xf32>
    %88 = arith.subf %87, %84 : vector<8x1xf32>
    %89 = vector.broadcast %88 : vector<8x1xf32> to vector<8x32xf32>
    %90 = arith.mulf %89, %52 : vector<8x32xf32>
    %91 = arith.addf %86, %90 : vector<8x32xf32>
    %92 = arith.truncf %91 : vector<8x32xf32> to vector<8x32xbf16>
    %cst_33 = arith.constant dense<0.000000e+00> : vector<8x96xf32>
    %93 = tpu.matmul %92, %9, %cst_33 {dimension_numbers = #tpu.dot_dimension_numbers<[1], [0], [0], [1], [0, 0, 1, 1], [], []>} : vector<8x32xbf16>, vector<32x96xbf16>, vector<8x96xf32> -> vector<8x96xf32>
    %c0_34 = arith.constant 0 : index
    %c2 = arith.constant 2 : index
    %c0_35 = arith.constant 0 : index
    %94 = vector.load %arg8[%c0_34, %c2, %c0_35] : memref<8x8x96xf32, #tpu.memory_space<vmem>>, vector<8x1x96xf32>
    %95 = vector.shape_cast %94 : vector<8x1x96xf32> to vector<8x96xf32>
    %96 = vector.extract_strided_slice %95 {offsets = [0, 0], sizes = [8, 32], strides = [1, 1]} : vector<8x96xf32> to vector<8x32xf32>
    %97 = vector.extract_strided_slice %93 {offsets = [0, 0], sizes = [8, 32], strides = [1, 1]} : vector<8x96xf32> to vector<8x32xf32>
    %98 = arith.addf %96, %97 : vector<8x32xf32>
    %99 = arith.negf %98 : vector<8x32xf32>
    %100 = math.exp %99 : vector<8x32xf32>
    %cst_36 = arith.constant 1.000000e+00 : f32
    %101 = vector.broadcast %cst_36 : f32 to vector<8x32xf32>
    %102 = arith.addf %101, %100 : vector<8x32xf32>
    %103 = arith.divf %101, %102 : vector<8x32xf32>
    %104 = vector.extract_strided_slice %95 {offsets = [0, 32], sizes = [8, 32], strides = [1, 1]} : vector<8x96xf32> to vector<8x32xf32>
    %105 = vector.extract_strided_slice %93 {offsets = [0, 32], sizes = [8, 32], strides = [1, 1]} : vector<8x96xf32> to vector<8x32xf32>
    %106 = arith.addf %104, %105 : vector<8x32xf32>
    %107 = arith.negf %106 : vector<8x32xf32>
    %108 = math.exp %107 : vector<8x32xf32>
    %cst_37 = arith.constant 1.000000e+00 : f32
    %109 = vector.broadcast %cst_37 : f32 to vector<8x32xf32>
    %110 = arith.addf %109, %108 : vector<8x32xf32>
    %111 = arith.divf %109, %110 : vector<8x32xf32>
    %112 = vector.extract_strided_slice %95 {offsets = [0, 64], sizes = [8, 32], strides = [1, 1]} : vector<8x96xf32> to vector<8x32xf32>
    %113 = vector.extract_strided_slice %93 {offsets = [0, 64], sizes = [8, 32], strides = [1, 1]} : vector<8x96xf32> to vector<8x32xf32>
    %114 = arith.addf %113, %12 : vector<8x32xf32>
    %115 = arith.mulf %103, %114 : vector<8x32xf32>
    %116 = arith.addf %112, %115 : vector<8x32xf32>
    %117 = math.tanh %116 : vector<8x32xf32>
    %cst_38 = arith.constant 1.000000e+00 : f32
    %118 = vector.broadcast %cst_38 : f32 to vector<8x32xf32>
    %119 = arith.subf %118, %111 : vector<8x32xf32>
    %120 = arith.mulf %119, %117 : vector<8x32xf32>
    %121 = arith.mulf %111, %91 : vector<8x32xf32>
    %122 = arith.addf %120, %121 : vector<8x32xf32>
    %c0_39 = arith.constant 0 : index
    %c2_40 = arith.constant 2 : index
    %123 = vector.load %arg2[%c0_39, %c2_40] : memref<8x8xf32, #tpu.memory_space<vmem>>, vector<8x1xf32>
    %124 = vector.broadcast %123 : vector<8x1xf32> to vector<8x32xf32>
    %125 = arith.mulf %124, %122 : vector<8x32xf32>
    %cst_41 = arith.constant 1.000000e+00 : f32
    %126 = vector.broadcast %cst_41 : f32 to vector<8x1xf32>
    %127 = arith.subf %126, %123 : vector<8x1xf32>
    %128 = vector.broadcast %127 : vector<8x1xf32> to vector<8x32xf32>
    %129 = arith.mulf %128, %91 : vector<8x32xf32>
    %130 = arith.addf %125, %129 : vector<8x32xf32>
    %131 = arith.truncf %130 : vector<8x32xf32> to vector<8x32xbf16>
    %cst_42 = arith.constant dense<0.000000e+00> : vector<8x96xf32>
    %132 = tpu.matmul %131, %9, %cst_42 {dimension_numbers = #tpu.dot_dimension_numbers<[1], [0], [0], [1], [0, 0, 1, 1], [], []>} : vector<8x32xbf16>, vector<32x96xbf16>, vector<8x96xf32> -> vector<8x96xf32>
    %c0_43 = arith.constant 0 : index
    %c3 = arith.constant 3 : index
    %c0_44 = arith.constant 0 : index
    %133 = vector.load %arg8[%c0_43, %c3, %c0_44] : memref<8x8x96xf32, #tpu.memory_space<vmem>>, vector<8x1x96xf32>
    %134 = vector.shape_cast %133 : vector<8x1x96xf32> to vector<8x96xf32>
    %135 = vector.extract_strided_slice %134 {offsets = [0, 0], sizes = [8, 32], strides = [1, 1]} : vector<8x96xf32> to vector<8x32xf32>
    %136 = vector.extract_strided_slice %132 {offsets = [0, 0], sizes = [8, 32], strides = [1, 1]} : vector<8x96xf32> to vector<8x32xf32>
    %137 = arith.addf %135, %136 : vector<8x32xf32>
    %138 = arith.negf %137 : vector<8x32xf32>
    %139 = math.exp %138 : vector<8x32xf32>
    %cst_45 = arith.constant 1.000000e+00 : f32
    %140 = vector.broadcast %cst_45 : f32 to vector<8x32xf32>
    %141 = arith.addf %140, %139 : vector<8x32xf32>
    %142 = arith.divf %140, %141 : vector<8x32xf32>
    %143 = vector.extract_strided_slice %134 {offsets = [0, 32], sizes = [8, 32], strides = [1, 1]} : vector<8x96xf32> to vector<8x32xf32>
    %144 = vector.extract_strided_slice %132 {offsets = [0, 32], sizes = [8, 32], strides = [1, 1]} : vector<8x96xf32> to vector<8x32xf32>
    %145 = arith.addf %143, %144 : vector<8x32xf32>
    %146 = arith.negf %145 : vector<8x32xf32>
    %147 = math.exp %146 : vector<8x32xf32>
    %cst_46 = arith.constant 1.000000e+00 : f32
    %148 = vector.broadcast %cst_46 : f32 to vector<8x32xf32>
    %149 = arith.addf %148, %147 : vector<8x32xf32>
    %150 = arith.divf %148, %149 : vector<8x32xf32>
    %151 = vector.extract_strided_slice %134 {offsets = [0, 64], sizes = [8, 32], strides = [1, 1]} : vector<8x96xf32> to vector<8x32xf32>
    %152 = vector.extract_strided_slice %132 {offsets = [0, 64], sizes = [8, 32], strides = [1, 1]} : vector<8x96xf32> to vector<8x32xf32>
    %153 = arith.addf %152, %12 : vector<8x32xf32>
    %154 = arith.mulf %142, %153 : vector<8x32xf32>
    %155 = arith.addf %151, %154 : vector<8x32xf32>
    %156 = math.tanh %155 : vector<8x32xf32>
    %cst_47 = arith.constant 1.000000e+00 : f32
    %157 = vector.broadcast %cst_47 : f32 to vector<8x32xf32>
    %158 = arith.subf %157, %150 : vector<8x32xf32>
    %159 = arith.mulf %158, %156 : vector<8x32xf32>
    %160 = arith.mulf %150, %130 : vector<8x32xf32>
    %161 = arith.addf %159, %160 : vector<8x32xf32>
    %c0_48 = arith.constant 0 : index
    %c3_49 = arith.constant 3 : index
    %162 = vector.load %arg2[%c0_48, %c3_49] : memref<8x8xf32, #tpu.memory_space<vmem>>, vector<8x1xf32>
    %163 = vector.broadcast %162 : vector<8x1xf32> to vector<8x32xf32>
    %164 = arith.mulf %163, %161 : vector<8x32xf32>
    %cst_50 = arith.constant 1.000000e+00 : f32
    %165 = vector.broadcast %cst_50 : f32 to vector<8x1xf32>
    %166 = arith.subf %165, %162 : vector<8x1xf32>
    %167 = vector.broadcast %166 : vector<8x1xf32> to vector<8x32xf32>
    %168 = arith.mulf %167, %130 : vector<8x32xf32>
    %169 = arith.addf %164, %168 : vector<8x32xf32>
    %170 = arith.truncf %169 : vector<8x32xf32> to vector<8x32xbf16>
    %cst_51 = arith.constant dense<0.000000e+00> : vector<8x96xf32>
    %171 = tpu.matmul %170, %9, %cst_51 {dimension_numbers = #tpu.dot_dimension_numbers<[1], [0], [0], [1], [0, 0, 1, 1], [], []>} : vector<8x32xbf16>, vector<32x96xbf16>, vector<8x96xf32> -> vector<8x96xf32>
    %c0_52 = arith.constant 0 : index
    %c4 = arith.constant 4 : index
    %c0_53 = arith.constant 0 : index
    %172 = vector.load %arg8[%c0_52, %c4, %c0_53] : memref<8x8x96xf32, #tpu.memory_space<vmem>>, vector<8x1x96xf32>
    %173 = vector.shape_cast %172 : vector<8x1x96xf32> to vector<8x96xf32>
    %174 = vector.extract_strided_slice %173 {offsets = [0, 0], sizes = [8, 32], strides = [1, 1]} : vector<8x96xf32> to vector<8x32xf32>
    %175 = vector.extract_strided_slice %171 {offsets = [0, 0], sizes = [8, 32], strides = [1, 1]} : vector<8x96xf32> to vector<8x32xf32>
    %176 = arith.addf %174, %175 : vector<8x32xf32>
    %177 = arith.negf %176 : vector<8x32xf32>
    %178 = math.exp %177 : vector<8x32xf32>
    %cst_54 = arith.constant 1.000000e+00 : f32
    %179 = vector.broadcast %cst_54 : f32 to vector<8x32xf32>
    %180 = arith.addf %179, %178 : vector<8x32xf32>
    %181 = arith.divf %179, %180 : vector<8x32xf32>
    %182 = vector.extract_strided_slice %173 {offsets = [0, 32], sizes = [8, 32], strides = [1, 1]} : vector<8x96xf32> to vector<8x32xf32>
    %183 = vector.extract_strided_slice %171 {offsets = [0, 32], sizes = [8, 32], strides = [1, 1]} : vector<8x96xf32> to vector<8x32xf32>
    %184 = arith.addf %182, %183 : vector<8x32xf32>
    %185 = arith.negf %184 : vector<8x32xf32>
    %186 = math.exp %185 : vector<8x32xf32>
    %cst_55 = arith.constant 1.000000e+00 : f32
    %187 = vector.broadcast %cst_55 : f32 to vector<8x32xf32>
    %188 = arith.addf %187, %186 : vector<8x32xf32>
    %189 = arith.divf %187, %188 : vector<8x32xf32>
    %190 = vector.extract_strided_slice %173 {offsets = [0, 64], sizes = [8, 32], strides = [1, 1]} : vector<8x96xf32> to vector<8x32xf32>
    %191 = vector.extract_strided_slice %171 {offsets = [0, 64], sizes = [8, 32], strides = [1, 1]} : vector<8x96xf32> to vector<8x32xf32>
    %192 = arith.addf %191, %12 : vector<8x32xf32>
    %193 = arith.mulf %181, %192 : vector<8x32xf32>
    %194 = arith.addf %190, %193 : vector<8x32xf32>
    %195 = math.tanh %194 : vector<8x32xf32>
    %cst_56 = arith.constant 1.000000e+00 : f32
    %196 = vector.broadcast %cst_56 : f32 to vector<8x32xf32>
    %197 = arith.subf %196, %189 : vector<8x32xf32>
    %198 = arith.mulf %197, %195 : vector<8x32xf32>
    %199 = arith.mulf %189, %169 : vector<8x32xf32>
    %200 = arith.addf %198, %199 : vector<8x32xf32>
    %c0_57 = arith.constant 0 : index
    %c4_58 = arith.constant 4 : index
    %201 = vector.load %arg2[%c0_57, %c4_58] : memref<8x8xf32, #tpu.memory_space<vmem>>, vector<8x1xf32>
    %202 = vector.broadcast %201 : vector<8x1xf32> to vector<8x32xf32>
    %203 = arith.mulf %202, %200 : vector<8x32xf32>
    %cst_59 = arith.constant 1.000000e+00 : f32
    %204 = vector.broadcast %cst_59 : f32 to vector<8x1xf32>
    %205 = arith.subf %204, %201 : vector<8x1xf32>
    %206 = vector.broadcast %205 : vector<8x1xf32> to vector<8x32xf32>
    %207 = arith.mulf %206, %169 : vector<8x32xf32>
    %208 = arith.addf %203, %207 : vector<8x32xf32>
    %209 = arith.truncf %208 : vector<8x32xf32> to vector<8x32xbf16>
    %cst_60 = arith.constant dense<0.000000e+00> : vector<8x96xf32>
    %210 = tpu.matmul %209, %9, %cst_60 {dimension_numbers = #tpu.dot_dimension_numbers<[1], [0], [0], [1], [0, 0, 1, 1], [], []>} : vector<8x32xbf16>, vector<32x96xbf16>, vector<8x96xf32> -> vector<8x96xf32>
    %c0_61 = arith.constant 0 : index
    %c5 = arith.constant 5 : index
    %c0_62 = arith.constant 0 : index
    %211 = vector.load %arg8[%c0_61, %c5, %c0_62] : memref<8x8x96xf32, #tpu.memory_space<vmem>>, vector<8x1x96xf32>
    %212 = vector.shape_cast %211 : vector<8x1x96xf32> to vector<8x96xf32>
    %213 = vector.extract_strided_slice %212 {offsets = [0, 0], sizes = [8, 32], strides = [1, 1]} : vector<8x96xf32> to vector<8x32xf32>
    %214 = vector.extract_strided_slice %210 {offsets = [0, 0], sizes = [8, 32], strides = [1, 1]} : vector<8x96xf32> to vector<8x32xf32>
    %215 = arith.addf %213, %214 : vector<8x32xf32>
    %216 = arith.negf %215 : vector<8x32xf32>
    %217 = math.exp %216 : vector<8x32xf32>
    %cst_63 = arith.constant 1.000000e+00 : f32
    %218 = vector.broadcast %cst_63 : f32 to vector<8x32xf32>
    %219 = arith.addf %218, %217 : vector<8x32xf32>
    %220 = arith.divf %218, %219 : vector<8x32xf32>
    %221 = vector.extract_strided_slice %212 {offsets = [0, 32], sizes = [8, 32], strides = [1, 1]} : vector<8x96xf32> to vector<8x32xf32>
    %222 = vector.extract_strided_slice %210 {offsets = [0, 32], sizes = [8, 32], strides = [1, 1]} : vector<8x96xf32> to vector<8x32xf32>
    %223 = arith.addf %221, %222 : vector<8x32xf32>
    %224 = arith.negf %223 : vector<8x32xf32>
    %225 = math.exp %224 : vector<8x32xf32>
    %cst_64 = arith.constant 1.000000e+00 : f32
    %226 = vector.broadcast %cst_64 : f32 to vector<8x32xf32>
    %227 = arith.addf %226, %225 : vector<8x32xf32>
    %228 = arith.divf %226, %227 : vector<8x32xf32>
    %229 = vector.extract_strided_slice %212 {offsets = [0, 64], sizes = [8, 32], strides = [1, 1]} : vector<8x96xf32> to vector<8x32xf32>
    %230 = vector.extract_strided_slice %210 {offsets = [0, 64], sizes = [8, 32], strides = [1, 1]} : vector<8x96xf32> to vector<8x32xf32>
    %231 = arith.addf %230, %12 : vector<8x32xf32>
    %232 = arith.mulf %220, %231 : vector<8x32xf32>
    %233 = arith.addf %229, %232 : vector<8x32xf32>
    %234 = math.tanh %233 : vector<8x32xf32>
    %cst_65 = arith.constant 1.000000e+00 : f32
    %235 = vector.broadcast %cst_65 : f32 to vector<8x32xf32>
    %236 = arith.subf %235, %228 : vector<8x32xf32>
    %237 = arith.mulf %236, %234 : vector<8x32xf32>
    %238 = arith.mulf %228, %208 : vector<8x32xf32>
    %239 = arith.addf %237, %238 : vector<8x32xf32>
    %c0_66 = arith.constant 0 : index
    %c5_67 = arith.constant 5 : index
    %240 = vector.load %arg2[%c0_66, %c5_67] : memref<8x8xf32, #tpu.memory_space<vmem>>, vector<8x1xf32>
    %241 = vector.broadcast %240 : vector<8x1xf32> to vector<8x32xf32>
    %242 = arith.mulf %241, %239 : vector<8x32xf32>
    %cst_68 = arith.constant 1.000000e+00 : f32
    %243 = vector.broadcast %cst_68 : f32 to vector<8x1xf32>
    %244 = arith.subf %243, %240 : vector<8x1xf32>
    %245 = vector.broadcast %244 : vector<8x1xf32> to vector<8x32xf32>
    %246 = arith.mulf %245, %208 : vector<8x32xf32>
    %247 = arith.addf %242, %246 : vector<8x32xf32>
    %248 = arith.truncf %247 : vector<8x32xf32> to vector<8x32xbf16>
    %cst_69 = arith.constant dense<0.000000e+00> : vector<8x96xf32>
    %249 = tpu.matmul %248, %9, %cst_69 {dimension_numbers = #tpu.dot_dimension_numbers<[1], [0], [0], [1], [0, 0, 1, 1], [], []>} : vector<8x32xbf16>, vector<32x96xbf16>, vector<8x96xf32> -> vector<8x96xf32>
    %c0_70 = arith.constant 0 : index
    %c6 = arith.constant 6 : index
    %c0_71 = arith.constant 0 : index
    %250 = vector.load %arg8[%c0_70, %c6, %c0_71] : memref<8x8x96xf32, #tpu.memory_space<vmem>>, vector<8x1x96xf32>
    %251 = vector.shape_cast %250 : vector<8x1x96xf32> to vector<8x96xf32>
    %252 = vector.extract_strided_slice %251 {offsets = [0, 0], sizes = [8, 32], strides = [1, 1]} : vector<8x96xf32> to vector<8x32xf32>
    %253 = vector.extract_strided_slice %249 {offsets = [0, 0], sizes = [8, 32], strides = [1, 1]} : vector<8x96xf32> to vector<8x32xf32>
    %254 = arith.addf %252, %253 : vector<8x32xf32>
    %255 = arith.negf %254 : vector<8x32xf32>
    %256 = math.exp %255 : vector<8x32xf32>
    %cst_72 = arith.constant 1.000000e+00 : f32
    %257 = vector.broadcast %cst_72 : f32 to vector<8x32xf32>
    %258 = arith.addf %257, %256 : vector<8x32xf32>
    %259 = arith.divf %257, %258 : vector<8x32xf32>
    %260 = vector.extract_strided_slice %251 {offsets = [0, 32], sizes = [8, 32], strides = [1, 1]} : vector<8x96xf32> to vector<8x32xf32>
    %261 = vector.extract_strided_slice %249 {offsets = [0, 32], sizes = [8, 32], strides = [1, 1]} : vector<8x96xf32> to vector<8x32xf32>
    %262 = arith.addf %260, %261 : vector<8x32xf32>
    %263 = arith.negf %262 : vector<8x32xf32>
    %264 = math.exp %263 : vector<8x32xf32>
    %cst_73 = arith.constant 1.000000e+00 : f32
    %265 = vector.broadcast %cst_73 : f32 to vector<8x32xf32>
    %266 = arith.addf %265, %264 : vector<8x32xf32>
    %267 = arith.divf %265, %266 : vector<8x32xf32>
    %268 = vector.extract_strided_slice %251 {offsets = [0, 64], sizes = [8, 32], strides = [1, 1]} : vector<8x96xf32> to vector<8x32xf32>
    %269 = vector.extract_strided_slice %249 {offsets = [0, 64], sizes = [8, 32], strides = [1, 1]} : vector<8x96xf32> to vector<8x32xf32>
    %270 = arith.addf %269, %12 : vector<8x32xf32>
    %271 = arith.mulf %259, %270 : vector<8x32xf32>
    %272 = arith.addf %268, %271 : vector<8x32xf32>
    %273 = math.tanh %272 : vector<8x32xf32>
    %cst_74 = arith.constant 1.000000e+00 : f32
    %274 = vector.broadcast %cst_74 : f32 to vector<8x32xf32>
    %275 = arith.subf %274, %267 : vector<8x32xf32>
    %276 = arith.mulf %275, %273 : vector<8x32xf32>
    %277 = arith.mulf %267, %247 : vector<8x32xf32>
    %278 = arith.addf %276, %277 : vector<8x32xf32>
    %c0_75 = arith.constant 0 : index
    %c6_76 = arith.constant 6 : index
    %279 = vector.load %arg2[%c0_75, %c6_76] : memref<8x8xf32, #tpu.memory_space<vmem>>, vector<8x1xf32>
    %280 = vector.broadcast %279 : vector<8x1xf32> to vector<8x32xf32>
    %281 = arith.mulf %280, %278 : vector<8x32xf32>
    %cst_77 = arith.constant 1.000000e+00 : f32
    %282 = vector.broadcast %cst_77 : f32 to vector<8x1xf32>
    %283 = arith.subf %282, %279 : vector<8x1xf32>
    %284 = vector.broadcast %283 : vector<8x1xf32> to vector<8x32xf32>
    %285 = arith.mulf %284, %247 : vector<8x32xf32>
    %286 = arith.addf %281, %285 : vector<8x32xf32>
    %287 = arith.truncf %286 : vector<8x32xf32> to vector<8x32xbf16>
    %cst_78 = arith.constant dense<0.000000e+00> : vector<8x96xf32>
    %288 = tpu.matmul %287, %9, %cst_78 {dimension_numbers = #tpu.dot_dimension_numbers<[1], [0], [0], [1], [0, 0, 1, 1], [], []>} : vector<8x32xbf16>, vector<32x96xbf16>, vector<8x96xf32> -> vector<8x96xf32>
    %c0_79 = arith.constant 0 : index
    %c7 = arith.constant 7 : index
    %c0_80 = arith.constant 0 : index
    %289 = vector.load %arg8[%c0_79, %c7, %c0_80] : memref<8x8x96xf32, #tpu.memory_space<vmem>>, vector<8x1x96xf32>
    %290 = vector.shape_cast %289 : vector<8x1x96xf32> to vector<8x96xf32>
    %291 = vector.extract_strided_slice %290 {offsets = [0, 0], sizes = [8, 32], strides = [1, 1]} : vector<8x96xf32> to vector<8x32xf32>
    %292 = vector.extract_strided_slice %288 {offsets = [0, 0], sizes = [8, 32], strides = [1, 1]} : vector<8x96xf32> to vector<8x32xf32>
    %293 = arith.addf %291, %292 : vector<8x32xf32>
    %294 = arith.negf %293 : vector<8x32xf32>
    %295 = math.exp %294 : vector<8x32xf32>
    %cst_81 = arith.constant 1.000000e+00 : f32
    %296 = vector.broadcast %cst_81 : f32 to vector<8x32xf32>
    %297 = arith.addf %296, %295 : vector<8x32xf32>
    %298 = arith.divf %296, %297 : vector<8x32xf32>
    %299 = vector.extract_strided_slice %290 {offsets = [0, 32], sizes = [8, 32], strides = [1, 1]} : vector<8x96xf32> to vector<8x32xf32>
    %300 = vector.extract_strided_slice %288 {offsets = [0, 32], sizes = [8, 32], strides = [1, 1]} : vector<8x96xf32> to vector<8x32xf32>
    %301 = arith.addf %299, %300 : vector<8x32xf32>
    %302 = arith.negf %301 : vector<8x32xf32>
    %303 = math.exp %302 : vector<8x32xf32>
    %cst_82 = arith.constant 1.000000e+00 : f32
    %304 = vector.broadcast %cst_82 : f32 to vector<8x32xf32>
    %305 = arith.addf %304, %303 : vector<8x32xf32>
    %306 = arith.divf %304, %305 : vector<8x32xf32>
    %307 = vector.extract_strided_slice %290 {offsets = [0, 64], sizes = [8, 32], strides = [1, 1]} : vector<8x96xf32> to vector<8x32xf32>
    %308 = vector.extract_strided_slice %288 {offsets = [0, 64], sizes = [8, 32], strides = [1, 1]} : vector<8x96xf32> to vector<8x32xf32>
    %309 = arith.addf %308, %12 : vector<8x32xf32>
    %310 = arith.mulf %298, %309 : vector<8x32xf32>
    %311 = arith.addf %307, %310 : vector<8x32xf32>
    %312 = math.tanh %311 : vector<8x32xf32>
    %cst_83 = arith.constant 1.000000e+00 : f32
    %313 = vector.broadcast %cst_83 : f32 to vector<8x32xf32>
    %314 = arith.subf %313, %306 : vector<8x32xf32>
    %315 = arith.mulf %314, %312 : vector<8x32xf32>
    %316 = arith.mulf %306, %286 : vector<8x32xf32>
    %317 = arith.addf %315, %316 : vector<8x32xf32>
    %c0_84 = arith.constant 0 : index
    %c7_85 = arith.constant 7 : index
    %318 = vector.load %arg2[%c0_84, %c7_85] : memref<8x8xf32, #tpu.memory_space<vmem>>, vector<8x1xf32>
    %319 = vector.broadcast %318 : vector<8x1xf32> to vector<8x32xf32>
    %320 = arith.mulf %319, %317 : vector<8x32xf32>
    %cst_86 = arith.constant 1.000000e+00 : f32
    %321 = vector.broadcast %cst_86 : f32 to vector<8x1xf32>
    %322 = arith.subf %321, %318 : vector<8x1xf32>
    %323 = vector.broadcast %322 : vector<8x1xf32> to vector<8x32xf32>
    %324 = arith.mulf %323, %286 : vector<8x32xf32>
    %325 = arith.addf %320, %324 : vector<8x32xf32>
    %c0_87 = arith.constant 0 : index
    %c0_88 = arith.constant 0 : index
    %326 = vector.load %arg7[%c0_87, %c0_88] : memref<8x32xf32, #tpu.memory_space<vmem>>, vector<8x32xf32>
    tpu.vector_store %arg7[%c0_87, %c0_88], %325 {strides = array<i32>} : memref<8x32xf32, #tpu.memory_space<vmem>>, vector<8x32xf32>,
    return
  }
  func.func @transform_0(%arg0: i32) -> (i32, i32, i32) {
    %c0_i32 = arith.constant 0 : i32
    %c0_i32_0 = arith.constant 0 : i32
    %c0_i32_1 = arith.constant 0 : i32
    return %arg0, %c0_i32, %c0_i32_0 : i32, i32, i32
  }
  func.func @transform_1(%arg0: i32) -> (i32, i32) {
    %c0_i32 = arith.constant 0 : i32
    %c0_i32_0 = arith.constant 0 : i32
    return %arg0, %c0_i32 : i32, i32
  }
  func.func @transform_2(%arg0: i32) -> (i32, i32) {
    %c0_i32 = arith.constant 0 : i32
    %c0_i32_0 = arith.constant 0 : i32
    %c0_i32_1 = arith.constant 0 : i32
    return %c0_i32, %c0_i32_0 : i32, i32
  }
  func.func @transform_3(%arg0: i32) -> (i32, i32) {
    %c0_i32 = arith.constant 0 : i32
    %c0_i32_0 = arith.constant 0 : i32
    %c0_i32_1 = arith.constant 0 : i32
    return %c0_i32, %c0_i32_0 : i32, i32
  }
  func.func @transform_4(%arg0: i32) -> (i32, i32) {
    %c0_i32 = arith.constant 0 : i32
    %c0_i32_0 = arith.constant 0 : i32
    %c0_i32_1 = arith.constant 0 : i32
    return %c0_i32, %c0_i32_0 : i32, i32
  }
  func.func @transform_5(%arg0: i32) -> (i32, i32) {
    %c0_i32 = arith.constant 0 : i32
    %c0_i32_0 = arith.constant 0 : i32
    %c0_i32_1 = arith.constant 0 : i32
    return %c0_i32, %c0_i32_0 : i32, i32
  }
  func.func @transform_6(%arg0: i32) -> (i32, i32) {
    %c0_i32 = arith.constant 0 : i32
    %c0_i32_0 = arith.constant 0 : i32
    return %arg0, %c0_i32 : i32, i32
  }
}

</mosaic_0001>

<llo_original>
// kernel: tpu_custom_call.1
$region0: #{tpu_custom_call.1}
  #allocation0 [shape = 'u32[]', space=smem, size = 0x4, offset = 0x4, fixed_abs, tag = 'smem constant byte address 0x4 - core index']
  #allocation1 [shape = 'u32[72,128]{1,0:T(1,128)}', space=vmem, size = 0x9000, scoped, tag = 'internal scratch']
  #allocation2 [shape = 'f32[8,8,96]{2,1,0:T(8,128)}', space=vmem, size = 0x8000, scoped, tag = 'scratch operand']
  %s0 = inlined_call_operand.hbm [shape: bf16[8,8,32], index: 0, kind: input, shape index: {}]
  %s1 = inlined_call_operand.hbm [shape: f32[8,8], index: 1, kind: input, shape index: {}]
  %s2 = inlined_call_operand.hbm [shape: bf16[32,96], index: 2, kind: input, shape index: {}]
  %s3 = inlined_call_operand.hbm [shape: bf16[32,96], index: 3, kind: input, shape index: {}]
  %s4 = inlined_call_operand.vmem [shape: f32[1,96], index: 4, kind: input, shape index: {}]
  %s5 = inlined_call_operand.vmem [shape: f32[1,32], index: 5, kind: input, shape index: {}]
  %s6 = inlined_call_operand.hbm [shape: f32[8,32], index: 6, kind: output, shape index: {}]
  %s7 = sld [smem:[#allocation0]]
  $region50: #{tpu_custom_call.1} parent=0
    _
  %s9 = ssub.s32 1, %s7
  %s10 = scalar_select 0, %s9, %s7
  $region1: #{tpu_custom_call.1} parent=0
    #allocation3 [shape = 'u8[16384]{0}', space=vmem, size = 0x4000, scoped, tag = 'input window, operand 0, single buffered']
    #allocation4 [shape = 's32[1]{0}', space=sflag, size = 0x4, scoped, tag = 'scoped memory for tpu_custom_call.1']
    #allocation5 [shape = 's32[1]{0}', space=sflag, size = 0x4, scoped, tag = 'scoped memory for tpu_custom_call.1']
    #allocation6 [shape = 'u8[4096]{0}', space=vmem, size = 0x1000, scoped, tag = 'input window, operand 1, single buffered']
    #allocation7 [shape = 's32[1]{0}', space=sflag, size = 0x4, scoped, tag = 'scoped memory for tpu_custom_call.1']
    #allocation8 [shape = 'u8[8192]{0}', space=vmem, size = 0x2000, scoped, tag = 'input window, operand 2, single buffered']
    #allocation9 [shape = 'u8[8192]{0}', space=vmem, size = 0x2000, scoped, tag = 'input window, operand 3, single buffered']
    #allocation10 [shape = 's32[1]{0}', space=sflag, size = 0x4, scoped, tag = 'scoped memory for tpu_custom_call.1']
    #allocation11 [shape = 'u8[4096]{0}', space=vmem, size = 0x1000, scoped, tag = 'output window, operand 0, single buffered']
    %11 = vsyncpa [#allocation4], 0
    %12 = vsyncpa [#allocation7], 0
    %13 = vsyncpa [#allocation10], 0
    %14 = vsyncpa [#allocation5], 0
    // Predicated region
    $region2: #{tpu_custom_call.1} parent=1 // pred_check
      _
    $region3: #{tpu_custom_call.1} parent=1 // pred_check_branch
      %16 = sbr.rel (0) target = $region5
    $region4: #{tpu_custom_call.1} parent=1 // pred_region
      %18 = vsyncadd [#allocation4], 0
      %s19 = sshll.u32 %s0, 4
      %s20 = int_to_ptr.hbm [resolvable:$true] %s19
      %s21 = sshll.u32 [#allocation3], 4
      %s22 = int_to_ptr.vmem [resolvable:$true] %s21
      %27 = dma.hbm_to_vmem [thread:$0]  %s20, 512, %s22, [#allocation4], 64, 64, 4
    $region5: #{tpu_custom_call.1} parent=1 // pred_fallthru
      _
    // Predicated region
    $region6: #{tpu_custom_call.1} parent=1 // pred_check
      _
    $region7: #{tpu_custom_call.1} parent=1 // pred_check_branch
      %29 = sbr.rel (0) target = $region9
    $region8: #{tpu_custom_call.1} parent=1 // pred_region
      %31 = vsyncadd [#allocation7], 0
      %s33 = sshll.u32 %s1, 4
      %s34 = int_to_ptr.hbm [resolvable:$true] %s33
      %s35 = sshll.u32 [#allocation6], 4
      %s36 = int_to_ptr.vmem [resolvable:$true] %s35
      %38 = dma.hbm_to_vmem [thread:$0]  %s34, 128, %s36, [#allocation7]
    $region9: #{tpu_custom_call.1} parent=1 // pred_fallthru
      _
    // Predicated region
    $region10: #{tpu_custom_call.1} parent=1 // pred_check
      _
    $region11: #{tpu_custom_call.1} parent=1 // pred_check_branch
      %40 = sbr.rel (0) target = $region13
    $region12: #{tpu_custom_call.1} parent=1 // pred_region
      %42 = vsyncadd [#allocation7], 0
      %s43 = sshll.u32 %s2, 4
      %s44 = int_to_ptr.hbm [resolvable:$true] %s43
      %s45 = sshll.u32 [#allocation8], 4
      %s46 = int_to_ptr.vmem [resolvable:$true] %s45
      %51 = dma.hbm_to_vmem [thread:$0]  %s44, 256, %s46, [#allocation7], 64, 64, 4
    $region13: #{tpu_custom_call.1} parent=1 // pred_fallthru
      _
    // Predicated region
    $region14: #{tpu_custom_call.1} parent=1 // pred_check
      _
    $region15: #{tpu_custom_call.1} parent=1 // pred_check_branch
      %53 = sbr.rel (0) target = $region17
    $region16: #{tpu_custom_call.1} parent=1 // pred_region
      %55 = vsyncadd [#allocation10], 0
      %s56 = sshll.u32 %s3, 4
      %s57 = int_to_ptr.hbm [resolvable:$true] %s56
      %s58 = sshll.u32 [#allocation9], 4
      %s59 = int_to_ptr.vmem [resolvable:$true] %s58
      %64 = dma.hbm_to_vmem [thread:$0]  %s57, 256, %s59, [#allocation10], 64, 64, 4
    $region17: #{tpu_custom_call.1} parent=1 // pred_fallthru
      _
    // Predicated region
    $region18: #{tpu_custom_call.1} parent=1 // pred_check
      _
    $region19: #{tpu_custom_call.1} parent=1 // pred_check_branch
      %66 = sbr.rel (0) target = $region21
    $region20: #{tpu_custom_call.1} parent=1 // pred_region
      _
    $region21: #{tpu_custom_call.1} parent=1 // pred_fallthru
      _
    // Predicated region
    $region22: #{tpu_custom_call.1} parent=1 // pred_check
      _
    $region23: #{tpu_custom_call.1} parent=1 // pred_check_branch
      %68 = sbr.rel (0) target = $region25
    $region24: #{tpu_custom_call.1} parent=1 // pred_region
      _
    $region25: #{tpu_custom_call.1} parent=1 // pred_fallthru
      _
    // Predicated region
    $region26: #{tpu_custom_call.1} parent=1 // pred_check
      _
    $region27: #{tpu_custom_call.1} parent=1 // pred_check_branch
      %70 = sbr.rel (0) target = $region29
    $region28: #{tpu_custom_call.1} parent=1 // pred_region
      %72 = dma.done [#allocation4], 512
    $region29: #{tpu_custom_call.1} parent=1 // pred_fallthru
      _
    // Predicated region
    $region30: #{tpu_custom_call.1} parent=1 // pred_check
      _
    $region31: #{tpu_custom_call.1} parent=1 // pred_check_branch
      %74 = sbr.rel (0) target = $region33
    $region32: #{tpu_custom_call.1} parent=1 // pred_region
      %76 = dma.done [#allocation7], 128
    $region33: #{tpu_custom_call.1} parent=1 // pred_fallthru
      _
    // Predicated region
    $region34: #{tpu_custom_call.1} parent=1 // pred_check
      _
    $region35: #{tpu_custom_call.1} parent=1 // pred_check_branch
      %78 = sbr.rel (0) target = $region37
    $region36: #{tpu_custom_call.1} parent=1 // pred_region
      %80 = dma.done [#allocation7], 256
    $region37: #{tpu_custom_call.1} parent=1 // pred_fallthru
      _
    // Predicated region
    $region38: #{tpu_custom_call.1} parent=1 // pred_check
      _
    $region39: #{tpu_custom_call.1} parent=1 // pred_check_branch
      %82 = sbr.rel (0) target = $region41
    $region40: #{tpu_custom_call.1} parent=1 // pred_region
      %84 = dma.done [#allocation10], 256
    $region41: #{tpu_custom_call.1} parent=1 // pred_fallthru
      _
    %v86 = vld [vmem:[#allocation3] sm:$0xf]
    %v87 = vld [vmem:[#allocation3 + $0x4] sm:$0xf]
    %v88 = vld [vmem:[#allocation3 + $0x8] sm:$0xf]
    %v89 = vld [vmem:[#allocation3 + $0xc] sm:$0xf]
    %v90 = vld [vmem:[#allocation3 + $0x10] sm:$0xf]
    %v91 = vld [vmem:[#allocation3 + $0x14] sm:$0xf]
    %v92 = vld [vmem:[#allocation3 + $0x18] sm:$0xf]
    %v93 = vld [vmem:[#allocation3 + $0x1c] sm:$0xf]
    %v94 = vld [vmem:[#allocation8] sm:$0xf]
    %v95 = vld [vmem:[#allocation8 + $0x4] sm:$0xf]
    %v96 = vld [vmem:[#allocation8 + $0x8] sm:$0xf]
    %v97 = vld [vmem:[#allocation8 + $0xc] sm:$0xf]
    %v98 = vld [vmem:[%s4] sm:$0x1]
    %v100 = vperm.slane %v98, 0
    %v110 = vunpack.c.l.b16 %v86
    %v111 = vunpack.c.l.b16 %v87
    %v112 = vunpack.c.l.b16 %v88
    %v113 = vunpack.c.l.b16 %v89
    %v114 = vunpack.c.l.b16 %v90
    %v115 = vunpack.c.l.b16 %v91
    %v116 = vunpack.c.l.b16 %v92
    %v117 = vunpack.c.l.b16 %v93
    %v118 = vpack.c.b16 %v111, %v110
    %v119 = vpack.c.b16 %v113, %v112
    %v120 = vpack.c.b16 %v115, %v114
    %v121 = vpack.c.b16 %v117, %v116
    %v126 = vunpack.c.l.b16 %v94
    %v127 = vunpack.c.l.b16 %v95
    %v128 = vunpack.c.l.b16 %v96
    %v129 = vunpack.c.l.b16 %v97
    %v130 = vpack.c.b16 %v127, %v126
    %v131 = vpack.c.b16 %v129, %v128
    %vm134 = vcmask 261120
    %v136 = vsel %vm134, %v118, 0
    %v139 = vsel %vm134, %v119, 0
    %v142 = vsel %vm134, %v120, 0
    %v145 = vsel %vm134, %v121, 0
    %147 = vmatpush.bf16.msra.mxu0 0
    %148 = vmatpush.bf16.msra.mxu0 0
    %149 = vmatpush.bf16.msra.mxu0 0
    %150 = vmatpush.bf16.msra.mxu0 0
    %151 = vmatpush.bf16.msra.mxu0 0
    %152 = vmatpush.bf16.msra.mxu0 0
    %153 = vmatpush.bf16.msra.mxu0 %v131
    %154 = vmatpush.bf16.msra.mxu0 %v130
    %155 = vmatmul.bf16.gmra.mxu0 %v136
    %v156 = vpop.f32.mrf.mxu0
    %v157 = vadd.f32 %v100, %v156
    %v158 = vpop.f32.mrf.mxu0
    %v159 = vadd.f32 %v100, %v158
    %160 = vmatmul.bf16.gmra.mxu0 %v139
    %v161 = vpop.f32.mrf.mxu0
    %v162 = vadd.f32 %v100, %v161
    %v163 = vpop.f32.mrf.mxu0
    %v164 = vadd.f32 %v100, %v163
    %165 = vmatmul.bf16.gmra.mxu0 %v142
    %v166 = vpop.f32.mrf.mxu0
    %v167 = vadd.f32 %v100, %v166
    %v168 = vpop.f32.mrf.mxu0
    %v169 = vadd.f32 %v100, %v168
    %170 = vmatmul.bf16.gmra.mxu0 %v145
    %v171 = vpop.f32.mrf.mxu0
    %v172 = vadd.f32 %v100, %v171
    %v173 = vpop.f32.mrf.mxu0
    %v174 = vadd.f32 %v100, %v173
    %175 = vdwg.mxu0
    %vm176 = vcmask 785408
    %177 = vst.msk [vmem:[#allocation2] sm:$0xff] %vm176, %v157
    %178 = vst.msk [vmem:[#allocation2 + $0x8] sm:$0xff] %vm176, %v159
    %179 = vst.msk [vmem:[#allocation2 + $0x10] sm:$0xff] %vm176, %v162
    %180 = vst.msk [vmem:[#allocation2 + $0x18] sm:$0xff] %vm176, %v164
    %181 = vst.msk [vmem:[#allocation2 + $0x20] sm:$0xff] %vm176, %v167
    %182 = vst.msk [vmem:[#allocation2 + $0x28] sm:$0xff] %vm176, %v169
    %183 = vst.msk [vmem:[#allocation2 + $0x30] sm:$0xff] %vm176, %v172
    %184 = vst.msk [vmem:[#allocation2 + $0x38] sm:$0xff] %vm176, %v174
    %v185 = vld [vmem:[#allocation9] sm:$0xf]
    %v186 = vld [vmem:[#allocation9 + $0x4] sm:$0xf]
    %v187 = vld [vmem:[#allocation9 + $0x8] sm:$0xf]
    %v188 = vld [vmem:[#allocation9 + $0xc] sm:$0xf]
    %v189 = vld [vmem:[%s5] sm:$0x1]
    %v191 = vperm.slane %v189, 0
    %v196 = vunpack.c.l.b16 %v185
    %v197 = vunpack.c.l.b16 %v186
    %v198 = vunpack.c.l.b16 %v187
    %v199 = vunpack.c.l.b16 %v188
    %v200 = vpack.c.b16 %v197, %v196
    %v201 = vpack.c.b16 %v199, %v198
    %v205 = vsel %vm134, 0, 0
    %207 = vmatpush.bf16.msra.mxu0 0
    %208 = vmatpush.bf16.msra.mxu0 0
    %209 = vmatpush.bf16.msra.mxu0 0
    %210 = vmatpush.bf16.msra.mxu0 0
    %211 = vmatpush.bf16.msra.mxu0 0
    %212 = vmatpush.bf16.msra.mxu0 0
    %213 = vmatpush.bf16.msra.mxu0 %v201
    %214 = vmatpush.bf16.msra.mxu0 %v200
    %215 = vmatmul.bf16.gmra.mxu0 %v205
    %v216 = vpop.f32.mrf.mxu0
    %v217 = vadd.f32 0.0, %v216
    %v218 = vpop.f32.mrf.mxu0
    %219 = vdwg.mxu0
    %v220 = vld [vmem:[#allocation2] sm:$0x1]
    %v221 = vld [vmem:[#allocation2 + $0x8] sm:$0x1]
    %v222 = vld [vmem:[#allocation2 + $0x10] sm:$0x1]
    %v223 = vld [vmem:[#allocation2 + $0x18] sm:$0x1]
    %v224 = vld [vmem:[#allocation2 + $0x20] sm:$0x1]
    %v225 = vld [vmem:[#allocation2 + $0x28] sm:$0x1]
    %v226 = vld [vmem:[#allocation2 + $0x30] sm:$0x1]
    %v227 = vld [vmem:[#allocation2 + $0x38] sm:$0x1]
    %v229 = vrot.slane %v217, 1
    %v230 = vrot.slane %v217, 2
    %v231 = vrot.slane %v217, 3
    %v232 = vrot.slane %v217, 4
    %v233 = vrot.slane %v217, 5
    %v234 = vrot.slane %v217, 6
    %v235 = vrot.slane %v217, 7
    %v244 = vadd.f32 %v220, %v217
    %v245 = vadd.f32 %v221, %v229
    %v246 = vadd.f32 %v222, %v230
    %v247 = vadd.f32 %v223, %v231
    %v248 = vadd.f32 %v224, %v232
    %v249 = vadd.f32 %v225, %v233
    %v250 = vadd.f32 %v226, %v234
    %v251 = vadd.f32 %v227, %v235
    %v252 = vxor.u32 %v244, 2147483648
    %v253 = vxor.u32 %v245, 2147483648
    %v254 = vxor.u32 %v246, 2147483648
    %v255 = vxor.u32 %v247, 2147483648
    %v256 = vxor.u32 %v248, 2147483648
    %v257 = vxor.u32 %v249, 2147483648
    %v258 = vxor.u32 %v250, 2147483648
    %v259 = vxor.u32 %v251, 2147483648
    %v260 = vmul.f32 %v252, 1.442695
    %v261 = vpow.pop %v260
    %v262 = vmul.f32 %v253, 1.442695
    %v263 = vpow.pop %v262
    %v264 = vmul.f32 %v254, 1.442695
    %v265 = vpow.pop %v264
    %v266 = vmul.f32 %v255, 1.442695
    %v267 = vpow.pop %v266
    %v268 = vmul.f32 %v256, 1.442695
    %v269 = vpow.pop %v268
    %v270 = vmul.f32 %v257, 1.442695
    %v271 = vpow.pop %v270
    %v272 = vmul.f32 %v258, 1.442695
    %v273 = vpow.pop %v272
    %v274 = vmul.f32 %v259, 1.442695
    %v275 = vpow.pop %v274
    %v276 = vadd.f32 %v261, 1.0
    %v277 = vadd.f32 %v263, 1.0
    %v278 = vadd.f32 %v265, 1.0
    %v279 = vadd.f32 %v267, 1.0
    %v280 = vadd.f32 %v269, 1.0
    %v281 = vadd.f32 %v271, 1.0
    %v282 = vadd.f32 %v273, 1.0
    %v283 = vadd.f32 %v275, 1.0
    %v284 = vrcp.pop %v276
    %v285 = vmul.f32 %v276, %v284
    %v286 = vsub.f32 1.0, %v285
    %v287 = vmul.f32 %v284, %v286
    %v288 = vadd.f32 %v284, %v287
    %vm289 = vweird.f32 %v276
    %vm290 = vweird.f32 %v284
    %vm291 = vmor %vm289, %vm290
    %v292 = vsel %vm291, %v284, %v288
    %v293 = vand.u32 2147483647, %v276
    %vm294 = vcmp.eq.f32.partialorder %v293, 8.507059e+37
    %v295 = vand.u32 %v276, 2147483648
    %v296 = vor.u32 1.1754944e-38, %v295
    %v297 = vsel %vm294, %v296, %v292
    %v298 = vmul.f32 1.0, %v297
    %v299 = vrcp.pop %v277
    %v300 = vmul.f32 %v277, %v299
    %v301 = vsub.f32 1.0, %v300
    %v302 = vmul.f32 %v299, %v301
    %v303 = vadd.f32 %v299, %v302
    %vm304 = vweird.f32 %v277
    %vm305 = vweird.f32 %v299
    %vm306 = vmor %vm304, %vm305
    %v307 = vsel %vm306, %v299, %v303
    %v308 = vand.u32 2147483647, %v277
    %vm309 = vcmp.eq.f32.partialorder %v308, 8.507059e+37
    %v310 = vand.u32 %v277, 2147483648
    %v311 = vor.u32 1.1754944e-38, %v310
    %v312 = vsel %vm309, %v311, %v307
    %v313 = vmul.f32 1.0, %v312
    %v314 = vrcp.pop %v278
    %v315 = vmul.f32 %v278, %v314
    %v316 = vsub.f32 1.0, %v315
    %v317 = vmul.f32 %v314, %v316
    %v318 = vadd.f32 %v314, %v317
    %vm319 = vweird.f32 %v278
    %vm320 = vweird.f32 %v314
    %vm321 = vmor %vm319, %vm320
    %v322 = vsel %vm321, %v314, %v318
    %v323 = vand.u32 2147483647, %v278
    %vm324 = vcmp.eq.f32.partialorder %v323, 8.507059e+37
    %v325 = vand.u32 %v278, 2147483648
    %v326 = vor.u32 1.1754944e-38, %v325
    %v327 = vsel %vm324, %v326, %v322
    %v328 = vmul.f32 1.0, %v327
    %v329 = vrcp.pop %v279
    %v330 = vmul.f32 %v279, %v329
    %v331 = vsub.f32 1.0, %v330
    %v332 = vmul.f32 %v329, %v331
    %v333 = vadd.f32 %v329, %v332
    %vm334 = vweird.f32 %v279
    %vm335 = vweird.f32 %v329
    %vm336 = vmor %vm334, %vm335
    %v337 = vsel %vm336, %v329, %v333
    %v338 = vand.u32 2147483647, %v279
    %vm339 = vcmp.eq.f32.partialorder %v338, 8.507059e+37
    %v340 = vand.u32 %v279, 2147483648
    %v341 = vor.u32 1.1754944e-38, %v340
    %v342 = vsel %vm339, %v341, %v337
    %v343 = vmul.f32 1.0, %v342
    %v344 = vrcp.pop %v280
    %v345 = vmul.f32 %v280, %v344
    %v346 = vsub.f32 1.0, %v345
    %v347 = vmul.f32 %v344, %v346
    %v348 = vadd.f32 %v344, %v347
    %vm349 = vweird.f32 %v280
    %vm350 = vweird.f32 %v344
    %vm351 = vmor %vm349, %vm350
    %v352 = vsel %vm351, %v344, %v348
    %v353 = vand.u32 2147483647, %v280
    %vm354 = vcmp.eq.f32.partialorder %v353, 8.507059e+37
    %v355 = vand.u32 %v280, 2147483648
    %v356 = vor.u32 1.1754944e-38, %v355
    %v357 = vsel %vm354, %v356, %v352
    %v358 = vmul.f32 1.0, %v357
    %v359 = vrcp.pop %v281
    %v360 = vmul.f32 %v281, %v359
    %v361 = vsub.f32 1.0, %v360
    %v362 = vmul.f32 %v359, %v361
    %v363 = vadd.f32 %v359, %v362
    %vm364 = vweird.f32 %v281
    %vm365 = vweird.f32 %v359
    %vm366 = vmor %vm364, %vm365
    %v367 = vsel %vm366, %v359, %v363
    %v368 = vand.u32 2147483647, %v281
    %vm369 = vcmp.eq.f32.partialorder %v368, 8.507059e+37
    %v370 = vand.u32 %v281, 2147483648
    %v371 = vor.u32 1.1754944e-38, %v370
    %v372 = vsel %vm369, %v371, %v367
    %v373 = vmul.f32 1.0, %v372
    %v374 = vrcp.pop %v282
    %v375 = vmul.f32 %v282, %v374
    %v376 = vsub.f32 1.0, %v375
    %v377 = vmul.f32 %v374, %v376
    %v378 = vadd.f32 %v374, %v377
    %vm379 = vweird.f32 %v282
    %vm380 = vweird.f32 %v374
    %vm381 = vmor %vm379, %vm380
    %v382 = vsel %vm381, %v374, %v378
    %v383 = vand.u32 2147483647, %v282
    %vm384 = vcmp.eq.f32.partialorder %v383, 8.507059e+37
    %v385 = vand.u32 %v282, 2147483648
    %v386 = vor.u32 1.1754944e-38, %v385
    %v387 = vsel %vm384, %v386, %v382
    %v388 = vmul.f32 1.0, %v387
    %v389 = vrcp.pop %v283
    %v390 = vmul.f32 %v283, %v389
    %v391 = vsub.f32 1.0, %v390
    %v392 = vmul.f32 %v389, %v391
    %v393 = vadd.f32 %v389, %v392
    %vm394 = vweird.f32 %v283
    %vm395 = vweird.f32 %v389
    %vm396 = vmor %vm394, %vm395
    %v397 = vsel %vm396, %v389, %v393
    %v398 = vand.u32 2147483647, %v283
    %vm399 = vcmp.eq.f32.partialorder %v398, 8.507059e+37
    %v400 = vand.u32 %v283, 2147483648
    %v401 = vor.u32 1.1754944e-38, %v400
    %v402 = vsel %vm399, %v401, %v397
    %v403 = vmul.f32 1.0, %v402
    %404 = vrot.lane.b32.xlu0 %v191, 64
    %v405 = vpop.permute.xlu0 %404
    %v407 = vadd.f32 %v217, %v405
    %v409 = vrot.slane %v407, 1
    %v410 = vrot.slane %v407, 2
    %v411 = vrot.slane %v407, 3
    %v412 = vrot.slane %v407, 4
    %v413 = vrot.slane %v407, 5
    %v414 = vrot.slane %v407, 6
    %v415 = vrot.slane %v407, 7
    %416 = vrot.lane.b32.xlu0 %v407, 64
    %v417 = vpop.permute.xlu0 %416
    %418 = vrot.lane.b32.xlu0 %v409, 64
    %v419 = vpop.permute.xlu0 %418
    %420 = vrot.lane.b32.xlu0 %v410, 64
    %v421 = vpop.permute.xlu0 %420
    %422 = vrot.lane.b32.xlu0 %v411, 64
    %v423 = vpop.permute.xlu0 %422
    %424 = vrot.lane.b32.xlu0 %v412, 64
    %v425 = vpop.permute.xlu0 %424
    %426 = vrot.lane.b32.xlu0 %v413, 64
    %v427 = vpop.permute.xlu0 %426
    %428 = vrot.lane.b32.xlu0 %v414, 64
    %v429 = vpop.permute.xlu0 %428
    %430 = vrot.lane.b32.xlu0 %v415, 64
    %v431 = vpop.permute.xlu0 %430
    %v440 = vmul.f32 %v298, %v417
    %v441 = vmul.f32 %v313, %v419
    %v442 = vmul.f32 %v328, %v421
    %v443 = vmul.f32 %v343, %v423
    %v444 = vmul.f32 %v358, %v425
    %v445 = vmul.f32 %v373, %v427
    %v446 = vmul.f32 %v388, %v429
    %v447 = vmul.f32 %v403, %v431
    %456 = vrot.lane.b32.xlu0 %v440, 64
    %v457 = vpop.permute.xlu0 %456
    %458 = vrot.lane.b32.xlu0 %v441, 64
    %v459 = vpop.permute.xlu0 %458
    %460 = vrot.lane.b32.xlu0 %v442, 64
    %v461 = vpop.permute.xlu0 %460
    %462 = vrot.lane.b32.xlu0 %v443, 64
    %v463 = vpop.permute.xlu0 %462
    %464 = vrot.lane.b32.xlu0 %v444, 64
    %v465 = vpop.permute.xlu0 %464
    %466 = vrot.lane.b32.xlu0 %v445, 64
    %v467 = vpop.permute.xlu0 %466
    %468 = vrot.lane.b32.xlu0 %v446, 64
    %v469 = vpop.permute.xlu0 %468
    %470 = vrot.lane.b32.xlu0 %v447, 64
    %v471 = vpop.permute.xlu0 %470
    %v480 = vadd.f32 %v220, %v457
    %v481 = vadd.f32 %v221, %v459
    %v482 = vadd.f32 %v222, %v461
    %v483 = vadd.f32 %v223, %v463
    %v484 = vadd.f32 %v224, %v465
    %v485 = vadd.f32 %v225, %v467
    %v486 = vadd.f32 %v226, %v469
    %v487 = vadd.f32 %v227, %v471
    %v488 = vtanh.pop %v480
    %v489 = vtanh.pop %v481
    %v490 = vtanh.pop %v482
    %v491 = vtanh.pop %v483
    %v492 = vtanh.pop %v484
    %v493 = vtanh.pop %v485
    %v494 = vtanh.pop %v486
    %v495 = vtanh.pop %v487
    %v496 = vsub.f32 1.0, %v298
    %v497 = vsub.f32 1.0, %v313
    %v498 = vsub.f32 1.0, %v328
    %v499 = vsub.f32 1.0, %v343
    %v500 = vsub.f32 1.0, %v358
    %v501 = vsub.f32 1.0, %v373
    %v502 = vsub.f32 1.0, %v388
    %v503 = vsub.f32 1.0, %v403
    %512 = vrot.lane.b32.xlu0 %v488, 96
    %v513 = vpop.permute.xlu0 %512
    %514 = vrot.lane.b32.xlu0 %v489, 96
    %v515 = vpop.permute.xlu0 %514
    %516 = vrot.lane.b32.xlu0 %v490, 96
    %v517 = vpop.permute.xlu0 %516
    %518 = vrot.lane.b32.xlu0 %v491, 96
    %v519 = vpop.permute.xlu0 %518
    %520 = vrot.lane.b32.xlu0 %v492, 96
    %v521 = vpop.permute.xlu0 %520
    %522 = vrot.lane.b32.xlu0 %v493, 96
    %v523 = vpop.permute.xlu0 %522
    %524 = vrot.lane.b32.xlu0 %v494, 96
    %v525 = vpop.permute.xlu0 %524
    %526 = vrot.lane.b32.xlu0 %v495, 96
    %v527 = vpop.permute.xlu0 %526
    %v536 = vmul.f32 %v496, %v513
    %v537 = vmul.f32 %v497, %v515
    %v538 = vmul.f32 %v498, %v517
    %v539 = vmul.f32 %v499, %v519
    %v540 = vmul.f32 %v500, %v521
    %v541 = vmul.f32 %v501, %v523
    %v542 = vmul.f32 %v502, %v525
    %v543 = vmul.f32 %v503, %v527
    %v544 = vmul.f32 %v298, 0.0
    %v545 = vmul.f32 %v313, 0.0
    %v546 = vmul.f32 %v328, 0.0
    %v547 = vmul.f32 %v343, 0.0
    %v548 = vmul.f32 %v358, 0.0
    %v549 = vmul.f32 %v373, 0.0
    %v550 = vmul.f32 %v388, 0.0
    %v551 = vmul.f32 %v403, 0.0
    %v552 = vadd.f32 %v536, %v544
    %v553 = vadd.f32 %v537, %v545
    %v554 = vadd.f32 %v538, %v546
    %v555 = vadd.f32 %v539, %v547
    %v556 = vadd.f32 %v540, %v548
    %v557 = vadd.f32 %v541, %v549
    %v558 = vadd.f32 %v542, %v550
    %v559 = vadd.f32 %v543, %v551
    %v560 = vld [vmem:[#allocation6] sm:$0xff]
    %562 = vset.pattern.permute.xlu0 0
    %563 = vperm.xlu0 %562, %v560
    %v564 = vpop.permute.xlu0 %563
    %v574 = vrot.slane %v553, 7
    %vm575 = vcmask 1041409
    %v576 = vsel %vm575, %v574, %v552
    %v577 = vrot.slane %v554, 6
    %vm578 = vcmask 1042434
    %v579 = vsel %vm578, %v577, %v576
    %v580 = vrot.slane %v555, 5
    %vm581 = vcmask 1043459
    %v582 = vsel %vm581, %v580, %v579
    %v583 = vrot.slane %v556, 4
    %vm584 = vcmask 1044484
    %v585 = vsel %vm584, %v583, %v582
    %v586 = vrot.slane %v557, 3
    %vm587 = vcmask 1045509
    %v588 = vsel %vm587, %v586, %v585
    %v589 = vrot.slane %v558, 2
    %vm590 = vcmask 1046534
    %v591 = vsel %vm590, %v589, %v588
    %v592 = vrot.slane %v559, 1
    %vm593 = vcmask 1047559
    %v594 = vsel %vm593, %v592, %v591
    %595 = vrot.lane.b32.xlu0 %v594, 96
    %v596 = vpop.permute.xlu0 %595
    %v598 = vmul.f32 %v564, %v596
    %v599 = vsub.f32 1.0, %v560
    %601 = vset.pattern.permute.xlu0 0
    %602 = vperm.xlu0 %601, %v599
    %v603 = vpop.permute.xlu0 %602
    %v605 = vmul.f32 %v603, 0.0
    %v606 = vadd.f32 %v598, %v605
    %v607 = vpack.c.bf16 %v606, %v606
    %v609 = vsel %vm134, %v607, 0
    %611 = vmatpush.bf16.msra.mxu0 0
    %612 = vmatpush.bf16.msra.mxu0 0
    %613 = vmatpush.bf16.msra.mxu0 0
    %614 = vmatpush.bf16.msra.mxu0 0
    %615 = vmatpush.bf16.msra.mxu0 0
    %616 = vmatpush.bf16.msra.mxu0 0
    %617 = vmatpush.bf16.msra.mxu0 %v201
    %618 = vmatpush.bf16.msra.mxu0 %v200
    %619 = vmatmul.bf16.gmra.mxu0 %v609
    %v620 = vpop.f32.mrf.mxu0
    %v621 = vadd.f32 0.0, %v620
    %v622 = vpop.f32.mrf.mxu0
    %623 = vdwg.mxu0
    %v624 = vld [vmem:[#allocation2 + $0x1] sm:$0x1]
    %v625 = vld [vmem:[#allocation2 + $0x9] sm:$0x1]
    %v626 = vld [vmem:[#allocation2 + $0x11] sm:$0x1]
    %v627 = vld [vmem:[#allocation2 + $0x19] sm:$0x1]
    %v628 = vld [vmem:[#allocation2 + $0x21] sm:$0x1]
    %v629 = vld [vmem:[#allocation2 + $0x29] sm:$0x1]
    %v630 = vld [vmem:[#allocation2 + $0x31] sm:$0x1]
    %v631 = vld [vmem:[#allocation2 + $0x39] sm:$0x1]
    %v633 = vrot.slane %v621, 1
    %v634 = vrot.slane %v621, 2
    %v635 = vrot.slane %v621, 3
    %v636 = vrot.slane %v621, 4
    %v637 = vrot.slane %v621, 5
    %v638 = vrot.slane %v621, 6
    %v639 = vrot.slane %v621, 7
    %v648 = vadd.f32 %v624, %v621
    %v649 = vadd.f32 %v625, %v633
    %v650 = vadd.f32 %v626, %v634
    %v651 = vadd.f32 %v627, %v635
    %v652 = vadd.f32 %v628, %v636
    %v653 = vadd.f32 %v629, %v637
    %v654 = vadd.f32 %v630, %v638
    %v655 = vadd.f32 %v631, %v639
    %v656 = vxor.u32 %v648, 2147483648
    %v657 = vxor.u32 %v649, 2147483648
    %v658 = vxor.u32 %v650, 2147483648
    %v659 = vxor.u32 %v651, 2147483648
    %v660 = vxor.u32 %v652, 2147483648
    %v661 = vxor.u32 %v653, 2147483648
    %v662 = vxor.u32 %v654, 2147483648
    %v663 = vxor.u32 %v655, 2147483648
    %v664 = vmul.f32 %v656, 1.442695
    %v665 = vpow.pop %v664
    %v666 = vmul.f32 %v657, 1.442695
    %v667 = vpow.pop %v666
    %v668 = vmul.f32 %v658, 1.442695
    %v669 = vpow.pop %v668
    %v670 = vmul.f32 %v659, 1.442695
    %v671 = vpow.pop %v670
    %v672 = vmul.f32 %v660, 1.442695
    %v673 = vpow.pop %v672
    %v674 = vmul.f32 %v661, 1.442695
    %v675 = vpow.pop %v674
    %v676 = vmul.f32 %v662, 1.442695
    %v677 = vpow.pop %v676
    %v678 = vmul.f32 %v663, 1.442695
    %v679 = vpow.pop %v678
    %v680 = vadd.f32 %v665, 1.0
    %v681 = vadd.f32 %v667, 1.0
    %v682 = vadd.f32 %v669, 1.0
    %v683 = vadd.f32 %v671, 1.0
    %v684 = vadd.f32 %v673, 1.0
    %v685 = vadd.f32 %v675, 1.0
    %v686 = vadd.f32 %v677, 1.0
    %v687 = vadd.f32 %v679, 1.0
    %v688 = vrcp.pop %v680
    %v689 = vmul.f32 %v680, %v688
    %v690 = vsub.f32 1.0, %v689
    %v691 = vmul.f32 %v688, %v690
    %v692 = vadd.f32 %v688, %v691
    %vm693 = vweird.f32 %v680
    %vm694 = vweird.f32 %v688
    %vm695 = vmor %vm693, %vm694
    %v696 = vsel %vm695, %v688, %v692
    %v697 = vand.u32 2147483647, %v680
    %vm698 = vcmp.eq.f32.partialorder %v697, 8.507059e+37
    %v699 = vand.u32 %v680, 2147483648
    %v700 = vor.u32 1.1754944e-38, %v699
    %v701 = vsel %vm698, %v700, %v696
    %v702 = vmul.f32 1.0, %v701
    %v703 = vrcp.pop %v681
    %v704 = vmul.f32 %v681, %v703
    %v705 = vsub.f32 1.0, %v704
    %v706 = vmul.f32 %v703, %v705
    %v707 = vadd.f32 %v703, %v706
    %vm708 = vweird.f32 %v681
    %vm709 = vweird.f32 %v703
    %vm710 = vmor %vm708, %vm709
    %v711 = vsel %vm710, %v703, %v707
    %v712 = vand.u32 2147483647, %v681
    %vm713 = vcmp.eq.f32.partialorder %v712, 8.507059e+37
    %v714 = vand.u32 %v681, 2147483648
    %v715 = vor.u32 1.1754944e-38, %v714
    %v716 = vsel %vm713, %v715, %v711
    %v717 = vmul.f32 1.0, %v716
    %v718 = vrcp.pop %v682
    %v719 = vmul.f32 %v682, %v718
    %v720 = vsub.f32 1.0, %v719
    %v721 = vmul.f32 %v718, %v720
    %v722 = vadd.f32 %v718, %v721
    %vm723 = vweird.f32 %v682
    %vm724 = vweird.f32 %v718
    %vm725 = vmor %vm723, %vm724
    %v726 = vsel %vm725, %v718, %v722
    %v727 = vand.u32 2147483647, %v682
    %vm728 = vcmp.eq.f32.partialorder %v727, 8.507059e+37
    %v729 = vand.u32 %v682, 2147483648
    %v730 = vor.u32 1.1754944e-38, %v729
    %v731 = vsel %vm728, %v730, %v726
    %v732 = vmul.f32 1.0, %v731
    %v733 = vrcp.pop %v683
    %v734 = vmul.f32 %v683, %v733
    %v735 = vsub.f32 1.0, %v734
    %v736 = vmul.f32 %v733, %v735
    %v737 = vadd.f32 %v733, %v736
    %vm738 = vweird.f32 %v683
    %vm739 = vweird.f32 %v733
    %vm740 = vmor %vm738, %vm739
    %v741 = vsel %vm740, %v733, %v737
    %v742 = vand.u32 2147483647, %v683
    %vm743 = vcmp.eq.f32.partialorder %v742, 8.507059e+37
    %v744 = vand.u32 %v683, 2147483648
    %v745 = vor.u32 1.1754944e-38, %v744
    %v746 = vsel %vm743, %v745, %v741
    %v747 = vmul.f32 1.0, %v746
    %v748 = vrcp.pop %v684
    %v749 = vmul.f32 %v684, %v748
    %v750 = vsub.f32 1.0, %v749
    %v751 = vmul.f32 %v748, %v750
    %v752 = vadd.f32 %v748, %v751
    %vm753 = vweird.f32 %v684
    %vm754 = vweird.f32 %v748
    %vm755 = vmor %vm753, %vm754
    %v756 = vsel %vm755, %v748, %v752
    %v757 = vand.u32 2147483647, %v684
    %vm758 = vcmp.eq.f32.partialorder %v757, 8.507059e+37
    %v759 = vand.u32 %v684, 2147483648
    %v760 = vor.u32 1.1754944e-38, %v759
    %v761 = vsel %vm758, %v760, %v756
    %v762 = vmul.f32 1.0, %v761
    %v763 = vrcp.pop %v685
    %v764 = vmul.f32 %v685, %v763
    %v765 = vsub.f32 1.0, %v764
    %v766 = vmul.f32 %v763, %v765
    %v767 = vadd.f32 %v763, %v766
    %vm768 = vweird.f32 %v685
    %vm769 = vweird.f32 %v763
    %vm770 = vmor %vm768, %vm769
    %v771 = vsel %vm770, %v763, %v767
    %v772 = vand.u32 2147483647, %v685
    %vm773 = vcmp.eq.f32.partialorder %v772, 8.507059e+37
    %v774 = vand.u32 %v685, 2147483648
    %v775 = vor.u32 1.1754944e-38, %v774
    %v776 = vsel %vm773, %v775, %v771
    %v777 = vmul.f32 1.0, %v776
    %v778 = vrcp.pop %v686
    %v779 = vmul.f32 %v686, %v778
    %v780 = vsub.f32 1.0, %v779
    %v781 = vmul.f32 %v778, %v780
    %v782 = vadd.f32 %v778, %v781
    %vm783 = vweird.f32 %v686
    %vm784 = vweird.f32 %v778
    %vm785 = vmor %vm783, %vm784
    %v786 = vsel %vm785, %v778, %v782
    %v787 = vand.u32 2147483647, %v686
    %vm788 = vcmp.eq.f32.partialorder %v787, 8.507059e+37
    %v789 = vand.u32 %v686, 2147483648
    %v790 = vor.u32 1.1754944e-38, %v789
    %v791 = vsel %vm788, %v790, %v786
    %v792 = vmul.f32 1.0, %v791
    %v793 = vrcp.pop %v687
    %v794 = vmul.f32 %v687, %v793
    %v795 = vsub.f32 1.0, %v794
    %v796 = vmul.f32 %v793, %v795
    %v797 = vadd.f32 %v793, %v796
    %vm798 = vweird.f32 %v687
    %vm799 = vweird.f32 %v793
    %vm800 = vmor %vm798, %vm799
    %v801 = vsel %vm800, %v793, %v797
    %v802 = vand.u32 2147483647, %v687
    %vm803 = vcmp.eq.f32.partialorder %v802, 8.507059e+37
    %v804 = vand.u32 %v687, 2147483648
    %v805 = vor.u32 1.1754944e-38, %v804
    %v806 = vsel %vm803, %v805, %v801
    %v807 = vmul.f32 1.0, %v806
    %v808 = vadd.f32 %v621, %v405
    %v810 = vrot.slane %v808, 1
    %v811 = vrot.slane %v808, 2
    %v812 = vrot.slane %v808, 3
    %v813 = vrot.slane %v808, 4
    %v814 = vrot.slane %v808, 5
    %v815 = vrot.slane %v808, 6
    %v816 = vrot.slane %v808, 7
    %817 = vrot.lane.b32.xlu0 %v808, 64
    %v818 = vpop.permute.xlu0 %817
    %819 = vrot.lane.b32.xlu0 %v810, 64
    %v820 = vpop.permute.xlu0 %819
    %821 = vrot.lane.b32.xlu0 %v811, 64
    %v822 = vpop.permute.xlu0 %821
    %823 = vrot.lane.b32.xlu0 %v812, 64
    %v824 = vpop.permute.xlu0 %823
    %825 = vrot.lane.b32.xlu0 %v813, 64
    %v826 = vpop.permute.xlu0 %825
    %827 = vrot.lane.b32.xlu0 %v814, 64
    %v828 = vpop.permute.xlu0 %827
    %829 = vrot.lane.b32.xlu0 %v815, 64
    %v830 = vpop.permute.xlu0 %829
    %831 = vrot.lane.b32.xlu0 %v816, 64
    %v832 = vpop.permute.xlu0 %831
    %v841 = vmul.f32 %v702, %v818
    %v842 = vmul.f32 %v717, %v820
    %v843 = vmul.f32 %v732, %v822
    %v844 = vmul.f32 %v747, %v824
    %v845 = vmul.f32 %v762, %v826
    %v846 = vmul.f32 %v777, %v828
    %v847 = vmul.f32 %v792, %v830
    %v848 = vmul.f32 %v807, %v832
    %857 = vrot.lane.b32.xlu0 %v841, 64
    %v858 = vpop.permute.xlu0 %857
    %859 = vrot.lane.b32.xlu0 %v842, 64
    %v860 = vpop.permute.xlu0 %859
    %861 = vrot.lane.b32.xlu0 %v843, 64
    %v862 = vpop.permute.xlu0 %861
    %863 = vrot.lane.b32.xlu0 %v844, 64
    %v864 = vpop.permute.xlu0 %863
    %865 = vrot.lane.b32.xlu0 %v845, 64
    %v866 = vpop.permute.xlu0 %865
    %867 = vrot.lane.b32.xlu0 %v846, 64
    %v868 = vpop.permute.xlu0 %867
    %869 = vrot.lane.b32.xlu0 %v847, 64
    %v870 = vpop.permute.xlu0 %869
    %871 = vrot.lane.b32.xlu0 %v848, 64
    %v872 = vpop.permute.xlu0 %871
    %v881 = vadd.f32 %v624, %v858
    %v882 = vadd.f32 %v625, %v860
    %v883 = vadd.f32 %v626, %v862
    %v884 = vadd.f32 %v627, %v864
    %v885 = vadd.f32 %v628, %v866
    %v886 = vadd.f32 %v629, %v868
    %v887 = vadd.f32 %v630, %v870
    %v888 = vadd.f32 %v631, %v872
    %v889 = vtanh.pop %v881
    %v890 = vtanh.pop %v882
    %v891 = vtanh.pop %v883
    %v892 = vtanh.pop %v884
    %v893 = vtanh.pop %v885
    %v894 = vtanh.pop %v886
    %v895 = vtanh.pop %v887
    %v896 = vtanh.pop %v888
    %v897 = vsub.f32 1.0, %v702
    %v898 = vsub.f32 1.0, %v717
    %v899 = vsub.f32 1.0, %v732
    %v900 = vsub.f32 1.0, %v747
    %v901 = vsub.f32 1.0, %v762
    %v902 = vsub.f32 1.0, %v777
    %v903 = vsub.f32 1.0, %v792
    %v904 = vsub.f32 1.0, %v807
    %913 = vrot.lane.b32.xlu0 %v889, 96
    %v914 = vpop.permute.xlu0 %913
    %915 = vrot.lane.b32.xlu0 %v890, 96
    %v916 = vpop.permute.xlu0 %915
    %917 = vrot.lane.b32.xlu0 %v891, 96
    %v918 = vpop.permute.xlu0 %917
    %919 = vrot.lane.b32.xlu0 %v892, 96
    %v920 = vpop.permute.xlu0 %919
    %921 = vrot.lane.b32.xlu0 %v893, 96
    %v922 = vpop.permute.xlu0 %921
    %923 = vrot.lane.b32.xlu0 %v894, 96
    %v924 = vpop.permute.xlu0 %923
    %925 = vrot.lane.b32.xlu0 %v895, 96
    %v926 = vpop.permute.xlu0 %925
    %927 = vrot.lane.b32.xlu0 %v896, 96
    %v928 = vpop.permute.xlu0 %927
    %v937 = vmul.f32 %v897, %v914
    %v938 = vmul.f32 %v898, %v916
    %v939 = vmul.f32 %v899, %v918
    %v940 = vmul.f32 %v900, %v920
    %v941 = vmul.f32 %v901, %v922
    %v942 = vmul.f32 %v902, %v924
    %v943 = vmul.f32 %v903, %v926
    %v944 = vmul.f32 %v904, %v928
    %v946 = vrot.slane %v606, 1
    %v947 = vrot.slane %v606, 2
    %v948 = vrot.slane %v606, 3
    %v949 = vrot.slane %v606, 4
    %v950 = vrot.slane %v606, 5
    %v951 = vrot.slane %v606, 6
    %v952 = vrot.slane %v606, 7
    %953 = vrot.lane.b32.xlu0 %v606, 32
    %v954 = vpop.permute.xlu0 %953
    %955 = vrot.lane.b32.xlu0 %v946, 32
    %v956 = vpop.permute.xlu0 %955
    %957 = vrot.lane.b32.xlu0 %v947, 32
    %v958 = vpop.permute.xlu0 %957
    %959 = vrot.lane.b32.xlu0 %v948, 32
    %v960 = vpop.permute.xlu0 %959
    %961 = vrot.lane.b32.xlu0 %v949, 32
    %v962 = vpop.permute.xlu0 %961
    %963 = vrot.lane.b32.xlu0 %v950, 32
    %v964 = vpop.permute.xlu0 %963
    %965 = vrot.lane.b32.xlu0 %v951, 32
    %v966 = vpop.permute.xlu0 %965
    %967 = vrot.lane.b32.xlu0 %v952, 32
    %v968 = vpop.permute.xlu0 %967
    %v977 = vmul.f32 %v702, %v954
    %v978 = vmul.f32 %v717, %v956
    %v979 = vmul.f32 %v732, %v958
    %v980 = vmul.f32 %v747, %v960
    %v981 = vmul.f32 %v762, %v962
    %v982 = vmul.f32 %v777, %v964
    %v983 = vmul.f32 %v792, %v966
    %v984 = vmul.f32 %v807, %v968
    %v985 = vadd.f32 %v937, %v977
    %v986 = vadd.f32 %v938, %v978
    %v987 = vadd.f32 %v939, %v979
    %v988 = vadd.f32 %v940, %v980
    %v989 = vadd.f32 %v941, %v981
    %v990 = vadd.f32 %v942, %v982
    %v991 = vadd.f32 %v943, %v983
    %v992 = vadd.f32 %v944, %v984
    %993 = vset.pattern.permute.xlu0 1
    %994 = vperm.xlu0 %993, %v560
    %v995 = vpop.permute.xlu0 %994
    %v1005 = vrot.slane %v986, 7
    %v1006 = vsel %vm575, %v1005, %v985
    %v1007 = vrot.slane %v987, 6
    %v1008 = vsel %vm578, %v1007, %v1006
    %v1009 = vrot.slane %v988, 5
    %v1010 = vsel %vm581, %v1009, %v1008
    %v1011 = vrot.slane %v989, 4
    %v1012 = vsel %vm584, %v1011, %v1010
    %v1013 = vrot.slane %v990, 3
    %v1014 = vsel %vm587, %v1013, %v1012
    %v1015 = vrot.slane %v991, 2
    %v1016 = vsel %vm590, %v1015, %v1014
    %v1017 = vrot.slane %v992, 1
    %v1018 = vsel %vm593, %v1017, %v1016
    %1019 = vrot.lane.b32.xlu0 %v1018, 96
    %v1020 = vpop.permute.xlu0 %1019
    %v1022 = vmul.f32 %v995, %v1020
    %1023 = vset.pattern.permute.xlu0 1
    %1024 = vperm.xlu0 %1023, %v599
    %v1025 = vpop.permute.xlu0 %1024
    %v1027 = vmul.f32 %v1025, %v606
    %v1028 = vadd.f32 %v1022, %v1027
    %v1029 = vpack.c.bf16 %v1028, %v1028
    %v1031 = vsel %vm134, %v1029, 0
    %1033 = vmatpush.bf16.msra.mxu0 0
    %1034 = vmatpush.bf16.msra.mxu0 0
    %1035 = vmatpush.bf16.msra.mxu0 0
    %1036 = vmatpush.bf16.msra.mxu0 0
    %1037 = vmatpush.bf16.msra.mxu0 0
    %1038 = vmatpush.bf16.msra.mxu0 0
    %1039 = vmatpush.bf16.msra.mxu0 %v201
    %1040 = vmatpush.bf16.msra.mxu0 %v200
    %1041 = vmatmul.bf16.gmra.mxu0 %v1031
    %v1042 = vpop.f32.mrf.mxu0
    %v1043 = vadd.f32 0.0, %v1042
    %v1044 = vpop.f32.mrf.mxu0
    %1045 = vdwg.mxu0
    %v1046 = vld [vmem:[#allocation2 + $0x2] sm:$0x1]
    %v1047 = vld [vmem:[#allocation2 + $0xa] sm:$0x1]
    %v1048 = vld [vmem:[#allocation2 + $0x12] sm:$0x1]
    %v1049 = vld [vmem:[#allocation2 + $0x1a] sm:$0x1]
    %v1050 = vld [vmem:[#allocation2 + $0x22] sm:$0x1]
    %v1051 = vld [vmem:[#allocation2 + $0x2a] sm:$0x1]
    %v1052 = vld [vmem:[#allocation2 + $0x32] sm:$0x1]
    %v1053 = vld [vmem:[#allocation2 + $0x3a] sm:$0x1]
    %v1055 = vrot.slane %v1043, 1
    %v1056 = vrot.slane %v1043, 2
    %v1057 = vrot.slane %v1043, 3
    %v1058 = vrot.slane %v1043, 4
    %v1059 = vrot.slane %v1043, 5
    %v1060 = vrot.slane %v1043, 6
    %v1061 = vrot.slane %v1043, 7
    %v1070 = vadd.f32 %v1046, %v1043
    %v1071 = vadd.f32 %v1047, %v1055
    %v1072 = vadd.f32 %v1048, %v1056
    %v1073 = vadd.f32 %v1049, %v1057
    %v1074 = vadd.f32 %v1050, %v1058
    %v1075 = vadd.f32 %v1051, %v1059
    %v1076 = vadd.f32 %v1052, %v1060
    %v1077 = vadd.f32 %v1053, %v1061
    %v1078 = vxor.u32 %v1070, 2147483648
    %v1079 = vxor.u32 %v1071, 2147483648
    %v1080 = vxor.u32 %v1072, 2147483648
    %v1081 = vxor.u32 %v1073, 2147483648
    %v1082 = vxor.u32 %v1074, 2147483648
    %v1083 = vxor.u32 %v1075, 2147483648
    %v1084 = vxor.u32 %v1076, 2147483648
    %v1085 = vxor.u32 %v1077, 2147483648
    %v1086 = vmul.f32 %v1078, 1.442695
    %v1087 = vpow.pop %v1086
    %v1088 = vmul.f32 %v1079, 1.442695
    %v1089 = vpow.pop %v1088
    %v1090 = vmul.f32 %v1080, 1.442695
    %v1091 = vpow.pop %v1090
    %v1092 = vmul.f32 %v1081, 1.442695
    %v1093 = vpow.pop %v1092
    %v1094 = vmul.f32 %v1082, 1.442695
    %v1095 = vpow.pop %v1094
    %v1096 = vmul.f32 %v1083, 1.442695
    %v1097 = vpow.pop %v1096
    %v1098 = vmul.f32 %v1084, 1.442695
    %v1099 = vpow.pop %v1098
    %v1100 = vmul.f32 %v1085, 1.442695
    %v1101 = vpow.pop %v1100
    %v1102 = vadd.f32 %v1087, 1.0
    %v1103 = vadd.f32 %v1089, 1.0
    %v1104 = vadd.f32 %v1091, 1.0
    %v1105 = vadd.f32 %v1093, 1.0
    %v1106 = vadd.f32 %v1095, 1.0
    %v1107 = vadd.f32 %v1097, 1.0
    %v1108 = vadd.f32 %v1099, 1.0
    %v1109 = vadd.f32 %v1101, 1.0
    %v1110 = vrcp.pop %v1102
    %v1111 = vmul.f32 %v1102, %v1110
    %v1112 = vsub.f32 1.0, %v1111
    %v1113 = vmul.f32 %v1110, %v1112
    %v1114 = vadd.f32 %v1110, %v1113
    %vm1115 = vweird.f32 %v1102
    %vm1116 = vweird.f32 %v1110
    %vm1117 = vmor %vm1115, %vm1116
    %v1118 = vsel %vm1117, %v1110, %v1114
    %v1119 = vand.u32 2147483647, %v1102
    %vm1120 = vcmp.eq.f32.partialorder %v1119, 8.507059e+37
    %v1121 = vand.u32 %v1102, 2147483648
    %v1122 = vor.u32 1.1754944e-38, %v1121
    %v1123 = vsel %vm1120, %v1122, %v1118
    %v1124 = vmul.f32 1.0, %v1123
    %v1125 = vrcp.pop %v1103
    %v1126 = vmul.f32 %v1103, %v1125
    %v1127 = vsub.f32 1.0, %v1126
    %v1128 = vmul.f32 %v1125, %v1127
    %v1129 = vadd.f32 %v1125, %v1128
    %vm1130 = vweird.f32 %v1103
    %vm1131 = vweird.f32 %v1125
    %vm1132 = vmor %vm1130, %vm1131
    %v1133 = vsel %vm1132, %v1125, %v1129
    %v1134 = vand.u32 2147483647, %v1103
    %vm1135 = vcmp.eq.f32.partialorder %v1134, 8.507059e+37
    %v1136 = vand.u32 %v1103, 2147483648
    %v1137 = vor.u32 1.1754944e-38, %v1136
    %v1138 = vsel %vm1135, %v1137, %v1133
    %v1139 = vmul.f32 1.0, %v1138
    %v1140 = vrcp.pop %v1104
    %v1141 = vmul.f32 %v1104, %v1140
    %v1142 = vsub.f32 1.0, %v1141
    %v1143 = vmul.f32 %v1140, %v1142
    %v1144 = vadd.f32 %v1140, %v1143
    %vm1145 = vweird.f32 %v1104
    %vm1146 = vweird.f32 %v1140
    %vm1147 = vmor %vm1145, %vm1146
    %v1148 = vsel %vm1147, %v1140, %v1144
    %v1149 = vand.u32 2147483647, %v1104
    %vm1150 = vcmp.eq.f32.partialorder %v1149, 8.507059e+37
    %v1151 = vand.u32 %v1104, 2147483648
    %v1152 = vor.u32 1.1754944e-38, %v1151
    %v1153 = vsel %vm1150, %v1152, %v1148
    %v1154 = vmul.f32 1.0, %v1153
    %v1155 = vrcp.pop %v1105
    %v1156 = vmul.f32 %v1105, %v1155
    %v1157 = vsub.f32 1.0, %v1156
    %v1158 = vmul.f32 %v1155, %v1157
    %v1159 = vadd.f32 %v1155, %v1158
    %vm1160 = vweird.f32 %v1105
    %vm1161 = vweird.f32 %v1155
    %vm1162 = vmor %vm1160, %vm1161
    %v1163 = vsel %vm1162, %v1155, %v1159
    %v1164 = vand.u32 2147483647, %v1105
    %vm1165 = vcmp.eq.f32.partialorder %v1164, 8.507059e+37
    %v1166 = vand.u32 %v1105, 2147483648
    %v1167 = vor.u32 1.1754944e-38, %v1166
    %v1168 = vsel %vm1165, %v1167, %v1163
    %v1169 = vmul.f32 1.0, %v1168
    %v1170 = vrcp.pop %v1106
    %v1171 = vmul.f32 %v1106, %v1170
    %v1172 = vsub.f32 1.0, %v1171
    %v1173 = vmul.f32 %v1170, %v1172
    %v1174 = vadd.f32 %v1170, %v1173
    %vm1175 = vweird.f32 %v1106
    %vm1176 = vweird.f32 %v1170
    %vm1177 = vmor %vm1175, %vm1176
    %v1178 = vsel %vm1177, %v1170, %v1174
    %v1179 = vand.u32 2147483647, %v1106
    %vm1180 = vcmp.eq.f32.partialorder %v1179, 8.507059e+37
    %v1181 = vand.u32 %v1106, 2147483648
    %v1182 = vor.u32 1.1754944e-38, %v1181
    %v1183 = vsel %vm1180, %v1182, %v1178
    %v1184 = vmul.f32 1.0, %v1183
    %v1185 = vrcp.pop %v1107
    %v1186 = vmul.f32 %v1107, %v1185
    %v1187 = vsub.f32 1.0, %v1186
    %v1188 = vmul.f32 %v1185, %v1187
    %v1189 = vadd.f32 %v1185, %v1188
    %vm1190 = vweird.f32 %v1107
    %vm1191 = vweird.f32 %v1185
    %vm1192 = vmor %vm1190, %vm1191
    %v1193 = vsel %vm1192, %v1185, %v1189
    %v1194 = vand.u32 2147483647, %v1107
    %vm1195 = vcmp.eq.f32.partialorder %v1194, 8.507059e+37
    %v1196 = vand.u32 %v1107, 2147483648
    %v1197 = vor.u32 1.1754944e-38, %v1196
    %v1198 = vsel %vm1195, %v1197, %v1193
    %v1199 = vmul.f32 1.0, %v1198
    %v1200 = vrcp.pop %v1108
    %v1201 = vmul.f32 %v1108, %v1200
    %v1202 = vsub.f32 1.0, %v1201
    %v1203 = vmul.f32 %v1200, %v1202
    %v1204 = vadd.f32 %v1200, %v1203
    %vm1205 = vweird.f32 %v1108
    %vm1206 = vweird.f32 %v1200
    %vm1207 = vmor %vm1205, %vm1206
    %v1208 = vsel %vm1207, %v1200, %v1204
    %v1209 = vand.u32 2147483647, %v1108
    %vm1210 = vcmp.eq.f32.partialorder %v1209, 8.507059e+37
    %v1211 = vand.u32 %v1108, 2147483648
    %v1212 = vor.u32 1.1754944e-38, %v1211
    %v1213 = vsel %vm1210, %v1212, %v1208
    %v1214 = vmul.f32 1.0, %v1213
    %v1215 = vrcp.pop %v1109
    %v1216 = vmul.f32 %v1109, %v1215
    %v1217 = vsub.f32 1.0, %v1216
    %v1218 = vmul.f32 %v1215, %v1217
    %v1219 = vadd.f32 %v1215, %v1218
    %vm1220 = vweird.f32 %v1109
    %vm1221 = vweird.f32 %v1215
    %vm1222 = vmor %vm1220, %vm1221
    %v1223 = vsel %vm1222, %v1215, %v1219
    %v1224 = vand.u32 2147483647, %v1109
    %vm1225 = vcmp.eq.f32.partialorder %v1224, 8.507059e+37
    %v1226 = vand.u32 %v1109, 2147483648
    %v1227 = vor.u32 1.1754944e-38, %v1226
    %v1228 = vsel %vm1225, %v1227, %v1223
    %v1229 = vmul.f32 1.0, %v1228
    %v1230 = vadd.f32 %v1043, %v405
    %v1232 = vrot.slane %v1230, 1
    %v1233 = vrot.slane %v1230, 2
    %v1234 = vrot.slane %v1230, 3
    %v1235 = vrot.slane %v1230, 4
    %v1236 = vrot.slane %v1230, 5
    %v1237 = vrot.slane %v1230, 6
    %v1238 = vrot.slane %v1230, 7
    %1239 = vrot.lane.b32.xlu0 %v1230, 64
    %v1240 = vpop.permute.xlu0 %1239
    %1241 = vrot.lane.b32.xlu0 %v1232, 64
    %v1242 = vpop.permute.xlu0 %1241
    %1243 = vrot.lane.b32.xlu0 %v1233, 64
    %v1244 = vpop.permute.xlu0 %1243
    %1245 = vrot.lane.b32.xlu0 %v1234, 64
    %v1246 = vpop.permute.xlu0 %1245
    %1247 = vrot.lane.b32.xlu0 %v1235, 64
    %v1248 = vpop.permute.xlu0 %1247
    %1249 = vrot.lane.b32.xlu0 %v1236, 64
    %v1250 = vpop.permute.xlu0 %1249
    %1251 = vrot.lane.b32.xlu0 %v1237, 64
    %v1252 = vpop.permute.xlu0 %1251
    %1253 = vrot.lane.b32.xlu0 %v1238, 64
    %v1254 = vpop.permute.xlu0 %1253
    %v1263 = vmul.f32 %v1124, %v1240
    %v1264 = vmul.f32 %v1139, %v1242
    %v1265 = vmul.f32 %v1154, %v1244
    %v1266 = vmul.f32 %v1169, %v1246
    %v1267 = vmul.f32 %v1184, %v1248
    %v1268 = vmul.f32 %v1199, %v1250
    %v1269 = vmul.f32 %v1214, %v1252
    %v1270 = vmul.f32 %v1229, %v1254
    %1279 = vrot.lane.b32.xlu0 %v1263, 64
    %v1280 = vpop.permute.xlu0 %1279
    %1281 = vrot.lane.b32.xlu0 %v1264, 64
    %v1282 = vpop.permute.xlu0 %1281
    %1283 = vrot.lane.b32.xlu0 %v1265, 64
    %v1284 = vpop.permute.xlu0 %1283
    %1285 = vrot.lane.b32.xlu0 %v1266, 64
    %v1286 = vpop.permute.xlu0 %1285
    %1287 = vrot.lane.b32.xlu0 %v1267, 64
    %v1288 = vpop.permute.xlu0 %1287
    %1289 = vrot.lane.b32.xlu0 %v1268, 64
    %v1290 = vpop.permute.xlu0 %1289
    %1291 = vrot.lane.b32.xlu0 %v1269, 64
    %v1292 = vpop.permute.xlu0 %1291
    %1293 = vrot.lane.b32.xlu0 %v1270, 64
    %v1294 = vpop.permute.xlu0 %1293
    %v1303 = vadd.f32 %v1046, %v1280
    %v1304 = vadd.f32 %v1047, %v1282
    %v1305 = vadd.f32 %v1048, %v1284
    %v1306 = vadd.f32 %v1049, %v1286
    %v1307 = vadd.f32 %v1050, %v1288
    %v1308 = vadd.f32 %v1051, %v1290
    %v1309 = vadd.f32 %v1052, %v1292
    %v1310 = vadd.f32 %v1053, %v1294
    %v1311 = vtanh.pop %v1303
    %v1312 = vtanh.pop %v1304
    %v1313 = vtanh.pop %v1305
    %v1314 = vtanh.pop %v1306
    %v1315 = vtanh.pop %v1307
    %v1316 = vtanh.pop %v1308
    %v1317 = vtanh.pop %v1309
    %v1318 = vtanh.pop %v1310
    %v1319 = vsub.f32 1.0, %v1124
    %v1320 = vsub.f32 1.0, %v1139
    %v1321 = vsub.f32 1.0, %v1154
    %v1322 = vsub.f32 1.0, %v1169
    %v1323 = vsub.f32 1.0, %v1184
    %v1324 = vsub.f32 1.0, %v1199
    %v1325 = vsub.f32 1.0, %v1214
    %v1326 = vsub.f32 1.0, %v1229
    %1335 = vrot.lane.b32.xlu0 %v1311, 96
    %v1336 = vpop.permute.xlu0 %1335
    %1337 = vrot.lane.b32.xlu0 %v1312, 96
    %v1338 = vpop.permute.xlu0 %1337
    %1339 = vrot.lane.b32.xlu0 %v1313, 96
    %v1340 = vpop.permute.xlu0 %1339
    %1341 = vrot.lane.b32.xlu0 %v1314, 96
    %v1342 = vpop.permute.xlu0 %1341
    %1343 = vrot.lane.b32.xlu0 %v1315, 96
    %v1344 = vpop.permute.xlu0 %1343
    %1345 = vrot.lane.b32.xlu0 %v1316, 96
    %v1346 = vpop.permute.xlu0 %1345
    %1347 = vrot.lane.b32.xlu0 %v1317, 96
    %v1348 = vpop.permute.xlu0 %1347
    %1349 = vrot.lane.b32.xlu0 %v1318, 96
    %v1350 = vpop.permute.xlu0 %1349
    %v1359 = vmul.f32 %v1319, %v1336
    %v1360 = vmul.f32 %v1320, %v1338
    %v1361 = vmul.f32 %v1321, %v1340
    %v1362 = vmul.f32 %v1322, %v1342
    %v1363 = vmul.f32 %v1323, %v1344
    %v1364 = vmul.f32 %v1324, %v1346
    %v1365 = vmul.f32 %v1325, %v1348
    %v1366 = vmul.f32 %v1326, %v1350
    %v1368 = vrot.slane %v1028, 1
    %v1369 = vrot.slane %v1028, 2
    %v1370 = vrot.slane %v1028, 3
    %v1371 = vrot.slane %v1028, 4
    %v1372 = vrot.slane %v1028, 5
    %v1373 = vrot.slane %v1028, 6
    %v1374 = vrot.slane %v1028, 7
    %1375 = vrot.lane.b32.xlu0 %v1028, 32
    %v1376 = vpop.permute.xlu0 %1375
    %1377 = vrot.lane.b32.xlu0 %v1368, 32
    %v1378 = vpop.permute.xlu0 %1377
    %1379 = vrot.lane.b32.xlu0 %v1369, 32
    %v1380 = vpop.permute.xlu0 %1379
    %1381 = vrot.lane.b32.xlu0 %v1370, 32
    %v1382 = vpop.permute.xlu0 %1381
    %1383 = vrot.lane.b32.xlu0 %v1371, 32
    %v1384 = vpop.permute.xlu0 %1383
    %1385 = vrot.lane.b32.xlu0 %v1372, 32
    %v1386 = vpop.permute.xlu0 %1385
    %1387 = vrot.lane.b32.xlu0 %v1373, 32
    %v1388 = vpop.permute.xlu0 %1387
    %1389 = vrot.lane.b32.xlu0 %v1374, 32
    %v1390 = vpop.permute.xlu0 %1389
    %v1399 = vmul.f32 %v1124, %v1376
    %v1400 = vmul.f32 %v1139, %v1378
    %v1401 = vmul.f32 %v1154, %v1380
    %v1402 = vmul.f32 %v1169, %v1382
    %v1403 = vmul.f32 %v1184, %v1384
    %v1404 = vmul.f32 %v1199, %v1386
    %v1405 = vmul.f32 %v1214, %v1388
    %v1406 = vmul.f32 %v1229, %v1390
    %v1407 = vadd.f32 %v1359, %v1399
    %v1408 = vadd.f32 %v1360, %v1400
    %v1409 = vadd.f32 %v1361, %v1401
    %v1410 = vadd.f32 %v1362, %v1402
    %v1411 = vadd.f32 %v1363, %v1403
    %v1412 = vadd.f32 %v1364, %v1404
    %v1413 = vadd.f32 %v1365, %v1405
    %v1414 = vadd.f32 %v1366, %v1406
    %1415 = vset.pattern.permute.xlu0 2
    %1416 = vperm.xlu0 %1415, %v560
    %v1417 = vpop.permute.xlu0 %1416
    %v1427 = vrot.slane %v1408, 7
    %v1428 = vsel %vm575, %v1427, %v1407
    %v1429 = vrot.slane %v1409, 6
    %v1430 = vsel %vm578, %v1429, %v1428
    %v1431 = vrot.slane %v1410, 5
    %v1432 = vsel %vm581, %v1431, %v1430
    %v1433 = vrot.slane %v1411, 4
    %v1434 = vsel %vm584, %v1433, %v1432
    %v1435 = vrot.slane %v1412, 3
    %v1436 = vsel %vm587, %v1435, %v1434
    %v1437 = vrot.slane %v1413, 2
    %v1438 = vsel %vm590, %v1437, %v1436
    %v1439 = vrot.slane %v1414, 1
    %v1440 = vsel %vm593, %v1439, %v1438
    %1441 = vrot.lane.b32.xlu0 %v1440, 96
    %v1442 = vpop.permute.xlu0 %1441
    %v1444 = vmul.f32 %v1417, %v1442
    %1445 = vset.pattern.permute.xlu0 2
    %1446 = vperm.xlu0 %1445, %v599
    %v1447 = vpop.permute.xlu0 %1446
    %v1449 = vmul.f32 %v1447, %v1028
    %v1450 = vadd.f32 %v1444, %v1449
    %v1451 = vpack.c.bf16 %v1450, %v1450
    %v1453 = vsel %vm134, %v1451, 0
    %1455 = vmatpush.bf16.msra.mxu0 0
    %1456 = vmatpush.bf16.msra.mxu0 0
    %1457 = vmatpush.bf16.msra.mxu0 0
    %1458 = vmatpush.bf16.msra.mxu0 0
    %1459 = vmatpush.bf16.msra.mxu0 0
    %1460 = vmatpush.bf16.msra.mxu0 0
    %1461 = vmatpush.bf16.msra.mxu0 %v201
    %1462 = vmatpush.bf16.msra.mxu0 %v200
    %1463 = vmatmul.bf16.gmra.mxu0 %v1453
    %v1464 = vpop.f32.mrf.mxu0
    %v1465 = vadd.f32 0.0, %v1464
    %v1466 = vpop.f32.mrf.mxu0
    %1467 = vdwg.mxu0
    %v1468 = vld [vmem:[#allocation2 + $0x3] sm:$0x1]
    %v1469 = vld [vmem:[#allocation2 + $0xb] sm:$0x1]
    %v1470 = vld [vmem:[#allocation2 + $0x13] sm:$0x1]
    %v1471 = vld [vmem:[#allocation2 + $0x1b] sm:$0x1]
    %v1472 = vld [vmem:[#allocation2 + $0x23] sm:$0x1]
    %v1473 = vld [vmem:[#allocation2 + $0x2b] sm:$0x1]
    %v1474 = vld [vmem:[#allocation2 + $0x33] sm:$0x1]
    %v1475 = vld [vmem:[#allocation2 + $0x3b] sm:$0x1]
    %v1477 = vrot.slane %v1465, 1
    %v1478 = vrot.slane %v1465, 2
    %v1479 = vrot.slane %v1465, 3
    %v1480 = vrot.slane %v1465, 4
    %v1481 = vrot.slane %v1465, 5
    %v1482 = vrot.slane %v1465, 6
    %v1483 = vrot.slane %v1465, 7
    %v1492 = vadd.f32 %v1468, %v1465
    %v1493 = vadd.f32 %v1469, %v1477
    %v1494 = vadd.f32 %v1470, %v1478
    %v1495 = vadd.f32 %v1471, %v1479
    %v1496 = vadd.f32 %v1472, %v1480
    %v1497 = vadd.f32 %v1473, %v1481
    %v1498 = vadd.f32 %v1474, %v1482
    %v1499 = vadd.f32 %v1475, %v1483
    %v1500 = vxor.u32 %v1492, 2147483648
    %v1501 = vxor.u32 %v1493, 2147483648
    %v1502 = vxor.u32 %v1494, 2147483648
    %v1503 = vxor.u32 %v1495, 2147483648
    %v1504 = vxor.u32 %v1496, 2147483648
    %v1505 = vxor.u32 %v1497, 2147483648
    %v1506 = vxor.u32 %v1498, 2147483648
    %v1507 = vxor.u32 %v1499, 2147483648
    %v1508 = vmul.f32 %v1500, 1.442695
    %v1509 = vpow.pop %v1508
    %v1510 = vmul.f32 %v1501, 1.442695
    %v1511 = vpow.pop %v1510
    %v1512 = vmul.f32 %v1502, 1.442695
    %v1513 = vpow.pop %v1512
    %v1514 = vmul.f32 %v1503, 1.442695
    %v1515 = vpow.pop %v1514
    %v1516 = vmul.f32 %v1504, 1.442695
    %v1517 = vpow.pop %v1516
    %v1518 = vmul.f32 %v1505, 1.442695
    %v1519 = vpow.pop %v1518
    %v1520 = vmul.f32 %v1506, 1.442695
    %v1521 = vpow.pop %v1520
    %v1522 = vmul.f32 %v1507, 1.442695
    %v1523 = vpow.pop %v1522
    %v1524 = vadd.f32 %v1509, 1.0
    %v1525 = vadd.f32 %v1511, 1.0
    %v1526 = vadd.f32 %v1513, 1.0
    %v1527 = vadd.f32 %v1515, 1.0
    %v1528 = vadd.f32 %v1517, 1.0
    %v1529 = vadd.f32 %v1519, 1.0
    %v1530 = vadd.f32 %v1521, 1.0
    %v1531 = vadd.f32 %v1523, 1.0
    %v1532 = vrcp.pop %v1524
    %v1533 = vmul.f32 %v1524, %v1532
    %v1534 = vsub.f32 1.0, %v1533
    %v1535 = vmul.f32 %v1532, %v1534
    %v1536 = vadd.f32 %v1532, %v1535
    %vm1537 = vweird.f32 %v1524
    %vm1538 = vweird.f32 %v1532
    %vm1539 = vmor %vm1537, %vm1538
    %v1540 = vsel %vm1539, %v1532, %v1536
    %v1541 = vand.u32 2147483647, %v1524
    %vm1542 = vcmp.eq.f32.partialorder %v1541, 8.507059e+37
    %v1543 = vand.u32 %v1524, 2147483648
    %v1544 = vor.u32 1.1754944e-38, %v1543
    %v1545 = vsel %vm1542, %v1544, %v1540
    %v1546 = vmul.f32 1.0, %v1545
    %v1547 = vrcp.pop %v1525
    %v1548 = vmul.f32 %v1525, %v1547
    %v1549 = vsub.f32 1.0, %v1548
    %v1550 = vmul.f32 %v1547, %v1549
    %v1551 = vadd.f32 %v1547, %v1550
    %vm1552 = vweird.f32 %v1525
    %vm1553 = vweird.f32 %v1547
    %vm1554 = vmor %vm1552, %vm1553
    %v1555 = vsel %vm1554, %v1547, %v1551
    %v1556 = vand.u32 2147483647, %v1525
    %vm1557 = vcmp.eq.f32.partialorder %v1556, 8.507059e+37
    %v1558 = vand.u32 %v1525, 2147483648
    %v1559 = vor.u32 1.1754944e-38, %v1558
    %v1560 = vsel %vm1557, %v1559, %v1555
    %v1561 = vmul.f32 1.0, %v1560
    %v1562 = vrcp.pop %v1526
    %v1563 = vmul.f32 %v1526, %v1562
    %v1564 = vsub.f32 1.0, %v1563
    %v1565 = vmul.f32 %v1562, %v1564
    %v1566 = vadd.f32 %v1562, %v1565
    %vm1567 = vweird.f32 %v1526
    %vm1568 = vweird.f32 %v1562
    %vm1569 = vmor %vm1567, %vm1568
    %v1570 = vsel %vm1569, %v1562, %v1566
    %v1571 = vand.u32 2147483647, %v1526
    %vm1572 = vcmp.eq.f32.partialorder %v1571, 8.507059e+37
    %v1573 = vand.u32 %v1526, 2147483648
    %v1574 = vor.u32 1.1754944e-38, %v1573
    %v1575 = vsel %vm1572, %v1574, %v1570
    %v1576 = vmul.f32 1.0, %v1575
    %v1577 = vrcp.pop %v1527
    %v1578 = vmul.f32 %v1527, %v1577
    %v1579 = vsub.f32 1.0, %v1578
    %v1580 = vmul.f32 %v1577, %v1579
    %v1581 = vadd.f32 %v1577, %v1580
    %vm1582 = vweird.f32 %v1527
    %vm1583 = vweird.f32 %v1577
    %vm1584 = vmor %vm1582, %vm1583
    %v1585 = vsel %vm1584, %v1577, %v1581
    %v1586 = vand.u32 2147483647, %v1527
    %vm1587 = vcmp.eq.f32.partialorder %v1586, 8.507059e+37
    %v1588 = vand.u32 %v1527, 2147483648
    %v1589 = vor.u32 1.1754944e-38, %v1588
    %v1590 = vsel %vm1587, %v1589, %v1585
    %v1591 = vmul.f32 1.0, %v1590
    %v1592 = vrcp.pop %v1528
    %v1593 = vmul.f32 %v1528, %v1592
    %v1594 = vsub.f32 1.0, %v1593
    %v1595 = vmul.f32 %v1592, %v1594
    %v1596 = vadd.f32 %v1592, %v1595
    %vm1597 = vweird.f32 %v1528
    %vm1598 = vweird.f32 %v1592
    %vm1599 = vmor %vm1597, %vm1598
    %v1600 = vsel %vm1599, %v1592, %v1596
    %v1601 = vand.u32 2147483647, %v1528
    %vm1602 = vcmp.eq.f32.partialorder %v1601, 8.507059e+37
    %v1603 = vand.u32 %v1528, 2147483648
    %v1604 = vor.u32 1.1754944e-38, %v1603
    %v1605 = vsel %vm1602, %v1604, %v1600
    %v1606 = vmul.f32 1.0, %v1605
    %v1607 = vrcp.pop %v1529
    %v1608 = vmul.f32 %v1529, %v1607
    %v1609 = vsub.f32 1.0, %v1608
    %v1610 = vmul.f32 %v1607, %v1609
    %v1611 = vadd.f32 %v1607, %v1610
    %vm1612 = vweird.f32 %v1529
    %vm1613 = vweird.f32 %v1607
    %vm1614 = vmor %vm1612, %vm1613
    %v1615 = vsel %vm1614, %v1607, %v1611
    %v1616 = vand.u32 2147483647, %v1529
    %vm1617 = vcmp.eq.f32.partialorder %v1616, 8.507059e+37
    %v1618 = vand.u32 %v1529, 2147483648
    %v1619 = vor.u32 1.1754944e-38, %v1618
    %v1620 = vsel %vm1617, %v1619, %v1615
    %v1621 = vmul.f32 1.0, %v1620
    %v1622 = vrcp.pop %v1530
    %v1623 = vmul.f32 %v1530, %v1622
    %v1624 = vsub.f32 1.0, %v1623
    %v1625 = vmul.f32 %v1622, %v1624
    %v1626 = vadd.f32 %v1622, %v1625
    %vm1627 = vweird.f32 %v1530
    %vm1628 = vweird.f32 %v1622
    %vm1629 = vmor %vm1627, %vm1628
    %v1630 = vsel %vm1629, %v1622, %v1626
    %v1631 = vand.u32 2147483647, %v1530
    %vm1632 = vcmp.eq.f32.partialorder %v1631, 8.507059e+37
    %v1633 = vand.u32 %v1530, 2147483648
    %v1634 = vor.u32 1.1754944e-38, %v1633
    %v1635 = vsel %vm1632, %v1634, %v1630
    %v1636 = vmul.f32 1.0, %v1635
    %v1637 = vrcp.pop %v1531
    %v1638 = vmul.f32 %v1531, %v1637
    %v1639 = vsub.f32 1.0, %v1638
    %v1640 = vmul.f32 %v1637, %v1639
    %v1641 = vadd.f32 %v1637, %v1640
    %vm1642 = vweird.f32 %v1531
    %vm1643 = vweird.f32 %v1637
    %vm1644 = vmor %vm1642, %vm1643
    %v1645 = vsel %vm1644, %v1637, %v1641
    %v1646 = vand.u32 2147483647, %v1531
    %vm1647 = vcmp.eq.f32.partialorder %v1646, 8.507059e+37
    %v1648 = vand.u32 %v1531, 2147483648
    %v1649 = vor.u32 1.1754944e-38, %v1648
    %v1650 = vsel %vm1647, %v1649, %v1645
    %v1651 = vmul.f32 1.0, %v1650
    %v1652 = vadd.f32 %v1465, %v405
    %v1654 = vrot.slane %v1652, 1
    %v1655 = vrot.slane %v1652, 2
    %v1656 = vrot.slane %v1652, 3
    %v1657 = vrot.slane %v1652, 4
    %v1658 = vrot.slane %v1652, 5
    %v1659 = vrot.slane %v1652, 6
    %v1660 = vrot.slane %v1652, 7
    %1661 = vrot.lane.b32.xlu0 %v1652, 64
    %v1662 = vpop.permute.xlu0 %1661
    %1663 = vrot.lane.b32.xlu0 %v1654, 64
    %v1664 = vpop.permute.xlu0 %1663
    %1665 = vrot.lane.b32.xlu0 %v1655, 64
    %v1666 = vpop.permute.xlu0 %1665
    %1667 = vrot.lane.b32.xlu0 %v1656, 64
    %v1668 = vpop.permute.xlu0 %1667
    %1669 = vrot.lane.b32.xlu0 %v1657, 64
    %v1670 = vpop.permute.xlu0 %1669
    %1671 = vrot.lane.b32.xlu0 %v1658, 64
    %v1672 = vpop.permute.xlu0 %1671
    %1673 = vrot.lane.b32.xlu0 %v1659, 64
    %v1674 = vpop.permute.xlu0 %1673
    %1675 = vrot.lane.b32.xlu0 %v1660, 64
    %v1676 = vpop.permute.xlu0 %1675
    %v1685 = vmul.f32 %v1546, %v1662
    %v1686 = vmul.f32 %v1561, %v1664
    %v1687 = vmul.f32 %v1576, %v1666
    %v1688 = vmul.f32 %v1591, %v1668
    %v1689 = vmul.f32 %v1606, %v1670
    %v1690 = vmul.f32 %v1621, %v1672
    %v1691 = vmul.f32 %v1636, %v1674
    %v1692 = vmul.f32 %v1651, %v1676
    %1701 = vrot.lane.b32.xlu0 %v1685, 64
    %v1702 = vpop.permute.xlu0 %1701
    %1703 = vrot.lane.b32.xlu0 %v1686, 64
    %v1704 = vpop.permute.xlu0 %1703
    %1705 = vrot.lane.b32.xlu0 %v1687, 64
    %v1706 = vpop.permute.xlu0 %1705
    %1707 = vrot.lane.b32.xlu0 %v1688, 64
    %v1708 = vpop.permute.xlu0 %1707
    %1709 = vrot.lane.b32.xlu0 %v1689, 64
    %v1710 = vpop.permute.xlu0 %1709
    %1711 = vrot.lane.b32.xlu0 %v1690, 64
    %v1712 = vpop.permute.xlu0 %1711
    %1713 = vrot.lane.b32.xlu0 %v1691, 64
    %v1714 = vpop.permute.xlu0 %1713
    %1715 = vrot.lane.b32.xlu0 %v1692, 64
    %v1716 = vpop.permute.xlu0 %1715
    %v1725 = vadd.f32 %v1468, %v1702
    %v1726 = vadd.f32 %v1469, %v1704
    %v1727 = vadd.f32 %v1470, %v1706
    %v1728 = vadd.f32 %v1471, %v1708
    %v1729 = vadd.f32 %v1472, %v1710
    %v1730 = vadd.f32 %v1473, %v1712
    %v1731 = vadd.f32 %v1474, %v1714
    %v1732 = vadd.f32 %v1475, %v1716
    %v1733 = vtanh.pop %v1725
    %v1734 = vtanh.pop %v1726
    %v1735 = vtanh.pop %v1727
    %v1736 = vtanh.pop %v1728
    %v1737 = vtanh.pop %v1729
    %v1738 = vtanh.pop %v1730
    %v1739 = vtanh.pop %v1731
    %v1740 = vtanh.pop %v1732
    %v1741 = vsub.f32 1.0, %v1546
    %v1742 = vsub.f32 1.0, %v1561
    %v1743 = vsub.f32 1.0, %v1576
    %v1744 = vsub.f32 1.0, %v1591
    %v1745 = vsub.f32 1.0, %v1606
    %v1746 = vsub.f32 1.0, %v1621
    %v1747 = vsub.f32 1.0, %v1636
    %v1748 = vsub.f32 1.0, %v1651
    %1757 = vrot.lane.b32.xlu0 %v1733, 96
    %v1758 = vpop.permute.xlu0 %1757
    %1759 = vrot.lane.b32.xlu0 %v1734, 96
    %v1760 = vpop.permute.xlu0 %1759
    %1761 = vrot.lane.b32.xlu0 %v1735, 96
    %v1762 = vpop.permute.xlu0 %1761
    %1763 = vrot.lane.b32.xlu0 %v1736, 96
    %v1764 = vpop.permute.xlu0 %1763
    %1765 = vrot.lane.b32.xlu0 %v1737, 96
    %v1766 = vpop.permute.xlu0 %1765
    %1767 = vrot.lane.b32.xlu0 %v1738, 96
    %v1768 = vpop.permute.xlu0 %1767
    %1769 = vrot.lane.b32.xlu0 %v1739, 96
    %v1770 = vpop.permute.xlu0 %1769
    %1771 = vrot.lane.b32.xlu0 %v1740, 96
    %v1772 = vpop.permute.xlu0 %1771
    %v1781 = vmul.f32 %v1741, %v1758
    %v1782 = vmul.f32 %v1742, %v1760
    %v1783 = vmul.f32 %v1743, %v1762
    %v1784 = vmul.f32 %v1744, %v1764
    %v1785 = vmul.f32 %v1745, %v1766
    %v1786 = vmul.f32 %v1746, %v1768
    %v1787 = vmul.f32 %v1747, %v1770
    %v1788 = vmul.f32 %v1748, %v1772
    %v1790 = vrot.slane %v1450, 1
    %v1791 = vrot.slane %v1450, 2
    %v1792 = vrot.slane %v1450, 3
    %v1793 = vrot.slane %v1450, 4
    %v1794 = vrot.slane %v1450, 5
    %v1795 = vrot.slane %v1450, 6
    %v1796 = vrot.slane %v1450, 7
    %1797 = vrot.lane.b32.xlu0 %v1450, 32
    %v1798 = vpop.permute.xlu0 %1797
    %1799 = vrot.lane.b32.xlu0 %v1790, 32
    %v1800 = vpop.permute.xlu0 %1799
    %1801 = vrot.lane.b32.xlu0 %v1791, 32
    %v1802 = vpop.permute.xlu0 %1801
    %1803 = vrot.lane.b32.xlu0 %v1792, 32
    %v1804 = vpop.permute.xlu0 %1803
    %1805 = vrot.lane.b32.xlu0 %v1793, 32
    %v1806 = vpop.permute.xlu0 %1805
    %1807 = vrot.lane.b32.xlu0 %v1794, 32
    %v1808 = vpop.permute.xlu0 %1807
    %1809 = vrot.lane.b32.xlu0 %v1795, 32
    %v1810 = vpop.permute.xlu0 %1809
    %1811 = vrot.lane.b32.xlu0 %v1796, 32
    %v1812 = vpop.permute.xlu0 %1811
    %v1821 = vmul.f32 %v1546, %v1798
    %v1822 = vmul.f32 %v1561, %v1800
    %v1823 = vmul.f32 %v1576, %v1802
    %v1824 = vmul.f32 %v1591, %v1804
    %v1825 = vmul.f32 %v1606, %v1806
    %v1826 = vmul.f32 %v1621, %v1808
    %v1827 = vmul.f32 %v1636, %v1810
    %v1828 = vmul.f32 %v1651, %v1812
    %v1829 = vadd.f32 %v1781, %v1821
    %v1830 = vadd.f32 %v1782, %v1822
    %v1831 = vadd.f32 %v1783, %v1823
    %v1832 = vadd.f32 %v1784, %v1824
    %v1833 = vadd.f32 %v1785, %v1825
    %v1834 = vadd.f32 %v1786, %v1826
    %v1835 = vadd.f32 %v1787, %v1827
    %v1836 = vadd.f32 %v1788, %v1828
    %1837 = vset.pattern.permute.xlu0 3
    %1838 = vperm.xlu0 %1837, %v560
    %v1839 = vpop.permute.xlu0 %1838
    %v1849 = vrot.slane %v1830, 7
    %v1850 = vsel %vm575, %v1849, %v1829
    %v1851 = vrot.slane %v1831, 6
    %v1852 = vsel %vm578, %v1851, %v1850
    %v1853 = vrot.slane %v1832, 5
    %v1854 = vsel %vm581, %v1853, %v1852
    %v1855 = vrot.slane %v1833, 4
    %v1856 = vsel %vm584, %v1855, %v1854
    %v1857 = vrot.slane %v1834, 3
    %v1858 = vsel %vm587, %v1857, %v1856
    %v1859 = vrot.slane %v1835, 2
    %v1860 = vsel %vm590, %v1859, %v1858
    %v1861 = vrot.slane %v1836, 1
    %v1862 = vsel %vm593, %v1861, %v1860
    %1863 = vrot.lane.b32.xlu0 %v1862, 96
    %v1864 = vpop.permute.xlu0 %1863
    %v1866 = vmul.f32 %v1839, %v1864
    %1867 = vset.pattern.permute.xlu0 3
    %1868 = vperm.xlu0 %1867, %v599
    %v1869 = vpop.permute.xlu0 %1868
    %v1871 = vmul.f32 %v1869, %v1450
    %v1872 = vadd.f32 %v1866, %v1871
    %v1873 = vpack.c.bf16 %v1872, %v1872
    %v1875 = vsel %vm134, %v1873, 0
    %1877 = vmatpush.bf16.msra.mxu0 0
    %1878 = vmatpush.bf16.msra.mxu0 0
    %1879 = vmatpush.bf16.msra.mxu0 0
    %1880 = vmatpush.bf16.msra.mxu0 0
    %1881 = vmatpush.bf16.msra.mxu0 0
    %1882 = vmatpush.bf16.msra.mxu0 0
    %1883 = vmatpush.bf16.msra.mxu0 %v201
    %1884 = vmatpush.bf16.msra.mxu0 %v200
    %1885 = vmatmul.bf16.gmra.mxu0 %v1875
    %v1886 = vpop.f32.mrf.mxu0
    %v1887 = vadd.f32 0.0, %v1886
    %v1888 = vpop.f32.mrf.mxu0
    %1889 = vdwg.mxu0
    %v1890 = vld [vmem:[#allocation2 + $0x4] sm:$0x1]
    %v1891 = vld [vmem:[#allocation2 + $0xc] sm:$0x1]
    %v1892 = vld [vmem:[#allocation2 + $0x14] sm:$0x1]
    %v1893 = vld [vmem:[#allocation2 + $0x1c] sm:$0x1]
    %v1894 = vld [vmem:[#allocation2 + $0x24] sm:$0x1]
    %v1895 = vld [vmem:[#allocation2 + $0x2c] sm:$0x1]
    %v1896 = vld [vmem:[#allocation2 + $0x34] sm:$0x1]
    %v1897 = vld [vmem:[#allocation2 + $0x3c] sm:$0x1]
    %v1899 = vrot.slane %v1887, 1
    %v1900 = vrot.slane %v1887, 2
    %v1901 = vrot.slane %v1887, 3
    %v1902 = vrot.slane %v1887, 4
    %v1903 = vrot.slane %v1887, 5
    %v1904 = vrot.slane %v1887, 6
    %v1905 = vrot.slane %v1887, 7
    %v1914 = vadd.f32 %v1890, %v1887
    %v1915 = vadd.f32 %v1891, %v1899
    %v1916 = vadd.f32 %v1892, %v1900
    %v1917 = vadd.f32 %v1893, %v1901
    %v1918 = vadd.f32 %v1894, %v1902
    %v1919 = vadd.f32 %v1895, %v1903
    %v1920 = vadd.f32 %v1896, %v1904
    %v1921 = vadd.f32 %v1897, %v1905
    %v1922 = vxor.u32 %v1914, 2147483648
    %v1923 = vxor.u32 %v1915, 2147483648
    %v1924 = vxor.u32 %v1916, 2147483648
    %v1925 = vxor.u32 %v1917, 2147483648
    %v1926 = vxor.u32 %v1918, 2147483648
    %v1927 = vxor.u32 %v1919, 2147483648
    %v1928 = vxor.u32 %v1920, 2147483648
    %v1929 = vxor.u32 %v1921, 2147483648
    %v1930 = vmul.f32 %v1922, 1.442695
    %v1931 = vpow.pop %v1930
    %v1932 = vmul.f32 %v1923, 1.442695
    %v1933 = vpow.pop %v1932
    %v1934 = vmul.f32 %v1924, 1.442695
    %v1935 = vpow.pop %v1934
    %v1936 = vmul.f32 %v1925, 1.442695
    %v1937 = vpow.pop %v1936
    %v1938 = vmul.f32 %v1926, 1.442695
    %v1939 = vpow.pop %v1938
    %v1940 = vmul.f32 %v1927, 1.442695
    %v1941 = vpow.pop %v1940
    %v1942 = vmul.f32 %v1928, 1.442695
    %v1943 = vpow.pop %v1942
    %v1944 = vmul.f32 %v1929, 1.442695
    %v1945 = vpow.pop %v1944
    %v1946 = vadd.f32 %v1931, 1.0
    %v1947 = vadd.f32 %v1933, 1.0
    %v1948 = vadd.f32 %v1935, 1.0
    %v1949 = vadd.f32 %v1937, 1.0
    %v1950 = vadd.f32 %v1939, 1.0
    %v1951 = vadd.f32 %v1941, 1.0
    %v1952 = vadd.f32 %v1943, 1.0
    %v1953 = vadd.f32 %v1945, 1.0
    %v1954 = vrcp.pop %v1946
    %v1955 = vmul.f32 %v1946, %v1954
    %v1956 = vsub.f32 1.0, %v1955
    %v1957 = vmul.f32 %v1954, %v1956
    %v1958 = vadd.f32 %v1954, %v1957
    %vm1959 = vweird.f32 %v1946
    %vm1960 = vweird.f32 %v1954
    %vm1961 = vmor %vm1959, %vm1960
    %v1962 = vsel %vm1961, %v1954, %v1958
    %v1963 = vand.u32 2147483647, %v1946
    %vm1964 = vcmp.eq.f32.partialorder %v1963, 8.507059e+37
    %v1965 = vand.u32 %v1946, 2147483648
    %v1966 = vor.u32 1.1754944e-38, %v1965
    %v1967 = vsel %vm1964, %v1966, %v1962
    %v1968 = vmul.f32 1.0, %v1967
    %v1969 = vrcp.pop %v1947
    %v1970 = vmul.f32 %v1947, %v1969
    %v1971 = vsub.f32 1.0, %v1970
    %v1972 = vmul.f32 %v1969, %v1971
    %v1973 = vadd.f32 %v1969, %v1972
    %vm1974 = vweird.f32 %v1947
    %vm1975 = vweird.f32 %v1969
    %vm1976 = vmor %vm1974, %vm1975
    %v1977 = vsel %vm1976, %v1969, %v1973
    %v1978 = vand.u32 2147483647, %v1947
    %vm1979 = vcmp.eq.f32.partialorder %v1978, 8.507059e+37
    %v1980 = vand.u32 %v1947, 2147483648
    %v1981 = vor.u32 1.1754944e-38, %v1980
    %v1982 = vsel %vm1979, %v1981, %v1977
    %v1983 = vmul.f32 1.0, %v1982
    %v1984 = vrcp.pop %v1948
    %v1985 = vmul.f32 %v1948, %v1984
    %v1986 = vsub.f32 1.0, %v1985
    %v1987 = vmul.f32 %v1984, %v1986
    %v1988 = vadd.f32 %v1984, %v1987
    %vm1989 = vweird.f32 %v1948
    %vm1990 = vweird.f32 %v1984
    %vm1991 = vmor %vm1989, %vm1990
    %v1992 = vsel %vm1991, %v1984, %v1988
    %v1993 = vand.u32 2147483647, %v1948
    %vm1994 = vcmp.eq.f32.partialorder %v1993, 8.507059e+37
    %v1995 = vand.u32 %v1948, 2147483648
    %v1996 = vor.u32 1.1754944e-38, %v1995
    %v1997 = vsel %vm1994, %v1996, %v1992
    %v1998 = vmul.f32 1.0, %v1997
    %v1999 = vrcp.pop %v1949
    %v2000 = vmul.f32 %v1949, %v1999
    %v2001 = vsub.f32 1.0, %v2000
    %v2002 = vmul.f32 %v1999, %v2001
    %v2003 = vadd.f32 %v1999, %v2002
    %vm2004 = vweird.f32 %v1949
    %vm2005 = vweird.f32 %v1999
    %vm2006 = vmor %vm2004, %vm2005
    %v2007 = vsel %vm2006, %v1999, %v2003
    %v2008 = vand.u32 2147483647, %v1949
    %vm2009 = vcmp.eq.f32.partialorder %v2008, 8.507059e+37
    %v2010 = vand.u32 %v1949, 2147483648
    %v2011 = vor.u32 1.1754944e-38, %v2010
    %v2012 = vsel %vm2009, %v2011, %v2007
    %v2013 = vmul.f32 1.0, %v2012
    %v2014 = vrcp.pop %v1950
    %v2015 = vmul.f32 %v1950, %v2014
    %v2016 = vsub.f32 1.0, %v2015
    %v2017 = vmul.f32 %v2014, %v2016
    %v2018 = vadd.f32 %v2014, %v2017
    %vm2019 = vweird.f32 %v1950
    %vm2020 = vweird.f32 %v2014
    %vm2021 = vmor %vm2019, %vm2020
    %v2022 = vsel %vm2021, %v2014, %v2018
    %v2023 = vand.u32 2147483647, %v1950
    %vm2024 = vcmp.eq.f32.partialorder %v2023, 8.507059e+37
    %v2025 = vand.u32 %v1950, 2147483648
    %v2026 = vor.u32 1.1754944e-38, %v2025
    %v2027 = vsel %vm2024, %v2026, %v2022
    %v2028 = vmul.f32 1.0, %v2027
    %v2029 = vrcp.pop %v1951
    %v2030 = vmul.f32 %v1951, %v2029
    %v2031 = vsub.f32 1.0, %v2030
    %v2032 = vmul.f32 %v2029, %v2031
    %v2033 = vadd.f32 %v2029, %v2032
    %vm2034 = vweird.f32 %v1951
    %vm2035 = vweird.f32 %v2029
    %vm2036 = vmor %vm2034, %vm2035
    %v2037 = vsel %vm2036, %v2029, %v2033
    %v2038 = vand.u32 2147483647, %v1951
    %vm2039 = vcmp.eq.f32.partialorder %v2038, 8.507059e+37
    %v2040 = vand.u32 %v1951, 2147483648
    %v2041 = vor.u32 1.1754944e-38, %v2040
    %v2042 = vsel %vm2039, %v2041, %v2037
    %v2043 = vmul.f32 1.0, %v2042
    %v2044 = vrcp.pop %v1952
    %v2045 = vmul.f32 %v1952, %v2044
    %v2046 = vsub.f32 1.0, %v2045
    %v2047 = vmul.f32 %v2044, %v2046
    %v2048 = vadd.f32 %v2044, %v2047
    %vm2049 = vweird.f32 %v1952
    %vm2050 = vweird.f32 %v2044
    %vm2051 = vmor %vm2049, %vm2050
    %v2052 = vsel %vm2051, %v2044, %v2048
    %v2053 = vand.u32 2147483647, %v1952
    %vm2054 = vcmp.eq.f32.partialorder %v2053, 8.507059e+37
    %v2055 = vand.u32 %v1952, 2147483648
    %v2056 = vor.u32 1.1754944e-38, %v2055
    %v2057 = vsel %vm2054, %v2056, %v2052
    %v2058 = vmul.f32 1.0, %v2057
    %v2059 = vrcp.pop %v1953
    %v2060 = vmul.f32 %v1953, %v2059
    %v2061 = vsub.f32 1.0, %v2060
    %v2062 = vmul.f32 %v2059, %v2061
    %v2063 = vadd.f32 %v2059, %v2062
    %vm2064 = vweird.f32 %v1953
    %vm2065 = vweird.f32 %v2059
    %vm2066 = vmor %vm2064, %vm2065
    %v2067 = vsel %vm2066, %v2059, %v2063
    %v2068 = vand.u32 2147483647, %v1953
    %vm2069 = vcmp.eq.f32.partialorder %v2068, 8.507059e+37
    %v2070 = vand.u32 %v1953, 2147483648
    %v2071 = vor.u32 1.1754944e-38, %v2070
    %v2072 = vsel %vm2069, %v2071, %v2067
    %v2073 = vmul.f32 1.0, %v2072
    %v2074 = vadd.f32 %v1887, %v405
    %v2076 = vrot.slane %v2074, 1
    %v2077 = vrot.slane %v2074, 2
    %v2078 = vrot.slane %v2074, 3
    %v2079 = vrot.slane %v2074, 4
    %v2080 = vrot.slane %v2074, 5
    %v2081 = vrot.slane %v2074, 6
    %v2082 = vrot.slane %v2074, 7
    %2083 = vrot.lane.b32.xlu0 %v2074, 64
    %v2084 = vpop.permute.xlu0 %2083
    %2085 = vrot.lane.b32.xlu0 %v2076, 64
    %v2086 = vpop.permute.xlu0 %2085
    %2087 = vrot.lane.b32.xlu0 %v2077, 64
    %v2088 = vpop.permute.xlu0 %2087
    %2089 = vrot.lane.b32.xlu0 %v2078, 64
    %v2090 = vpop.permute.xlu0 %2089
    %2091 = vrot.lane.b32.xlu0 %v2079, 64
    %v2092 = vpop.permute.xlu0 %2091
    %2093 = vrot.lane.b32.xlu0 %v2080, 64
    %v2094 = vpop.permute.xlu0 %2093
    %2095 = vrot.lane.b32.xlu0 %v2081, 64
    %v2096 = vpop.permute.xlu0 %2095
    %2097 = vrot.lane.b32.xlu0 %v2082, 64
    %v2098 = vpop.permute.xlu0 %2097
    %v2107 = vmul.f32 %v1968, %v2084
    %v2108 = vmul.f32 %v1983, %v2086
    %v2109 = vmul.f32 %v1998, %v2088
    %v2110 = vmul.f32 %v2013, %v2090
    %v2111 = vmul.f32 %v2028, %v2092
    %v2112 = vmul.f32 %v2043, %v2094
    %v2113 = vmul.f32 %v2058, %v2096
    %v2114 = vmul.f32 %v2073, %v2098
    %2123 = vrot.lane.b32.xlu0 %v2107, 64
    %v2124 = vpop.permute.xlu0 %2123
    %2125 = vrot.lane.b32.xlu0 %v2108, 64
    %v2126 = vpop.permute.xlu0 %2125
    %2127 = vrot.lane.b32.xlu0 %v2109, 64
    %v2128 = vpop.permute.xlu0 %2127
    %2129 = vrot.lane.b32.xlu0 %v2110, 64
    %v2130 = vpop.permute.xlu0 %2129
    %2131 = vrot.lane.b32.xlu0 %v2111, 64
    %v2132 = vpop.permute.xlu0 %2131
    %2133 = vrot.lane.b32.xlu0 %v2112, 64
    %v2134 = vpop.permute.xlu0 %2133
    %2135 = vrot.lane.b32.xlu0 %v2113, 64
    %v2136 = vpop.permute.xlu0 %2135
    %2137 = vrot.lane.b32.xlu0 %v2114, 64
    %v2138 = vpop.permute.xlu0 %2137
    %v2147 = vadd.f32 %v1890, %v2124
    %v2148 = vadd.f32 %v1891, %v2126
    %v2149 = vadd.f32 %v1892, %v2128
    %v2150 = vadd.f32 %v1893, %v2130
    %v2151 = vadd.f32 %v1894, %v2132
    %v2152 = vadd.f32 %v1895, %v2134
    %v2153 = vadd.f32 %v1896, %v2136
    %v2154 = vadd.f32 %v1897, %v2138
    %v2155 = vtanh.pop %v2147
    %v2156 = vtanh.pop %v2148
    %v2157 = vtanh.pop %v2149
    %v2158 = vtanh.pop %v2150
    %v2159 = vtanh.pop %v2151
    %v2160 = vtanh.pop %v2152
    %v2161 = vtanh.pop %v2153
    %v2162 = vtanh.pop %v2154
    %v2163 = vsub.f32 1.0, %v1968
    %v2164 = vsub.f32 1.0, %v1983
    %v2165 = vsub.f32 1.0, %v1998
    %v2166 = vsub.f32 1.0, %v2013
    %v2167 = vsub.f32 1.0, %v2028
    %v2168 = vsub.f32 1.0, %v2043
    %v2169 = vsub.f32 1.0, %v2058
    %v2170 = vsub.f32 1.0, %v2073
    %2179 = vrot.lane.b32.xlu0 %v2155, 96
    %v2180 = vpop.permute.xlu0 %2179
    %2181 = vrot.lane.b32.xlu0 %v2156, 96
    %v2182 = vpop.permute.xlu0 %2181
    %2183 = vrot.lane.b32.xlu0 %v2157, 96
    %v2184 = vpop.permute.xlu0 %2183
    %2185 = vrot.lane.b32.xlu0 %v2158, 96
    %v2186 = vpop.permute.xlu0 %2185
    %2187 = vrot.lane.b32.xlu0 %v2159, 96
    %v2188 = vpop.permute.xlu0 %2187
    %2189 = vrot.lane.b32.xlu0 %v2160, 96
    %v2190 = vpop.permute.xlu0 %2189
    %2191 = vrot.lane.b32.xlu0 %v2161, 96
    %v2192 = vpop.permute.xlu0 %2191
    %2193 = vrot.lane.b32.xlu0 %v2162, 96
    %v2194 = vpop.permute.xlu0 %2193
    %v2203 = vmul.f32 %v2163, %v2180
    %v2204 = vmul.f32 %v2164, %v2182
    %v2205 = vmul.f32 %v2165, %v2184
    %v2206 = vmul.f32 %v2166, %v2186
    %v2207 = vmul.f32 %v2167, %v2188
    %v2208 = vmul.f32 %v2168, %v2190
    %v2209 = vmul.f32 %v2169, %v2192
    %v2210 = vmul.f32 %v2170, %v2194
    %v2212 = vrot.slane %v1872, 1
    %v2213 = vrot.slane %v1872, 2
    %v2214 = vrot.slane %v1872, 3
    %v2215 = vrot.slane %v1872, 4
    %v2216 = vrot.slane %v1872, 5
    %v2217 = vrot.slane %v1872, 6
    %v2218 = vrot.slane %v1872, 7
    %2219 = vrot.lane.b32.xlu0 %v1872, 32
    %v2220 = vpop.permute.xlu0 %2219
    %2221 = vrot.lane.b32.xlu0 %v2212, 32
    %v2222 = vpop.permute.xlu0 %2221
    %2223 = vrot.lane.b32.xlu0 %v2213, 32
    %v2224 = vpop.permute.xlu0 %2223
    %2225 = vrot.lane.b32.xlu0 %v2214, 32
    %v2226 = vpop.permute.xlu0 %2225
    %2227 = vrot.lane.b32.xlu0 %v2215, 32
    %v2228 = vpop.permute.xlu0 %2227
    %2229 = vrot.lane.b32.xlu0 %v2216, 32
    %v2230 = vpop.permute.xlu0 %2229
    %2231 = vrot.lane.b32.xlu0 %v2217, 32
    %v2232 = vpop.permute.xlu0 %2231
    %2233 = vrot.lane.b32.xlu0 %v2218, 32
    %v2234 = vpop.permute.xlu0 %2233
    %v2243 = vmul.f32 %v1968, %v2220
    %v2244 = vmul.f32 %v1983, %v2222
    %v2245 = vmul.f32 %v1998, %v2224
    %v2246 = vmul.f32 %v2013, %v2226
    %v2247 = vmul.f32 %v2028, %v2228
    %v2248 = vmul.f32 %v2043, %v2230
    %v2249 = vmul.f32 %v2058, %v2232
    %v2250 = vmul.f32 %v2073, %v2234
    %v2251 = vadd.f32 %v2203, %v2243
    %v2252 = vadd.f32 %v2204, %v2244
    %v2253 = vadd.f32 %v2205, %v2245
    %v2254 = vadd.f32 %v2206, %v2246
    %v2255 = vadd.f32 %v2207, %v2247
    %v2256 = vadd.f32 %v2208, %v2248
    %v2257 = vadd.f32 %v2209, %v2249
    %v2258 = vadd.f32 %v2210, %v2250
    %2259 = vset.pattern.permute.xlu0 4
    %2260 = vperm.xlu0 %2259, %v560
    %v2261 = vpop.permute.xlu0 %2260
    %v2271 = vrot.slane %v2252, 7
    %v2272 = vsel %vm575, %v2271, %v2251
    %v2273 = vrot.slane %v2253, 6
    %v2274 = vsel %vm578, %v2273, %v2272
    %v2275 = vrot.slane %v2254, 5
    %v2276 = vsel %vm581, %v2275, %v2274
    %v2277 = vrot.slane %v2255, 4
    %v2278 = vsel %vm584, %v2277, %v2276
    %v2279 = vrot.slane %v2256, 3
    %v2280 = vsel %vm587, %v2279, %v2278
    %v2281 = vrot.slane %v2257, 2
    %v2282 = vsel %vm590, %v2281, %v2280
    %v2283 = vrot.slane %v2258, 1
    %v2284 = vsel %vm593, %v2283, %v2282
    %2285 = vrot.lane.b32.xlu0 %v2284, 96
    %v2286 = vpop.permute.xlu0 %2285
    %v2288 = vmul.f32 %v2261, %v2286
    %2289 = vset.pattern.permute.xlu0 4
    %2290 = vperm.xlu0 %2289, %v599
    %v2291 = vpop.permute.xlu0 %2290
    %v2293 = vmul.f32 %v2291, %v1872
    %v2294 = vadd.f32 %v2288, %v2293
    %v2295 = vpack.c.bf16 %v2294, %v2294
    %v2297 = vsel %vm134, %v2295, 0
    %2299 = vmatpush.bf16.msra.mxu0 0
    %2300 = vmatpush.bf16.msra.mxu0 0
    %2301 = vmatpush.bf16.msra.mxu0 0
    %2302 = vmatpush.bf16.msra.mxu0 0
    %2303 = vmatpush.bf16.msra.mxu0 0
    %2304 = vmatpush.bf16.msra.mxu0 0
    %2305 = vmatpush.bf16.msra.mxu0 %v201
    %2306 = vmatpush.bf16.msra.mxu0 %v200
    %2307 = vmatmul.bf16.gmra.mxu0 %v2297
    %v2308 = vpop.f32.mrf.mxu0
    %v2309 = vadd.f32 0.0, %v2308
    %v2310 = vpop.f32.mrf.mxu0
    %2311 = vdwg.mxu0
    %v2312 = vld [vmem:[#allocation2 + $0x5] sm:$0x1]
    %v2313 = vld [vmem:[#allocation2 + $0xd] sm:$0x1]
    %v2314 = vld [vmem:[#allocation2 + $0x15] sm:$0x1]
    %v2315 = vld [vmem:[#allocation2 + $0x1d] sm:$0x1]
    %v2316 = vld [vmem:[#allocation2 + $0x25] sm:$0x1]
    %v2317 = vld [vmem:[#allocation2 + $0x2d] sm:$0x1]
    %v2318 = vld [vmem:[#allocation2 + $0x35] sm:$0x1]
    %v2319 = vld [vmem:[#allocation2 + $0x3d] sm:$0x1]
    %v2321 = vrot.slane %v2309, 1
    %v2322 = vrot.slane %v2309, 2
    %v2323 = vrot.slane %v2309, 3
    %v2324 = vrot.slane %v2309, 4
    %v2325 = vrot.slane %v2309, 5
    %v2326 = vrot.slane %v2309, 6
    %v2327 = vrot.slane %v2309, 7
    %v2336 = vadd.f32 %v2312, %v2309
    %v2337 = vadd.f32 %v2313, %v2321
    %v2338 = vadd.f32 %v2314, %v2322
    %v2339 = vadd.f32 %v2315, %v2323
    %v2340 = vadd.f32 %v2316, %v2324
    %v2341 = vadd.f32 %v2317, %v2325
    %v2342 = vadd.f32 %v2318, %v2326
    %v2343 = vadd.f32 %v2319, %v2327
    %v2344 = vxor.u32 %v2336, 2147483648
    %v2345 = vxor.u32 %v2337, 2147483648
    %v2346 = vxor.u32 %v2338, 2147483648
    %v2347 = vxor.u32 %v2339, 2147483648
    %v2348 = vxor.u32 %v2340, 2147483648
    %v2349 = vxor.u32 %v2341, 2147483648
    %v2350 = vxor.u32 %v2342, 2147483648
    %v2351 = vxor.u32 %v2343, 2147483648
    %v2352 = vmul.f32 %v2344, 1.442695
    %v2353 = vpow.pop %v2352
    %v2354 = vmul.f32 %v2345, 1.442695
    %v2355 = vpow.pop %v2354
    %v2356 = vmul.f32 %v2346, 1.442695
    %v2357 = vpow.pop %v2356
    %v2358 = vmul.f32 %v2347, 1.442695
    %v2359 = vpow.pop %v2358
    %v2360 = vmul.f32 %v2348, 1.442695
    %v2361 = vpow.pop %v2360
    %v2362 = vmul.f32 %v2349, 1.442695
    %v2363 = vpow.pop %v2362
    %v2364 = vmul.f32 %v2350, 1.442695
    %v2365 = vpow.pop %v2364
    %v2366 = vmul.f32 %v2351, 1.442695
    %v2367 = vpow.pop %v2366
    %v2368 = vadd.f32 %v2353, 1.0
    %v2369 = vadd.f32 %v2355, 1.0
    %v2370 = vadd.f32 %v2357, 1.0
    %v2371 = vadd.f32 %v2359, 1.0
    %v2372 = vadd.f32 %v2361, 1.0
    %v2373 = vadd.f32 %v2363, 1.0
    %v2374 = vadd.f32 %v2365, 1.0
    %v2375 = vadd.f32 %v2367, 1.0
    %v2376 = vrcp.pop %v2368
    %v2377 = vmul.f32 %v2368, %v2376
    %v2378 = vsub.f32 1.0, %v2377
    %v2379 = vmul.f32 %v2376, %v2378
    %v2380 = vadd.f32 %v2376, %v2379
    %vm2381 = vweird.f32 %v2368
    %vm2382 = vweird.f32 %v2376
    %vm2383 = vmor %vm2381, %vm2382
    %v2384 = vsel %vm2383, %v2376, %v2380
    %v2385 = vand.u32 2147483647, %v2368
    %vm2386 = vcmp.eq.f32.partialorder %v2385, 8.507059e+37
    %v2387 = vand.u32 %v2368, 2147483648
    %v2388 = vor.u32 1.1754944e-38, %v2387
    %v2389 = vsel %vm2386, %v2388, %v2384
    %v2390 = vmul.f32 1.0, %v2389
    %v2391 = vrcp.pop %v2369
    %v2392 = vmul.f32 %v2369, %v2391
    %v2393 = vsub.f32 1.0, %v2392
    %v2394 = vmul.f32 %v2391, %v2393
    %v2395 = vadd.f32 %v2391, %v2394
    %vm2396 = vweird.f32 %v2369
    %vm2397 = vweird.f32 %v2391
    %vm2398 = vmor %vm2396, %vm2397
    %v2399 = vsel %vm2398, %v2391, %v2395
    %v2400 = vand.u32 2147483647, %v2369
    %vm2401 = vcmp.eq.f32.partialorder %v2400, 8.507059e+37
    %v2402 = vand.u32 %v2369, 2147483648
    %v2403 = vor.u32 1.1754944e-38, %v2402
    %v2404 = vsel %vm2401, %v2403, %v2399
    %v2405 = vmul.f32 1.0, %v2404
    %v2406 = vrcp.pop %v2370
    %v2407 = vmul.f32 %v2370, %v2406
    %v2408 = vsub.f32 1.0, %v2407
    %v2409 = vmul.f32 %v2406, %v2408
    %v2410 = vadd.f32 %v2406, %v2409
    %vm2411 = vweird.f32 %v2370
    %vm2412 = vweird.f32 %v2406
    %vm2413 = vmor %vm2411, %vm2412
    %v2414 = vsel %vm2413, %v2406, %v2410
    %v2415 = vand.u32 2147483647, %v2370
    %vm2416 = vcmp.eq.f32.partialorder %v2415, 8.507059e+37
    %v2417 = vand.u32 %v2370, 2147483648
    %v2418 = vor.u32 1.1754944e-38, %v2417
    %v2419 = vsel %vm2416, %v2418, %v2414
    %v2420 = vmul.f32 1.0, %v2419
    %v2421 = vrcp.pop %v2371
    %v2422 = vmul.f32 %v2371, %v2421
    %v2423 = vsub.f32 1.0, %v2422
    %v2424 = vmul.f32 %v2421, %v2423
    %v2425 = vadd.f32 %v2421, %v2424
    %vm2426 = vweird.f32 %v2371
    %vm2427 = vweird.f32 %v2421
    %vm2428 = vmor %vm2426, %vm2427
    %v2429 = vsel %vm2428, %v2421, %v2425
    %v2430 = vand.u32 2147483647, %v2371
    %vm2431 = vcmp.eq.f32.partialorder %v2430, 8.507059e+37
    %v2432 = vand.u32 %v2371, 2147483648
    %v2433 = vor.u32 1.1754944e-38, %v2432
    %v2434 = vsel %vm2431, %v2433, %v2429
    %v2435 = vmul.f32 1.0, %v2434
    %v2436 = vrcp.pop %v2372
    %v2437 = vmul.f32 %v2372, %v2436
    %v2438 = vsub.f32 1.0, %v2437
    %v2439 = vmul.f32 %v2436, %v2438
    %v2440 = vadd.f32 %v2436, %v2439
    %vm2441 = vweird.f32 %v2372
    %vm2442 = vweird.f32 %v2436
    %vm2443 = vmor %vm2441, %vm2442
    %v2444 = vsel %vm2443, %v2436, %v2440
    %v2445 = vand.u32 2147483647, %v2372
    %vm2446 = vcmp.eq.f32.partialorder %v2445, 8.507059e+37
    %v2447 = vand.u32 %v2372, 2147483648
    %v2448 = vor.u32 1.1754944e-38, %v2447
    %v2449 = vsel %vm2446, %v2448, %v2444
    %v2450 = vmul.f32 1.0, %v2449
    %v2451 = vrcp.pop %v2373
    %v2452 = vmul.f32 %v2373, %v2451
    %v2453 = vsub.f32 1.0, %v2452
    %v2454 = vmul.f32 %v2451, %v2453
    %v2455 = vadd.f32 %v2451, %v2454
    %vm2456 = vweird.f32 %v2373
    %vm2457 = vweird.f32 %v2451
    %vm2458 = vmor %vm2456, %vm2457
    %v2459 = vsel %vm2458, %v2451, %v2455
    %v2460 = vand.u32 2147483647, %v2373
    %vm2461 = vcmp.eq.f32.partialorder %v2460, 8.507059e+37
    %v2462 = vand.u32 %v2373, 2147483648
    %v2463 = vor.u32 1.1754944e-38, %v2462
    %v2464 = vsel %vm2461, %v2463, %v2459
    %v2465 = vmul.f32 1.0, %v2464
    %v2466 = vrcp.pop %v2374
    %v2467 = vmul.f32 %v2374, %v2466
    %v2468 = vsub.f32 1.0, %v2467
    %v2469 = vmul.f32 %v2466, %v2468
    %v2470 = vadd.f32 %v2466, %v2469
    %vm2471 = vweird.f32 %v2374
    %vm2472 = vweird.f32 %v2466
    %vm2473 = vmor %vm2471, %vm2472
    %v2474 = vsel %vm2473, %v2466, %v2470
    %v2475 = vand.u32 2147483647, %v2374
    %vm2476 = vcmp.eq.f32.partialorder %v2475, 8.507059e+37
    %v2477 = vand.u32 %v2374, 2147483648
    %v2478 = vor.u32 1.1754944e-38, %v2477
    %v2479 = vsel %vm2476, %v2478, %v2474
    %v2480 = vmul.f32 1.0, %v2479
    %v2481 = vrcp.pop %v2375
    %v2482 = vmul.f32 %v2375, %v2481
    %v2483 = vsub.f32 1.0, %v2482
    %v2484 = vmul.f32 %v2481, %v2483
    %v2485 = vadd.f32 %v2481, %v2484
    %vm2486 = vweird.f32 %v2375
    %vm2487 = vweird.f32 %v2481
    %vm2488 = vmor %vm2486, %vm2487
    %v2489 = vsel %vm2488, %v2481, %v2485
    %v2490 = vand.u32 2147483647, %v2375
    %vm2491 = vcmp.eq.f32.partialorder %v2490, 8.507059e+37
    %v2492 = vand.u32 %v2375, 2147483648
    %v2493 = vor.u32 1.1754944e-38, %v2492
    %v2494 = vsel %vm2491, %v2493, %v2489
    %v2495 = vmul.f32 1.0, %v2494
    %v2496 = vadd.f32 %v2309, %v405
    %v2498 = vrot.slane %v2496, 1
    %v2499 = vrot.slane %v2496, 2
    %v2500 = vrot.slane %v2496, 3
    %v2501 = vrot.slane %v2496, 4
    %v2502 = vrot.slane %v2496, 5
    %v2503 = vrot.slane %v2496, 6
    %v2504 = vrot.slane %v2496, 7
    %2505 = vrot.lane.b32.xlu0 %v2496, 64
    %v2506 = vpop.permute.xlu0 %2505
    %2507 = vrot.lane.b32.xlu0 %v2498, 64
    %v2508 = vpop.permute.xlu0 %2507
    %2509 = vrot.lane.b32.xlu0 %v2499, 64
    %v2510 = vpop.permute.xlu0 %2509
    %2511 = vrot.lane.b32.xlu0 %v2500, 64
    %v2512 = vpop.permute.xlu0 %2511
    %2513 = vrot.lane.b32.xlu0 %v2501, 64
    %v2514 = vpop.permute.xlu0 %2513
    %2515 = vrot.lane.b32.xlu0 %v2502, 64
    %v2516 = vpop.permute.xlu0 %2515
    %2517 = vrot.lane.b32.xlu0 %v2503, 64
    %v2518 = vpop.permute.xlu0 %2517
    %2519 = vrot.lane.b32.xlu0 %v2504, 64
    %v2520 = vpop.permute.xlu0 %2519
    %v2529 = vmul.f32 %v2390, %v2506
    %v2530 = vmul.f32 %v2405, %v2508
    %v2531 = vmul.f32 %v2420, %v2510
    %v2532 = vmul.f32 %v2435, %v2512
    %v2533 = vmul.f32 %v2450, %v2514
    %v2534 = vmul.f32 %v2465, %v2516
    %v2535 = vmul.f32 %v2480, %v2518
    %v2536 = vmul.f32 %v2495, %v2520
    %2545 = vrot.lane.b32.xlu0 %v2529, 64
    %v2546 = vpop.permute.xlu0 %2545
    %2547 = vrot.lane.b32.xlu0 %v2530, 64
    %v2548 = vpop.permute.xlu0 %2547
    %2549 = vrot.lane.b32.xlu0 %v2531, 64
    %v2550 = vpop.permute.xlu0 %2549
    %2551 = vrot.lane.b32.xlu0 %v2532, 64
    %v2552 = vpop.permute.xlu0 %2551
    %2553 = vrot.lane.b32.xlu0 %v2533, 64
    %v2554 = vpop.permute.xlu0 %2553
    %2555 = vrot.lane.b32.xlu0 %v2534, 64
    %v2556 = vpop.permute.xlu0 %2555
    %2557 = vrot.lane.b32.xlu0 %v2535, 64
    %v2558 = vpop.permute.xlu0 %2557
    %2559 = vrot.lane.b32.xlu0 %v2536, 64
    %v2560 = vpop.permute.xlu0 %2559
    %v2569 = vadd.f32 %v2312, %v2546
    %v2570 = vadd.f32 %v2313, %v2548
    %v2571 = vadd.f32 %v2314, %v2550
    %v2572 = vadd.f32 %v2315, %v2552
    %v2573 = vadd.f32 %v2316, %v2554
    %v2574 = vadd.f32 %v2317, %v2556
    %v2575 = vadd.f32 %v2318, %v2558
    %v2576 = vadd.f32 %v2319, %v2560
    %v2577 = vtanh.pop %v2569
    %v2578 = vtanh.pop %v2570
    %v2579 = vtanh.pop %v2571
    %v2580 = vtanh.pop %v2572
    %v2581 = vtanh.pop %v2573
    %v2582 = vtanh.pop %v2574
    %v2583 = vtanh.pop %v2575
    %v2584 = vtanh.pop %v2576
    %v2585 = vsub.f32 1.0, %v2390
    %v2586 = vsub.f32 1.0, %v2405
    %v2587 = vsub.f32 1.0, %v2420
    %v2588 = vsub.f32 1.0, %v2435
    %v2589 = vsub.f32 1.0, %v2450
    %v2590 = vsub.f32 1.0, %v2465
    %v2591 = vsub.f32 1.0, %v2480
    %v2592 = vsub.f32 1.0, %v2495
    %2601 = vrot.lane.b32.xlu0 %v2577, 96
    %v2602 = vpop.permute.xlu0 %2601
    %2603 = vrot.lane.b32.xlu0 %v2578, 96
    %v2604 = vpop.permute.xlu0 %2603
    %2605 = vrot.lane.b32.xlu0 %v2579, 96
    %v2606 = vpop.permute.xlu0 %2605
    %2607 = vrot.lane.b32.xlu0 %v2580, 96
    %v2608 = vpop.permute.xlu0 %2607
    %2609 = vrot.lane.b32.xlu0 %v2581, 96
    %v2610 = vpop.permute.xlu0 %2609
    %2611 = vrot.lane.b32.xlu0 %v2582, 96
    %v2612 = vpop.permute.xlu0 %2611
    %2613 = vrot.lane.b32.xlu0 %v2583, 96
    %v2614 = vpop.permute.xlu0 %2613
    %2615 = vrot.lane.b32.xlu0 %v2584, 96
    %v2616 = vpop.permute.xlu0 %2615
    %v2625 = vmul.f32 %v2585, %v2602
    %v2626 = vmul.f32 %v2586, %v2604
    %v2627 = vmul.f32 %v2587, %v2606
    %v2628 = vmul.f32 %v2588, %v2608
    %v2629 = vmul.f32 %v2589, %v2610
    %v2630 = vmul.f32 %v2590, %v2612
    %v2631 = vmul.f32 %v2591, %v2614
    %v2632 = vmul.f32 %v2592, %v2616
    %v2634 = vrot.slane %v2294, 1
    %v2635 = vrot.slane %v2294, 2
    %v2636 = vrot.slane %v2294, 3
    %v2637 = vrot.slane %v2294, 4
    %v2638 = vrot.slane %v2294, 5
    %v2639 = vrot.slane %v2294, 6
    %v2640 = vrot.slane %v2294, 7
    %2641 = vrot.lane.b32.xlu0 %v2294, 32
    %v2642 = vpop.permute.xlu0 %2641
    %2643 = vrot.lane.b32.xlu0 %v2634, 32
    %v2644 = vpop.permute.xlu0 %2643
    %2645 = vrot.lane.b32.xlu0 %v2635, 32
    %v2646 = vpop.permute.xlu0 %2645
    %2647 = vrot.lane.b32.xlu0 %v2636, 32
    %v2648 = vpop.permute.xlu0 %2647
    %2649 = vrot.lane.b32.xlu0 %v2637, 32
    %v2650 = vpop.permute.xlu0 %2649
    %2651 = vrot.lane.b32.xlu0 %v2638, 32
    %v2652 = vpop.permute.xlu0 %2651
    %2653 = vrot.lane.b32.xlu0 %v2639, 32
    %v2654 = vpop.permute.xlu0 %2653
    %2655 = vrot.lane.b32.xlu0 %v2640, 32
    %v2656 = vpop.permute.xlu0 %2655
    %v2665 = vmul.f32 %v2390, %v2642
    %v2666 = vmul.f32 %v2405, %v2644
    %v2667 = vmul.f32 %v2420, %v2646
    %v2668 = vmul.f32 %v2435, %v2648
    %v2669 = vmul.f32 %v2450, %v2650
    %v2670 = vmul.f32 %v2465, %v2652
    %v2671 = vmul.f32 %v2480, %v2654
    %v2672 = vmul.f32 %v2495, %v2656
    %v2673 = vadd.f32 %v2625, %v2665
    %v2674 = vadd.f32 %v2626, %v2666
    %v2675 = vadd.f32 %v2627, %v2667
    %v2676 = vadd.f32 %v2628, %v2668
    %v2677 = vadd.f32 %v2629, %v2669
    %v2678 = vadd.f32 %v2630, %v2670
    %v2679 = vadd.f32 %v2631, %v2671
    %v2680 = vadd.f32 %v2632, %v2672
    %2681 = vset.pattern.permute.xlu0 5
    %2682 = vperm.xlu0 %2681, %v560
    %v2683 = vpop.permute.xlu0 %2682
    %v2693 = vrot.slane %v2674, 7
    %v2694 = vsel %vm575, %v2693, %v2673
    %v2695 = vrot.slane %v2675, 6
    %v2696 = vsel %vm578, %v2695, %v2694
    %v2697 = vrot.slane %v2676, 5
    %v2698 = vsel %vm581, %v2697, %v2696
    %v2699 = vrot.slane %v2677, 4
    %v2700 = vsel %vm584, %v2699, %v2698
    %v2701 = vrot.slane %v2678, 3
    %v2702 = vsel %vm587, %v2701, %v2700
    %v2703 = vrot.slane %v2679, 2
    %v2704 = vsel %vm590, %v2703, %v2702
    %v2705 = vrot.slane %v2680, 1
    %v2706 = vsel %vm593, %v2705, %v2704
    %2707 = vrot.lane.b32.xlu0 %v2706, 96
    %v2708 = vpop.permute.xlu0 %2707
    %v2710 = vmul.f32 %v2683, %v2708
    %2711 = vset.pattern.permute.xlu0 5
    %2712 = vperm.xlu0 %2711, %v599
    %v2713 = vpop.permute.xlu0 %2712
    %v2715 = vmul.f32 %v2713, %v2294
    %v2716 = vadd.f32 %v2710, %v2715
    %v2717 = vpack.c.bf16 %v2716, %v2716
    %v2719 = vsel %vm134, %v2717, 0
    %2721 = vmatpush.bf16.msra.mxu0 0
    %2722 = vmatpush.bf16.msra.mxu0 0
    %2723 = vmatpush.bf16.msra.mxu0 0
    %2724 = vmatpush.bf16.msra.mxu0 0
    %2725 = vmatpush.bf16.msra.mxu0 0
    %2726 = vmatpush.bf16.msra.mxu0 0
    %2727 = vmatpush.bf16.msra.mxu0 %v201
    %2728 = vmatpush.bf16.msra.mxu0 %v200
    %2729 = vmatmul.bf16.gmra.mxu0 %v2719
    %v2730 = vpop.f32.mrf.mxu0
    %v2731 = vadd.f32 0.0, %v2730
    %v2732 = vpop.f32.mrf.mxu0
    %2733 = vdwg.mxu0
    %v2734 = vld [vmem:[#allocation2 + $0x6] sm:$0x1]
    %v2735 = vld [vmem:[#allocation2 + $0xe] sm:$0x1]
    %v2736 = vld [vmem:[#allocation2 + $0x16] sm:$0x1]
    %v2737 = vld [vmem:[#allocation2 + $0x1e] sm:$0x1]
    %v2738 = vld [vmem:[#allocation2 + $0x26] sm:$0x1]
    %v2739 = vld [vmem:[#allocation2 + $0x2e] sm:$0x1]
    %v2740 = vld [vmem:[#allocation2 + $0x36] sm:$0x1]
    %v2741 = vld [vmem:[#allocation2 + $0x3e] sm:$0x1]
    %v2743 = vrot.slane %v2731, 1
    %v2744 = vrot.slane %v2731, 2
    %v2745 = vrot.slane %v2731, 3
    %v2746 = vrot.slane %v2731, 4
    %v2747 = vrot.slane %v2731, 5
    %v2748 = vrot.slane %v2731, 6
    %v2749 = vrot.slane %v2731, 7
    %v2758 = vadd.f32 %v2734, %v2731
    %v2759 = vadd.f32 %v2735, %v2743
    %v2760 = vadd.f32 %v2736, %v2744
    %v2761 = vadd.f32 %v2737, %v2745
    %v2762 = vadd.f32 %v2738, %v2746
    %v2763 = vadd.f32 %v2739, %v2747
    %v2764 = vadd.f32 %v2740, %v2748
    %v2765 = vadd.f32 %v2741, %v2749
    %v2766 = vxor.u32 %v2758, 2147483648
    %v2767 = vxor.u32 %v2759, 2147483648
    %v2768 = vxor.u32 %v2760, 2147483648
    %v2769 = vxor.u32 %v2761, 2147483648
    %v2770 = vxor.u32 %v2762, 2147483648
    %v2771 = vxor.u32 %v2763, 2147483648
    %v2772 = vxor.u32 %v2764, 2147483648
    %v2773 = vxor.u32 %v2765, 2147483648
    %v2774 = vmul.f32 %v2766, 1.442695
    %v2775 = vpow.pop %v2774
    %v2776 = vmul.f32 %v2767, 1.442695
    %v2777 = vpow.pop %v2776
    %v2778 = vmul.f32 %v2768, 1.442695
    %v2779 = vpow.pop %v2778
    %v2780 = vmul.f32 %v2769, 1.442695
    %v2781 = vpow.pop %v2780
    %v2782 = vmul.f32 %v2770, 1.442695
    %v2783 = vpow.pop %v2782
    %v2784 = vmul.f32 %v2771, 1.442695
    %v2785 = vpow.pop %v2784
    %v2786 = vmul.f32 %v2772, 1.442695
    %v2787 = vpow.pop %v2786
    %v2788 = vmul.f32 %v2773, 1.442695
    %v2789 = vpow.pop %v2788
    %v2790 = vadd.f32 %v2775, 1.0
    %v2791 = vadd.f32 %v2777, 1.0
    %v2792 = vadd.f32 %v2779, 1.0
    %v2793 = vadd.f32 %v2781, 1.0
    %v2794 = vadd.f32 %v2783, 1.0
    %v2795 = vadd.f32 %v2785, 1.0
    %v2796 = vadd.f32 %v2787, 1.0
    %v2797 = vadd.f32 %v2789, 1.0
    %v2798 = vrcp.pop %v2790
    %v2799 = vmul.f32 %v2790, %v2798
    %v2800 = vsub.f32 1.0, %v2799
    %v2801 = vmul.f32 %v2798, %v2800
    %v2802 = vadd.f32 %v2798, %v2801
    %vm2803 = vweird.f32 %v2790
    %vm2804 = vweird.f32 %v2798
    %vm2805 = vmor %vm2803, %vm2804
    %v2806 = vsel %vm2805, %v2798, %v2802
    %v2807 = vand.u32 2147483647, %v2790
    %vm2808 = vcmp.eq.f32.partialorder %v2807, 8.507059e+37
    %v2809 = vand.u32 %v2790, 2147483648
    %v2810 = vor.u32 1.1754944e-38, %v2809
    %v2811 = vsel %vm2808, %v2810, %v2806
    %v2812 = vmul.f32 1.0, %v2811
    %v2813 = vrcp.pop %v2791
    %v2814 = vmul.f32 %v2791, %v2813
    %v2815 = vsub.f32 1.0, %v2814
    %v2816 = vmul.f32 %v2813, %v2815
    %v2817 = vadd.f32 %v2813, %v2816
    %vm2818 = vweird.f32 %v2791
    %vm2819 = vweird.f32 %v2813
    %vm2820 = vmor %vm2818, %vm2819
    %v2821 = vsel %vm2820, %v2813, %v2817
    %v2822 = vand.u32 2147483647, %v2791
    %vm2823 = vcmp.eq.f32.partialorder %v2822, 8.507059e+37
    %v2824 = vand.u32 %v2791, 2147483648
    %v2825 = vor.u32 1.1754944e-38, %v2824
    %v2826 = vsel %vm2823, %v2825, %v2821
    %v2827 = vmul.f32 1.0, %v2826
    %v2828 = vrcp.pop %v2792
    %v2829 = vmul.f32 %v2792, %v2828
    %v2830 = vsub.f32 1.0, %v2829
    %v2831 = vmul.f32 %v2828, %v2830
    %v2832 = vadd.f32 %v2828, %v2831
    %vm2833 = vweird.f32 %v2792
    %vm2834 = vweird.f32 %v2828
    %vm2835 = vmor %vm2833, %vm2834
    %v2836 = vsel %vm2835, %v2828, %v2832
    %v2837 = vand.u32 2147483647, %v2792
    %vm2838 = vcmp.eq.f32.partialorder %v2837, 8.507059e+37
    %v2839 = vand.u32 %v2792, 2147483648
    %v2840 = vor.u32 1.1754944e-38, %v2839
    %v2841 = vsel %vm2838, %v2840, %v2836
    %v2842 = vmul.f32 1.0, %v2841
    %v2843 = vrcp.pop %v2793
    %v2844 = vmul.f32 %v2793, %v2843
    %v2845 = vsub.f32 1.0, %v2844
    %v2846 = vmul.f32 %v2843, %v2845
    %v2847 = vadd.f32 %v2843, %v2846
    %vm2848 = vweird.f32 %v2793
    %vm2849 = vweird.f32 %v2843
    %vm2850 = vmor %vm2848, %vm2849
    %v2851 = vsel %vm2850, %v2843, %v2847
    %v2852 = vand.u32 2147483647, %v2793
    %vm2853 = vcmp.eq.f32.partialorder %v2852, 8.507059e+37
    %v2854 = vand.u32 %v2793, 2147483648
    %v2855 = vor.u32 1.1754944e-38, %v2854
    %v2856 = vsel %vm2853, %v2855, %v2851
    %v2857 = vmul.f32 1.0, %v2856
    %v2858 = vrcp.pop %v2794
    %v2859 = vmul.f32 %v2794, %v2858
    %v2860 = vsub.f32 1.0, %v2859
    %v2861 = vmul.f32 %v2858, %v2860
    %v2862 = vadd.f32 %v2858, %v2861
    %vm2863 = vweird.f32 %v2794
    %vm2864 = vweird.f32 %v2858
    %vm2865 = vmor %vm2863, %vm2864
    %v2866 = vsel %vm2865, %v2858, %v2862
    %v2867 = vand.u32 2147483647, %v2794
    %vm2868 = vcmp.eq.f32.partialorder %v2867, 8.507059e+37
    %v2869 = vand.u32 %v2794, 2147483648
    %v2870 = vor.u32 1.1754944e-38, %v2869
    %v2871 = vsel %vm2868, %v2870, %v2866
    %v2872 = vmul.f32 1.0, %v2871
    %v2873 = vrcp.pop %v2795
    %v2874 = vmul.f32 %v2795, %v2873
    %v2875 = vsub.f32 1.0, %v2874
    %v2876 = vmul.f32 %v2873, %v2875
    %v2877 = vadd.f32 %v2873, %v2876
    %vm2878 = vweird.f32 %v2795
    %vm2879 = vweird.f32 %v2873
    %vm2880 = vmor %vm2878, %vm2879
    %v2881 = vsel %vm2880, %v2873, %v2877
    %v2882 = vand.u32 2147483647, %v2795
    %vm2883 = vcmp.eq.f32.partialorder %v2882, 8.507059e+37
    %v2884 = vand.u32 %v2795, 2147483648
    %v2885 = vor.u32 1.1754944e-38, %v2884
    %v2886 = vsel %vm2883, %v2885, %v2881
    %v2887 = vmul.f32 1.0, %v2886
    %v2888 = vrcp.pop %v2796
    %v2889 = vmul.f32 %v2796, %v2888
    %v2890 = vsub.f32 1.0, %v2889
    %v2891 = vmul.f32 %v2888, %v2890
    %v2892 = vadd.f32 %v2888, %v2891
    %vm2893 = vweird.f32 %v2796
    %vm2894 = vweird.f32 %v2888
    %vm2895 = vmor %vm2893, %vm2894
    %v2896 = vsel %vm2895, %v2888, %v2892
    %v2897 = vand.u32 2147483647, %v2796
    %vm2898 = vcmp.eq.f32.partialorder %v2897, 8.507059e+37
    %v2899 = vand.u32 %v2796, 2147483648
    %v2900 = vor.u32 1.1754944e-38, %v2899
    %v2901 = vsel %vm2898, %v2900, %v2896
    %v2902 = vmul.f32 1.0, %v2901
    %v2903 = vrcp.pop %v2797
    %v2904 = vmul.f32 %v2797, %v2903
    %v2905 = vsub.f32 1.0, %v2904
    %v2906 = vmul.f32 %v2903, %v2905
    %v2907 = vadd.f32 %v2903, %v2906
    %vm2908 = vweird.f32 %v2797
    %vm2909 = vweird.f32 %v2903
    %vm2910 = vmor %vm2908, %vm2909
    %v2911 = vsel %vm2910, %v2903, %v2907
    %v2912 = vand.u32 2147483647, %v2797
    %vm2913 = vcmp.eq.f32.partialorder %v2912, 8.507059e+37
    %v2914 = vand.u32 %v2797, 2147483648
    %v2915 = vor.u32 1.1754944e-38, %v2914
    %v2916 = vsel %vm2913, %v2915, %v2911
    %v2917 = vmul.f32 1.0, %v2916
    %v2918 = vadd.f32 %v2731, %v405
    %v2920 = vrot.slane %v2918, 1
    %v2921 = vrot.slane %v2918, 2
    %v2922 = vrot.slane %v2918, 3
    %v2923 = vrot.slane %v2918, 4
    %v2924 = vrot.slane %v2918, 5
    %v2925 = vrot.slane %v2918, 6
    %v2926 = vrot.slane %v2918, 7
    %2927 = vrot.lane.b32.xlu0 %v2918, 64
    %v2928 = vpop.permute.xlu0 %2927
    %2929 = vrot.lane.b32.xlu0 %v2920, 64
    %v2930 = vpop.permute.xlu0 %2929
    %2931 = vrot.lane.b32.xlu0 %v2921, 64
    %v2932 = vpop.permute.xlu0 %2931
    %2933 = vrot.lane.b32.xlu0 %v2922, 64
    %v2934 = vpop.permute.xlu0 %2933
    %2935 = vrot.lane.b32.xlu0 %v2923, 64
    %v2936 = vpop.permute.xlu0 %2935
    %2937 = vrot.lane.b32.xlu0 %v2924, 64
    %v2938 = vpop.permute.xlu0 %2937
    %2939 = vrot.lane.b32.xlu0 %v2925, 64
    %v2940 = vpop.permute.xlu0 %2939
    %2941 = vrot.lane.b32.xlu0 %v2926, 64
    %v2942 = vpop.permute.xlu0 %2941
    %v2951 = vmul.f32 %v2812, %v2928
    %v2952 = vmul.f32 %v2827, %v2930
    %v2953 = vmul.f32 %v2842, %v2932
    %v2954 = vmul.f32 %v2857, %v2934
    %v2955 = vmul.f32 %v2872, %v2936
    %v2956 = vmul.f32 %v2887, %v2938
    %v2957 = vmul.f32 %v2902, %v2940
    %v2958 = vmul.f32 %v2917, %v2942
    %2967 = vrot.lane.b32.xlu0 %v2951, 64
    %v2968 = vpop.permute.xlu0 %2967
    %2969 = vrot.lane.b32.xlu0 %v2952, 64
    %v2970 = vpop.permute.xlu0 %2969
    %2971 = vrot.lane.b32.xlu0 %v2953, 64
    %v2972 = vpop.permute.xlu0 %2971
    %2973 = vrot.lane.b32.xlu0 %v2954, 64
    %v2974 = vpop.permute.xlu0 %2973
    %2975 = vrot.lane.b32.xlu0 %v2955, 64
    %v2976 = vpop.permute.xlu0 %2975
    %2977 = vrot.lane.b32.xlu0 %v2956, 64
    %v2978 = vpop.permute.xlu0 %2977
    %2979 = vrot.lane.b32.xlu0 %v2957, 64
    %v2980 = vpop.permute.xlu0 %2979
    %2981 = vrot.lane.b32.xlu0 %v2958, 64
    %v2982 = vpop.permute.xlu0 %2981
    %v2991 = vadd.f32 %v2734, %v2968
    %v2992 = vadd.f32 %v2735, %v2970
    %v2993 = vadd.f32 %v2736, %v2972
    %v2994 = vadd.f32 %v2737, %v2974
    %v2995 = vadd.f32 %v2738, %v2976
    %v2996 = vadd.f32 %v2739, %v2978
    %v2997 = vadd.f32 %v2740, %v2980
    %v2998 = vadd.f32 %v2741, %v2982
    %v2999 = vtanh.pop %v2991
    %v3000 = vtanh.pop %v2992
    %v3001 = vtanh.pop %v2993
    %v3002 = vtanh.pop %v2994
    %v3003 = vtanh.pop %v2995
    %v3004 = vtanh.pop %v2996
    %v3005 = vtanh.pop %v2997
    %v3006 = vtanh.pop %v2998
    %v3007 = vsub.f32 1.0, %v2812
    %v3008 = vsub.f32 1.0, %v2827
    %v3009 = vsub.f32 1.0, %v2842
    %v3010 = vsub.f32 1.0, %v2857
    %v3011 = vsub.f32 1.0, %v2872
    %v3012 = vsub.f32 1.0, %v2887
    %v3013 = vsub.f32 1.0, %v2902
    %v3014 = vsub.f32 1.0, %v2917
    %3023 = vrot.lane.b32.xlu0 %v2999, 96
    %v3024 = vpop.permute.xlu0 %3023
    %3025 = vrot.lane.b32.xlu0 %v3000, 96
    %v3026 = vpop.permute.xlu0 %3025
    %3027 = vrot.lane.b32.xlu0 %v3001, 96
    %v3028 = vpop.permute.xlu0 %3027
    %3029 = vrot.lane.b32.xlu0 %v3002, 96
    %v3030 = vpop.permute.xlu0 %3029
    %3031 = vrot.lane.b32.xlu0 %v3003, 96
    %v3032 = vpop.permute.xlu0 %3031
    %3033 = vrot.lane.b32.xlu0 %v3004, 96
    %v3034 = vpop.permute.xlu0 %3033
    %3035 = vrot.lane.b32.xlu0 %v3005, 96
    %v3036 = vpop.permute.xlu0 %3035
    %3037 = vrot.lane.b32.xlu0 %v3006, 96
    %v3038 = vpop.permute.xlu0 %3037
    %v3047 = vmul.f32 %v3007, %v3024
    %v3048 = vmul.f32 %v3008, %v3026
    %v3049 = vmul.f32 %v3009, %v3028
    %v3050 = vmul.f32 %v3010, %v3030
    %v3051 = vmul.f32 %v3011, %v3032
    %v3052 = vmul.f32 %v3012, %v3034
    %v3053 = vmul.f32 %v3013, %v3036
    %v3054 = vmul.f32 %v3014, %v3038
    %v3056 = vrot.slane %v2716, 1
    %v3057 = vrot.slane %v2716, 2
    %v3058 = vrot.slane %v2716, 3
    %v3059 = vrot.slane %v2716, 4
    %v3060 = vrot.slane %v2716, 5
    %v3061 = vrot.slane %v2716, 6
    %v3062 = vrot.slane %v2716, 7
    %3063 = vrot.lane.b32.xlu0 %v2716, 32
    %v3064 = vpop.permute.xlu0 %3063
    %3065 = vrot.lane.b32.xlu0 %v3056, 32
    %v3066 = vpop.permute.xlu0 %3065
    %3067 = vrot.lane.b32.xlu0 %v3057, 32
    %v3068 = vpop.permute.xlu0 %3067
    %3069 = vrot.lane.b32.xlu0 %v3058, 32
    %v3070 = vpop.permute.xlu0 %3069
    %3071 = vrot.lane.b32.xlu0 %v3059, 32
    %v3072 = vpop.permute.xlu0 %3071
    %3073 = vrot.lane.b32.xlu0 %v3060, 32
    %v3074 = vpop.permute.xlu0 %3073
    %3075 = vrot.lane.b32.xlu0 %v3061, 32
    %v3076 = vpop.permute.xlu0 %3075
    %3077 = vrot.lane.b32.xlu0 %v3062, 32
    %v3078 = vpop.permute.xlu0 %3077
    %v3087 = vmul.f32 %v2812, %v3064
    %v3088 = vmul.f32 %v2827, %v3066
    %v3089 = vmul.f32 %v2842, %v3068
    %v3090 = vmul.f32 %v2857, %v3070
    %v3091 = vmul.f32 %v2872, %v3072
    %v3092 = vmul.f32 %v2887, %v3074
    %v3093 = vmul.f32 %v2902, %v3076
    %v3094 = vmul.f32 %v2917, %v3078
    %v3095 = vadd.f32 %v3047, %v3087
    %v3096 = vadd.f32 %v3048, %v3088
    %v3097 = vadd.f32 %v3049, %v3089
    %v3098 = vadd.f32 %v3050, %v3090
    %v3099 = vadd.f32 %v3051, %v3091
    %v3100 = vadd.f32 %v3052, %v3092
    %v3101 = vadd.f32 %v3053, %v3093
    %v3102 = vadd.f32 %v3054, %v3094
    %3103 = vset.pattern.permute.xlu0 6
    %3104 = vperm.xlu0 %3103, %v560
    %v3105 = vpop.permute.xlu0 %3104
    %v3115 = vrot.slane %v3096, 7
    %v3116 = vsel %vm575, %v3115, %v3095
    %v3117 = vrot.slane %v3097, 6
    %v3118 = vsel %vm578, %v3117, %v3116
    %v3119 = vrot.slane %v3098, 5
    %v3120 = vsel %vm581, %v3119, %v3118
    %v3121 = vrot.slane %v3099, 4
    %v3122 = vsel %vm584, %v3121, %v3120
    %v3123 = vrot.slane %v3100, 3
    %v3124 = vsel %vm587, %v3123, %v3122
    %v3125 = vrot.slane %v3101, 2
    %v3126 = vsel %vm590, %v3125, %v3124
    %v3127 = vrot.slane %v3102, 1
    %v3128 = vsel %vm593, %v3127, %v3126
    %3129 = vrot.lane.b32.xlu0 %v3128, 96
    %v3130 = vpop.permute.xlu0 %3129
    %v3132 = vmul.f32 %v3105, %v3130
    %3133 = vset.pattern.permute.xlu0 6
    %3134 = vperm.xlu0 %3133, %v599
    %v3135 = vpop.permute.xlu0 %3134
    %v3137 = vmul.f32 %v3135, %v2716
    %v3138 = vadd.f32 %v3132, %v3137
    %v3139 = vpack.c.bf16 %v3138, %v3138
    %v3141 = vsel %vm134, %v3139, 0
    %3143 = vmatpush.bf16.msra.mxu0 0
    %3144 = vmatpush.bf16.msra.mxu0 0
    %3145 = vmatpush.bf16.msra.mxu0 0
    %3146 = vmatpush.bf16.msra.mxu0 0
    %3147 = vmatpush.bf16.msra.mxu0 0
    %3148 = vmatpush.bf16.msra.mxu0 0
    %3149 = vmatpush.bf16.msra.mxu0 %v201
    %3150 = vmatpush.bf16.msra.mxu0 %v200
    %3151 = vmatmul.bf16.gmra.mxu0 %v3141
    %v3152 = vpop.f32.mrf.mxu0
    %v3153 = vadd.f32 0.0, %v3152
    %v3154 = vpop.f32.mrf.mxu0
    %3155 = vdwg.mxu0
    %v3156 = vld [vmem:[#allocation2 + $0x7] sm:$0x1]
    %v3157 = vld [vmem:[#allocation2 + $0xf] sm:$0x1]
    %v3158 = vld [vmem:[#allocation2 + $0x17] sm:$0x1]
    %v3159 = vld [vmem:[#allocation2 + $0x1f] sm:$0x1]
    %v3160 = vld [vmem:[#allocation2 + $0x27] sm:$0x1]
    %v3161 = vld [vmem:[#allocation2 + $0x2f] sm:$0x1]
    %v3162 = vld [vmem:[#allocation2 + $0x37] sm:$0x1]
    %v3163 = vld [vmem:[#allocation2 + $0x3f] sm:$0x1]
    %v3165 = vrot.slane %v3153, 1
    %v3166 = vrot.slane %v3153, 2
    %v3167 = vrot.slane %v3153, 3
    %v3168 = vrot.slane %v3153, 4
    %v3169 = vrot.slane %v3153, 5
    %v3170 = vrot.slane %v3153, 6
    %v3171 = vrot.slane %v3153, 7
    %v3180 = vadd.f32 %v3156, %v3153
    %v3181 = vadd.f32 %v3157, %v3165
    %v3182 = vadd.f32 %v3158, %v3166
    %v3183 = vadd.f32 %v3159, %v3167
    %v3184 = vadd.f32 %v3160, %v3168
    %v3185 = vadd.f32 %v3161, %v3169
    %v3186 = vadd.f32 %v3162, %v3170
    %v3187 = vadd.f32 %v3163, %v3171
    %v3188 = vxor.u32 %v3180, 2147483648
    %v3189 = vxor.u32 %v3181, 2147483648
    %v3190 = vxor.u32 %v3182, 2147483648
    %v3191 = vxor.u32 %v3183, 2147483648
    %v3192 = vxor.u32 %v3184, 2147483648
    %v3193 = vxor.u32 %v3185, 2147483648
    %v3194 = vxor.u32 %v3186, 2147483648
    %v3195 = vxor.u32 %v3187, 2147483648
    %v3196 = vmul.f32 %v3188, 1.442695
    %v3197 = vpow.pop %v3196
    %v3198 = vmul.f32 %v3189, 1.442695
    %v3199 = vpow.pop %v3198
    %v3200 = vmul.f32 %v3190, 1.442695
    %v3201 = vpow.pop %v3200
    %v3202 = vmul.f32 %v3191, 1.442695
    %v3203 = vpow.pop %v3202
    %v3204 = vmul.f32 %v3192, 1.442695
    %v3205 = vpow.pop %v3204
    %v3206 = vmul.f32 %v3193, 1.442695
    %v3207 = vpow.pop %v3206
    %v3208 = vmul.f32 %v3194, 1.442695
    %v3209 = vpow.pop %v3208
    %v3210 = vmul.f32 %v3195, 1.442695
    %v3211 = vpow.pop %v3210
    %v3212 = vadd.f32 %v3197, 1.0
    %v3213 = vadd.f32 %v3199, 1.0
    %v3214 = vadd.f32 %v3201, 1.0
    %v3215 = vadd.f32 %v3203, 1.0
    %v3216 = vadd.f32 %v3205, 1.0
    %v3217 = vadd.f32 %v3207, 1.0
    %v3218 = vadd.f32 %v3209, 1.0
    %v3219 = vadd.f32 %v3211, 1.0
    %v3220 = vrcp.pop %v3212
    %v3221 = vmul.f32 %v3212, %v3220
    %v3222 = vsub.f32 1.0, %v3221
    %v3223 = vmul.f32 %v3220, %v3222
    %v3224 = vadd.f32 %v3220, %v3223
    %vm3225 = vweird.f32 %v3212
    %vm3226 = vweird.f32 %v3220
    %vm3227 = vmor %vm3225, %vm3226
    %v3228 = vsel %vm3227, %v3220, %v3224
    %v3229 = vand.u32 2147483647, %v3212
    %vm3230 = vcmp.eq.f32.partialorder %v3229, 8.507059e+37
    %v3231 = vand.u32 %v3212, 2147483648
    %v3232 = vor.u32 1.1754944e-38, %v3231
    %v3233 = vsel %vm3230, %v3232, %v3228
    %v3234 = vmul.f32 1.0, %v3233
    %v3235 = vrcp.pop %v3213
    %v3236 = vmul.f32 %v3213, %v3235
    %v3237 = vsub.f32 1.0, %v3236
    %v3238 = vmul.f32 %v3235, %v3237
    %v3239 = vadd.f32 %v3235, %v3238
    %vm3240 = vweird.f32 %v3213
    %vm3241 = vweird.f32 %v3235
    %vm3242 = vmor %vm3240, %vm3241
    %v3243 = vsel %vm3242, %v3235, %v3239
    %v3244 = vand.u32 2147483647, %v3213
    %vm3245 = vcmp.eq.f32.partialorder %v3244, 8.507059e+37
    %v3246 = vand.u32 %v3213, 2147483648
    %v3247 = vor.u32 1.1754944e-38, %v3246
    %v3248 = vsel %vm3245, %v3247, %v3243
    %v3249 = vmul.f32 1.0, %v3248
    %v3250 = vrcp.pop %v3214
    %v3251 = vmul.f32 %v3214, %v3250
    %v3252 = vsub.f32 1.0, %v3251
    %v3253 = vmul.f32 %v3250, %v3252
    %v3254 = vadd.f32 %v3250, %v3253
    %vm3255 = vweird.f32 %v3214
    %vm3256 = vweird.f32 %v3250
    %vm3257 = vmor %vm3255, %vm3256
    %v3258 = vsel %vm3257, %v3250, %v3254
    %v3259 = vand.u32 2147483647, %v3214
    %vm3260 = vcmp.eq.f32.partialorder %v3259, 8.507059e+37
    %v3261 = vand.u32 %v3214, 2147483648
    %v3262 = vor.u32 1.1754944e-38, %v3261
    %v3263 = vsel %vm3260, %v3262, %v3258
    %v3264 = vmul.f32 1.0, %v3263
    %v3265 = vrcp.pop %v3215
    %v3266 = vmul.f32 %v3215, %v3265
    %v3267 = vsub.f32 1.0, %v3266
    %v3268 = vmul.f32 %v3265, %v3267
    %v3269 = vadd.f32 %v3265, %v3268
    %vm3270 = vweird.f32 %v3215
    %vm3271 = vweird.f32 %v3265
    %vm3272 = vmor %vm3270, %vm3271
    %v3273 = vsel %vm3272, %v3265, %v3269
    %v3274 = vand.u32 2147483647, %v3215
    %vm3275 = vcmp.eq.f32.partialorder %v3274, 8.507059e+37
    %v3276 = vand.u32 %v3215, 2147483648
    %v3277 = vor.u32 1.1754944e-38, %v3276
    %v3278 = vsel %vm3275, %v3277, %v3273
    %v3279 = vmul.f32 1.0, %v3278
    %v3280 = vrcp.pop %v3216
    %v3281 = vmul.f32 %v3216, %v3280
    %v3282 = vsub.f32 1.0, %v3281
    %v3283 = vmul.f32 %v3280, %v3282
    %v3284 = vadd.f32 %v3280, %v3283
    %vm3285 = vweird.f32 %v3216
    %vm3286 = vweird.f32 %v3280
    %vm3287 = vmor %vm3285, %vm3286
    %v3288 = vsel %vm3287, %v3280, %v3284
    %v3289 = vand.u32 2147483647, %v3216
    %vm3290 = vcmp.eq.f32.partialorder %v3289, 8.507059e+37
    %v3291 = vand.u32 %v3216, 2147483648
    %v3292 = vor.u32 1.1754944e-38, %v3291
    %v3293 = vsel %vm3290, %v3292, %v3288
    %v3294 = vmul.f32 1.0, %v3293
    %v3295 = vrcp.pop %v3217
    %v3296 = vmul.f32 %v3217, %v3295
    %v3297 = vsub.f32 1.0, %v3296
    %v3298 = vmul.f32 %v3295, %v3297
    %v3299 = vadd.f32 %v3295, %v3298
    %vm3300 = vweird.f32 %v3217
    %vm3301 = vweird.f32 %v3295
    %vm3302 = vmor %vm3300, %vm3301
    %v3303 = vsel %vm3302, %v3295, %v3299
    %v3304 = vand.u32 2147483647, %v3217
    %vm3305 = vcmp.eq.f32.partialorder %v3304, 8.507059e+37
    %v3306 = vand.u32 %v3217, 2147483648
    %v3307 = vor.u32 1.1754944e-38, %v3306
    %v3308 = vsel %vm3305, %v3307, %v3303
    %v3309 = vmul.f32 1.0, %v3308
    %v3310 = vrcp.pop %v3218
    %v3311 = vmul.f32 %v3218, %v3310
    %v3312 = vsub.f32 1.0, %v3311
    %v3313 = vmul.f32 %v3310, %v3312
    %v3314 = vadd.f32 %v3310, %v3313
    %vm3315 = vweird.f32 %v3218
    %vm3316 = vweird.f32 %v3310
    %vm3317 = vmor %vm3315, %vm3316
    %v3318 = vsel %vm3317, %v3310, %v3314
    %v3319 = vand.u32 2147483647, %v3218
    %vm3320 = vcmp.eq.f32.partialorder %v3319, 8.507059e+37
    %v3321 = vand.u32 %v3218, 2147483648
    %v3322 = vor.u32 1.1754944e-38, %v3321
    %v3323 = vsel %vm3320, %v3322, %v3318
    %v3324 = vmul.f32 1.0, %v3323
    %v3325 = vrcp.pop %v3219
    %v3326 = vmul.f32 %v3219, %v3325
    %v3327 = vsub.f32 1.0, %v3326
    %v3328 = vmul.f32 %v3325, %v3327
    %v3329 = vadd.f32 %v3325, %v3328
    %vm3330 = vweird.f32 %v3219
    %vm3331 = vweird.f32 %v3325
    %vm3332 = vmor %vm3330, %vm3331
    %v3333 = vsel %vm3332, %v3325, %v3329
    %v3334 = vand.u32 2147483647, %v3219
    %vm3335 = vcmp.eq.f32.partialorder %v3334, 8.507059e+37
    %v3336 = vand.u32 %v3219, 2147483648
    %v3337 = vor.u32 1.1754944e-38, %v3336
    %v3338 = vsel %vm3335, %v3337, %v3333
    %v3339 = vmul.f32 1.0, %v3338
    %v3340 = vadd.f32 %v3153, %v405
    %v3342 = vrot.slane %v3340, 1
    %v3343 = vrot.slane %v3340, 2
    %v3344 = vrot.slane %v3340, 3
    %v3345 = vrot.slane %v3340, 4
    %v3346 = vrot.slane %v3340, 5
    %v3347 = vrot.slane %v3340, 6
    %v3348 = vrot.slane %v3340, 7
    %3349 = vrot.lane.b32.xlu0 %v3340, 64
    %v3350 = vpop.permute.xlu0 %3349
    %3351 = vrot.lane.b32.xlu0 %v3342, 64
    %v3352 = vpop.permute.xlu0 %3351
    %3353 = vrot.lane.b32.xlu0 %v3343, 64
    %v3354 = vpop.permute.xlu0 %3353
    %3355 = vrot.lane.b32.xlu0 %v3344, 64
    %v3356 = vpop.permute.xlu0 %3355
    %3357 = vrot.lane.b32.xlu0 %v3345, 64
    %v3358 = vpop.permute.xlu0 %3357
    %3359 = vrot.lane.b32.xlu0 %v3346, 64
    %v3360 = vpop.permute.xlu0 %3359
    %3361 = vrot.lane.b32.xlu0 %v3347, 64
    %v3362 = vpop.permute.xlu0 %3361
    %3363 = vrot.lane.b32.xlu0 %v3348, 64
    %v3364 = vpop.permute.xlu0 %3363
    %v3373 = vmul.f32 %v3234, %v3350
    %v3374 = vmul.f32 %v3249, %v3352
    %v3375 = vmul.f32 %v3264, %v3354
    %v3376 = vmul.f32 %v3279, %v3356
    %v3377 = vmul.f32 %v3294, %v3358
    %v3378 = vmul.f32 %v3309, %v3360
    %v3379 = vmul.f32 %v3324, %v3362
    %v3380 = vmul.f32 %v3339, %v3364
    %3389 = vrot.lane.b32.xlu0 %v3373, 64
    %v3390 = vpop.permute.xlu0 %3389
    %3391 = vrot.lane.b32.xlu0 %v3374, 64
    %v3392 = vpop.permute.xlu0 %3391
    %3393 = vrot.lane.b32.xlu0 %v3375, 64
    %v3394 = vpop.permute.xlu0 %3393
    %3395 = vrot.lane.b32.xlu0 %v3376, 64
    %v3396 = vpop.permute.xlu0 %3395
    %3397 = vrot.lane.b32.xlu0 %v3377, 64
    %v3398 = vpop.permute.xlu0 %3397
    %3399 = vrot.lane.b32.xlu0 %v3378, 64
    %v3400 = vpop.permute.xlu0 %3399
    %3401 = vrot.lane.b32.xlu0 %v3379, 64
    %v3402 = vpop.permute.xlu0 %3401
    %3403 = vrot.lane.b32.xlu0 %v3380, 64
    %v3404 = vpop.permute.xlu0 %3403
    %v3413 = vadd.f32 %v3156, %v3390
    %v3414 = vadd.f32 %v3157, %v3392
    %v3415 = vadd.f32 %v3158, %v3394
    %v3416 = vadd.f32 %v3159, %v3396
    %v3417 = vadd.f32 %v3160, %v3398
    %v3418 = vadd.f32 %v3161, %v3400
    %v3419 = vadd.f32 %v3162, %v3402
    %v3420 = vadd.f32 %v3163, %v3404
    %v3421 = vtanh.pop %v3413
    %v3422 = vtanh.pop %v3414
    %v3423 = vtanh.pop %v3415
    %v3424 = vtanh.pop %v3416
    %v3425 = vtanh.pop %v3417
    %v3426 = vtanh.pop %v3418
    %v3427 = vtanh.pop %v3419
    %v3428 = vtanh.pop %v3420
    %v3429 = vsub.f32 1.0, %v3234
    %v3430 = vsub.f32 1.0, %v3249
    %v3431 = vsub.f32 1.0, %v3264
    %v3432 = vsub.f32 1.0, %v3279
    %v3433 = vsub.f32 1.0, %v3294
    %v3434 = vsub.f32 1.0, %v3309
    %v3435 = vsub.f32 1.0, %v3324
    %v3436 = vsub.f32 1.0, %v3339
    %3445 = vrot.lane.b32.xlu0 %v3421, 96
    %v3446 = vpop.permute.xlu0 %3445
    %3447 = vrot.lane.b32.xlu0 %v3422, 96
    %v3448 = vpop.permute.xlu0 %3447
    %3449 = vrot.lane.b32.xlu0 %v3423, 96
    %v3450 = vpop.permute.xlu0 %3449
    %3451 = vrot.lane.b32.xlu0 %v3424, 96
    %v3452 = vpop.permute.xlu0 %3451
    %3453 = vrot.lane.b32.xlu0 %v3425, 96
    %v3454 = vpop.permute.xlu0 %3453
    %3455 = vrot.lane.b32.xlu0 %v3426, 96
    %v3456 = vpop.permute.xlu0 %3455
    %3457 = vrot.lane.b32.xlu0 %v3427, 96
    %v3458 = vpop.permute.xlu0 %3457
    %3459 = vrot.lane.b32.xlu0 %v3428, 96
    %v3460 = vpop.permute.xlu0 %3459
    %v3469 = vmul.f32 %v3429, %v3446
    %v3470 = vmul.f32 %v3430, %v3448
    %v3471 = vmul.f32 %v3431, %v3450
    %v3472 = vmul.f32 %v3432, %v3452
    %v3473 = vmul.f32 %v3433, %v3454
    %v3474 = vmul.f32 %v3434, %v3456
    %v3475 = vmul.f32 %v3435, %v3458
    %v3476 = vmul.f32 %v3436, %v3460
    %v3478 = vrot.slane %v3138, 1
    %v3479 = vrot.slane %v3138, 2
    %v3480 = vrot.slane %v3138, 3
    %v3481 = vrot.slane %v3138, 4
    %v3482 = vrot.slane %v3138, 5
    %v3483 = vrot.slane %v3138, 6
    %v3484 = vrot.slane %v3138, 7
    %3485 = vrot.lane.b32.xlu0 %v3138, 32
    %v3486 = vpop.permute.xlu0 %3485
    %3487 = vrot.lane.b32.xlu0 %v3478, 32
    %v3488 = vpop.permute.xlu0 %3487
    %3489 = vrot.lane.b32.xlu0 %v3479, 32
    %v3490 = vpop.permute.xlu0 %3489
    %3491 = vrot.lane.b32.xlu0 %v3480, 32
    %v3492 = vpop.permute.xlu0 %3491
    %3493 = vrot.lane.b32.xlu0 %v3481, 32
    %v3494 = vpop.permute.xlu0 %3493
    %3495 = vrot.lane.b32.xlu0 %v3482, 32
    %v3496 = vpop.permute.xlu0 %3495
    %3497 = vrot.lane.b32.xlu0 %v3483, 32
    %v3498 = vpop.permute.xlu0 %3497
    %3499 = vrot.lane.b32.xlu0 %v3484, 32
    %v3500 = vpop.permute.xlu0 %3499
    %v3509 = vmul.f32 %v3234, %v3486
    %v3510 = vmul.f32 %v3249, %v3488
    %v3511 = vmul.f32 %v3264, %v3490
    %v3512 = vmul.f32 %v3279, %v3492
    %v3513 = vmul.f32 %v3294, %v3494
    %v3514 = vmul.f32 %v3309, %v3496
    %v3515 = vmul.f32 %v3324, %v3498
    %v3516 = vmul.f32 %v3339, %v3500
    %v3517 = vadd.f32 %v3469, %v3509
    %v3518 = vadd.f32 %v3470, %v3510
    %v3519 = vadd.f32 %v3471, %v3511
    %v3520 = vadd.f32 %v3472, %v3512
    %v3521 = vadd.f32 %v3473, %v3513
    %v3522 = vadd.f32 %v3474, %v3514
    %v3523 = vadd.f32 %v3475, %v3515
    %v3524 = vadd.f32 %v3476, %v3516
    %3525 = vset.pattern.permute.xlu0 7
    %3526 = vperm.xlu0 %3525, %v560
    %v3527 = vpop.permute.xlu0 %3526
    %v3537 = vrot.slane %v3518, 7
    %v3538 = vsel %vm575, %v3537, %v3517
    %v3539 = vrot.slane %v3519, 6
    %v3540 = vsel %vm578, %v3539, %v3538
    %v3541 = vrot.slane %v3520, 5
    %v3542 = vsel %vm581, %v3541, %v3540
    %v3543 = vrot.slane %v3521, 4
    %v3544 = vsel %vm584, %v3543, %v3542
    %v3545 = vrot.slane %v3522, 3
    %v3546 = vsel %vm587, %v3545, %v3544
    %v3547 = vrot.slane %v3523, 2
    %v3548 = vsel %vm590, %v3547, %v3546
    %v3549 = vrot.slane %v3524, 1
    %v3550 = vsel %vm593, %v3549, %v3548
    %3551 = vrot.lane.b32.xlu0 %v3550, 96
    %v3552 = vpop.permute.xlu0 %3551
    %v3554 = vmul.f32 %v3527, %v3552
    %3555 = vset.pattern.permute.xlu0 7
    %3556 = vperm.xlu0 %3555, %v599
    %v3557 = vpop.permute.xlu0 %3556
    %v3559 = vmul.f32 %v3557, %v3138
    %v3560 = vadd.f32 %v3554, %v3559
    %3561 = vst.msk [vmem:[#allocation11] sm:$0xff] %vm134, %v3560
    // Predicated region
    $region42: #{tpu_custom_call.1} parent=1 // pred_check
      _
    $region43: #{tpu_custom_call.1} parent=1 // pred_check_branch
      %3563 = sbr.rel (0) target = $region45
    $region44: #{tpu_custom_call.1} parent=1 // pred_region
      %3565 = vsyncadd [#allocation5], 0
      %s3567 = sshll.u32 [#allocation11], 4
      %s3568 = int_to_ptr.vmem [resolvable:$true] %s3567
      %s3569 = sshll.u32 %s6, 4
      %s3570 = int_to_ptr.hbm [resolvable:$true] %s3569
      %3572 = dma.vmem_to_hbm [thread:$0]  %s3568, 128, %s3570, [#allocation5]
    $region45: #{tpu_custom_call.1} parent=1 // pred_fallthru
      _
    // Predicated region
    $region46: #{tpu_custom_call.1} parent=1 // pred_check
      _
    $region47: #{tpu_custom_call.1} parent=1 // pred_check_branch
      %3574 = sbr.rel (0) target = $region49
    $region48: #{tpu_custom_call.1} parent=1 // pred_region
      %3576 = dma.done [#allocation5], 128
    $region49: #{tpu_custom_call.1} parent=1 // pred_fallthru
      _
    %3577 = vsyncpa [#allocation4], 1
    %3578 = vsyncpa [#allocation7], 1
    %3579 = vsyncpa [#allocation10], 1
    %3580 = vsyncpa [#allocation5], 1

</llo_original>
